<compile_context>
chip_gen: v7x
topology: tpu7x:2x2x1
jax: 0.10.0
libtpu: 0.0.40
codegen_flags: <defaults>
</compile_context>

<pallas_src>
import jax
import jax.numpy as jnp
from jax import lax
from jax.experimental import pallas as pl
from jax.experimental.pallas import tpu as pltpu

# ---- model dimensions (small but TPU-tile friendly) ----
B = 8            # batch
S = 8            # src_len
V = 256          # output_dim (vocab)
E = 128          # emb_dim
H_ENC = 128      # enc_hid_dim  -> encoder feature dim = 2*H_ENC
D = 128          # dec_hid_dim
IMG_IN = 2048    # fc_img input  (hard-coded in the module)
IMG_OUT = 1024   # fc_img output (hard-coded in the module)
E2 = 2 * H_ENC

IMG_TK = 1024                   # reduction tile over IMG_IN (large -> near HBM roofline)
IMG_KSTEPS = IMG_IN // IMG_TK   # 2 pipelined grid steps for the fc_img matmul

VMEM_LIMIT = 32 * 1024 * 1024   # fits v5e/v6e/v7x (v7x: 64 MiB physical per TC)


def _const_spec(shape):
    nd = len(shape)
    return pl.BlockSpec(shape, lambda *_args, _nd=nd: (0,) * _nd)


# ----------------------------------------------------------------------------
# Kernel 1: once-per-sequence precompute
#   img_feat = relu(img @ W_img + b_img)            (K-tiled over IMG_IN)
#   ei       = img_feat @ Wa_i                      [B, D]
#   ee       = enc @ Wa_e                           [B, S, D]
# ----------------------------------------------------------------------------
def _img_enc_precompute_kernel(
    img_ref, w_img_ref, b_img_ref, wa_i_ref, enc_ref, wa_e_ref,
    ei_ref, ee_ref, acc_ref,
):
    f32 = jnp.float32
    bf16 = jnp.bfloat16
    k = pl.program_id(0)

    @pl.when(k == 0)
    def _():
        acc_ref[...] = jnp.zeros_like(acc_ref)

    # Partial fc_img matmul for this IMG_IN chunk (bf16 x bf16 -> f32 acc).
    acc_ref[...] += jnp.dot(img_ref[...], w_img_ref[...],
                            preferred_element_type=f32)

    @pl.when(k == pl.num_programs(0) - 1)
    def _():
        img_feat = jnp.maximum(acc_ref[...] + b_img_ref[...], 0.0)      # [B, IMG_OUT]
        ei_ref[...] = jnp.dot(img_feat.astype(bf16), wa_i_ref[...],
                              preferred_element_type=f32)               # [B, D]
        ee_ref[...] = lax.dot_general(
            enc_ref[...], wa_e_ref[...],
            dimension_numbers=(((2,), (0,)), ((), ())),
            preferred_element_type=f32)                                 # [B, S, D]


# ----------------------------------------------------------------------------
# Kernel 2: folded decode loop, grid=(T,) "arbitrary"
#   Per step: attention -> weighted context -> single GRU step -> fc_out.
#   Weights / enc / ee / ei stay VMEM-resident across steps (constant specs);
#   hidden is carried in a VMEM scratch.
# ----------------------------------------------------------------------------
def _decoder_steps_kernel(
    emb_ref, h0_ref, enc_ref, ee_ref, ei_ref,
    wa_h_ref, b_a_ref, v_a_ref,
    wih_ref, b_ih_ref, whh_ref, b_hh_ref,
    wo_ref, b_o_ref,
    pred_ref, hout_ref, h_sc,
):
    f32 = jnp.float32
    bf16 = jnp.bfloat16
    t = pl.program_id(0)

    @pl.when(t == 0)
    def _():
        h_sc[...] = h0_ref[...]

    emb = emb_ref[0]              # [B, E]   (pre-gathered embedding for step t)
    hid = h_sc[...]               # [B, D]
    enc = enc_ref[...]            # [B, S, E2] bf16

    # ---- attention: a = softmax_s( v . tanh(W [hid; enc_s; img_feat] + b) ) ----
    eh = jnp.dot(hid.astype(bf16), wa_h_ref[...], preferred_element_type=f32)  # [B, D]
    energy = jnp.tanh(ee_ref[...] + (eh + ei_ref[...] + b_a_ref[...])[:, None, :])
    score = jnp.sum(energy * v_a_ref[...][0][None, None, :], axis=-1)           # [B, S]
    score = score - jnp.max(score, axis=1, keepdims=True)
    ex = jnp.exp(score)
    a = ex / jnp.sum(ex, axis=1, keepdims=True)   # exact softmax (parity w/ torch)

    # weighted = bmm(a.unsqueeze(1), encoder_outputs)  -> [B, E2]
    weighted = jnp.sum(a[:, :, None] * enc.astype(f32), axis=1)

    # ---- single-step GRU (PyTorch gate order: r, z, n) ----
    # rnn_input = cat(embedded, weighted) -> one packed matmul.
    rnn_in = jnp.concatenate([emb, weighted], axis=-1).astype(bf16)      # [B, E+E2]
    gi = jnp.dot(rnn_in, wih_ref[...], preferred_element_type=f32) + b_ih_ref[...]
    gh = (jnp.dot(hid.astype(bf16), whh_ref[...], preferred_element_type=f32)
          + b_hh_ref[...])                                               # [B, 3D]
    r = jax.nn.sigmoid(gi[:, 0:D] + gh[:, 0:D])
    z = jax.nn.sigmoid(gi[:, D:2 * D] + gh[:, D:2 * D])
    n = jnp.tanh(gi[:, 2 * D:3 * D] + r * gh[:, 2 * D:3 * D])
    h_new = (1.0 - z) * n + z * hid                                      # [B, D]
    # (output == hidden) holds trivially for a 1-layer, 1-step GRU.

    # prediction = fc_out(cat(output, weighted, embedded)) -> one packed matmul.
    out_in = jnp.concatenate([h_new, weighted, emb], axis=-1).astype(bf16)  # [B, D+E2+E]
    pred_ref[0] = (jnp.dot(out_in, wo_ref[...], preferred_element_type=f32)
                   + b_o_ref[...])                                       # [B, V]

    h_sc[...] = h_new
    hout_ref[...] = h_new


# ----------------------------------------------------------------------------
# Wrappers
# ----------------------------------------------------------------------------
@jax.jit
def precompute_image_encoder(params, encoder_outputs, image_features):
    """Once-per-sequence precompute.

    encoder_outputs: [S, B, E2] f32 (PyTorch layout); image_features: [B, IMG_IN] f32.
    Returns (ei [B,D] f32, ee [B,S,D] f32, enc_bmaj [B,S,E2] bf16).
    """
    enc_bmaj = jnp.transpose(encoder_outputs, (1, 0, 2)).astype(jnp.bfloat16)
    img_bf = image_features.astype(jnp.bfloat16)

    in_specs = [
        pl.BlockSpec((B, IMG_TK), lambda k: (0, k)),          # img chunk
        pl.BlockSpec((IMG_TK, IMG_OUT), lambda k: (k, 0)),    # W_img chunk (pipelined)
        _const_spec((1, IMG_OUT)),                            # b_img   (fetched once)
        _const_spec((IMG_OUT, D)),                            # Wa_i    (fetched once)
        _const_spec((B, S, E2)),                              # enc     (fetched once)
        _const_spec((E2, D)),                                 # Wa_e    (fetched once)
    ]
    flops = 2 * B * (IMG_IN * IMG_OUT + IMG_OUT * D + S * E2 * D)
    bytes_accessed = ((IMG_IN * IMG_OUT + IMG_OUT * D + E2 * D) * 2     # bf16 weights
                      + (B * IMG_IN + B * S * E2) * 2                    # bf16 acts in
                      + (IMG_OUT + B * D + B * S * D) * 4)               # f32 bias/out

    ei, ee = pl.pallas_call(
        _img_enc_precompute_kernel,
        out_shape=(jax.ShapeDtypeStruct((B, D), jnp.float32),       # ei
                   jax.ShapeDtypeStruct((B, S, D), jnp.float32)),   # ee
        grid=(IMG_KSTEPS,),
        in_specs=in_specs,
        out_specs=(_const_spec((B, D)), _const_spec((B, S, D))),
        scratch_shapes=[pltpu.VMEM((B, IMG_OUT), jnp.float32)],
        compiler_params=pltpu.CompilerParams(
            dimension_semantics=("arbitrary",),
            vmem_limit_bytes=VMEM_LIMIT),
        cost_estimate=pl.CostEstimate(
            flops=flops, transcendentals=0, bytes_accessed=bytes_accessed),
    )(img_bf, params["w_img"], params["b_img"], params["wa_i"],
      enc_bmaj, params["wa_e"])
    return ei, ee, enc_bmaj


@jax.jit
def decode_steps(params, tokens, hidden0, enc_bmaj, ee, ei):
    """Folded (teacher-forced) decode loop.

    tokens: [T, B] int32; hidden0: [B, D] f32; enc_bmaj: [B, S, E2] bf16;
    ee: [B, S, D] f32; ei: [B, D] f32.
    Returns (predictions [T, B, V] f32, final hidden [B, D] f32).
    """
    T = tokens.shape[0]
    emb_all = params["embedding"][tokens]                      # [T, B, E] f32 (gather)

    weight_bytes = ((D * D + (E + E2) * 3 * D + D * 3 * D + (D + E2 + E) * V) * 2
                    + (3 * D + 3 * D + D + D + V) * 4)
    per_step_act_bytes = (B * E + B * V + B * D) * 4
    resident_bytes = (B * S * E2) * 2 + (B * S * D + B * D) * 4
    flops_step = (2 * B * (D * D + (E + E2) * 3 * D + D * 3 * D + (D + E2 + E) * V)
                  + 4 * B * S * D + 4 * B * S * E2)

    in_specs = [
        pl.BlockSpec((1, B, E), lambda t: (t, 0, 0)),   # embeddings, one step/iter
        _const_spec((B, D)),                            # hidden0
        _const_spec((B, S, E2)),                        # enc (resident across steps)
        _const_spec((B, S, D)),                         # ee
        _const_spec((B, D)),                            # ei
        _const_spec((D, D)), _const_spec((1, D)), _const_spec((1, D)),       # attn
        _const_spec((E + E2, 3 * D)), _const_spec((1, 3 * D)),               # GRU ih
        _const_spec((D, 3 * D)), _const_spec((1, 3 * D)),                    # GRU hh
        _const_spec((D + E2 + E, V)), _const_spec((1, V)),                   # fc_out
    ]
    preds, h_final = pl.pallas_call(
        _decoder_steps_kernel,
        out_shape=(jax.ShapeDtypeStruct((T, B, V), jnp.float32),
                   jax.ShapeDtypeStruct((B, D), jnp.float32)),
        grid=(T,),
        in_specs=in_specs,
        out_specs=(pl.BlockSpec((1, B, V), lambda t: (t, 0, 0)),
                   _const_spec((B, D))),
        scratch_shapes=[pltpu.VMEM((B, D), jnp.float32)],       # hidden carry
        compiler_params=pltpu.CompilerParams(
            dimension_semantics=("arbitrary",),                 # sequential carry
            vmem_limit_bytes=VMEM_LIMIT),
        cost_estimate=pl.CostEstimate(
            flops=T * flops_step,
            transcendentals=T * (B * S * D + B * S + 3 * B * D),
            bytes_accessed=weight_bytes + resident_bytes + T * per_step_act_bytes),
    )(emb_all, hidden0, enc_bmaj, ee, ei,
      params["wa_h"], params["b_a"], params["v_a"],
      params["wih"], params["b_ih"], params["whh"], params["b_hh"],
      params["wo"], params["b_o"])
    return preds, h_final


def decoder_forward(params, token, hidden, encoder_outputs, image_features):
    """Reference-matching single-step forward (one-shot convenience).

    For a real token loop, call `precompute_image_encoder` ONCE per sequence
    and then `decode_steps` (or repeated T=1 calls with the cached ei/ee/enc).
    """
    ei, ee, enc_bf = precompute_image_encoder(params, encoder_outputs, image_features)
    preds, h_new = decode_steps(params, token[None, :], hidden, ee=ee, ei=ei,
                                enc_bmaj=enc_bf)
    return preds[0], h_new


def init_params(key):
    ks = jax.random.split(key, 17)
    bf16, f32 = jnp.bfloat16, jnp.float32

    def w(k, shape, dtype=bf16, scale=0.02):
        return (scale * jax.random.normal(k, shape)).astype(dtype)

    return dict(
        embedding=w(ks[0], (V, E), f32),
        # fc_img: Linear(2048, 1024)
        w_img=w(ks[1], (IMG_IN, IMG_OUT)), b_img=w(ks[2], (1, IMG_OUT), f32),
        # attention: Linear(D + E2 + 1024, D) split by concat order (hid, enc, img)
        wa_h=w(ks[3], (D, D)), wa_e=w(ks[4], (E2, D)), wa_i=w(ks[5], (IMG_OUT, D)),
        b_a=w(ks[6], (1, D), f32), v_a=w(ks[7], (1, D), f32),
        # GRU(E + E2, D): weight_ih packed in concat order (embedded, weighted)
        wih=w(ks[8], (E + E2, 3 * D)), b_ih=w(ks[9], (1, 3 * D), f32),
        whh=w(ks[10], (D, 3 * D)), b_hh=w(ks[11], (1, 3 * D), f32),
        # fc_out(D + E2 + E, V): packed in concat order (output, weighted, embedded)
        wo=w(ks[12], (D + E2 + E, V)), b_o=w(ks[13], (1, V), f32),
    )


if __name__ == "__main__":
    key = jax.random.PRNGKey(0)
    pkey, k1, k2, k3, k4 = jax.random.split(key, 5)
    params = init_params(pkey)

    T = 4
    tokens = jax.random.randint(k1, (T, B), 0, V, dtype=jnp.int32)   # teacher-forced
    hidden = jax.random.normal(k2, (B, D), dtype=jnp.float32)
    encoder_outputs = jax.random.normal(k3, (S, B, E2), dtype=jnp.float32)
    image_features = jax.random.normal(k4, (B, IMG_IN), dtype=jnp.float32)

    # Once-per-sequence precompute, then one folded pallas_call for all T steps.
    ei, ee, enc_bf = precompute_image_encoder(params, encoder_outputs, image_features)
    preds, h_final = decode_steps(params, tokens, hidden, enc_bf, ee, ei)
    jax.block_until_ready((preds, h_final))

    assert preds.shape == (T, B, V) and h_final.shape == (B, D)
    assert bool(jnp.all(jnp.isfinite(preds))) and bool(jnp.all(jnp.isfinite(h_final)))

    # Sanity: the single-step (reference-style) path must match step 0 of the
    # folded loop exactly (same kernel math, same inputs).
    pred0, h0 = decoder_forward(params, tokens[0], hidden, encoder_outputs,
                                image_features)
    jax.block_until_ready((pred0, h0))
    assert bool(jnp.allclose(pred0, preds[0], atol=1e-3, rtol=1e-3))

    print("KERNEL_OK")
</pallas_src>

<mosaic_0001>
module attributes {stable_mosaic.version = 11 : i64} {
  func.func @_img_enc_precompute_kernel(%arg0: i32, %arg1: memref<8x1024xbf16, #tpu.memory_space<vmem>>, %arg2: memref<1024x1024xbf16, #tpu.memory_space<vmem>>, %arg3: memref<1x1024xf32, #tpu.memory_space<vmem>>, %arg4: memref<1024x128xbf16, #tpu.memory_space<vmem>>, %arg5: memref<8x8x256xbf16, #tpu.memory_space<vmem>>, %arg6: memref<256x128xbf16, #tpu.memory_space<vmem>>, %arg7: memref<8x128xf32, #tpu.memory_space<vmem>>, %arg8: memref<8x8x128xf32, #tpu.memory_space<vmem>>, %arg9: memref<8x1024xf32, #tpu.memory_space<vmem>>) attributes {dimension_semantics = [#tpu.dimension_semantics<arbitrary>], iteration_bounds = array<i64: 2>, scalar_prefetch = 0 : i64, scratch_operands = 1 : i64, tpu.core_type = #tpu.core_type<tc>, window_params = [{transform_indices = @transform_0, window_bounds = array<i64: 8, 1024>}, {transform_indices = @transform_1, window_bounds = array<i64: 1024, 1024>}, {pipeline_mode = #tpu.pipeline_mode<synchronous>, transform_indices = @transform_2, window_bounds = array<i64: 1, 1024>}, {pipeline_mode = #tpu.pipeline_mode<synchronous>, transform_indices = @transform_3, window_bounds = array<i64: 1024, 128>}, {pipeline_mode = #tpu.pipeline_mode<synchronous>, transform_indices = @transform_4, window_bounds = array<i64: 8, 8, 256>}, {pipeline_mode = #tpu.pipeline_mode<synchronous>, transform_indices = @transform_5, window_bounds = array<i64: 256, 128>}, {pipeline_mode = #tpu.pipeline_mode<synchronous>, transform_indices = @transform_6, window_bounds = array<i64: 8, 128>}, {pipeline_mode = #tpu.pipeline_mode<synchronous>, transform_indices = @transform_7, window_bounds = array<i64: 8, 8, 128>}]} {
    %c0_i32 = arith.constant 0 : i32
    %0 = arith.cmpi eq, %arg0, %c0_i32 : i32
    %1 = arith.extui %0 : i1 to i32
    %c0_i32_0 = arith.constant 0 : i32
    %2 = arith.cmpi ne, %1, %c0_i32_0 : i32
    scf.if %2 {
      %cst_9 = arith.constant 0.000000e+00 : f32
      %12 = vector.broadcast %cst_9 : f32 to vector<8x1024xf32>
      %c0_10 = arith.constant 0 : index
      %c0_11 = arith.constant 0 : index
      %13 = vector.load %arg9[%c0_10, %c0_11] : memref<8x1024xf32, #tpu.memory_space<vmem>>, vector<8x1024xf32>
      tpu.vector_store %arg9[%c0_10, %c0_11], %12 {strides = array<i32>} : memref<8x1024xf32, #tpu.memory_space<vmem>>, vector<8x1024xf32>,
    } else {
    }
    %c0 = arith.constant 0 : index
    %c0_1 = arith.constant 0 : index
    %3 = vector.load %arg9[%c0, %c0_1] : memref<8x1024xf32, #tpu.memory_space<vmem>>, vector<8x1024xf32>
    %c0_2 = arith.constant 0 : index
    %c0_3 = arith.constant 0 : index
    %4 = vector.load %arg1[%c0_2, %c0_3] : memref<8x1024xbf16, #tpu.memory_space<vmem>>, vector<8x1024xbf16>
    %c0_4 = arith.constant 0 : index
    %c0_5 = arith.constant 0 : index
    %5 = vector.load %arg2[%c0_4, %c0_5] : memref<1024x1024xbf16, #tpu.memory_space<vmem>>, vector<1024x1024xbf16>
    %cst = arith.constant dense<0.000000e+00> : vector<8x1024xf32>
    %6 = tpu.matmul %4, %5, %cst {dimension_numbers = #tpu.dot_dimension_numbers<[1], [0], [0], [1], [0, 0, 1, 1], [], []>} : vector<8x1024xbf16>, vector<1024x1024xbf16>, vector<8x1024xf32> -> vector<8x1024xf32>
    %7 = arith.addf %3, %6 : vector<8x1024xf32>
    %c0_6 = arith.constant 0 : index
    %c0_7 = arith.constant 0 : index
    %8 = vector.load %arg9[%c0_6, %c0_7] : memref<8x1024xf32, #tpu.memory_space<vmem>>, vector<8x1024xf32>
    tpu.vector_store %arg9[%c0_6, %c0_7], %7 {strides = array<i32>} : memref<8x1024xf32, #tpu.memory_space<vmem>>, vector<8x1024xf32>,
    %c1_i32 = arith.constant 1 : i32
    %9 = arith.cmpi eq, %arg0, %c1_i32 : i32
    %10 = arith.extui %9 : i1 to i32
    %c0_i32_8 = arith.constant 0 : i32
    %11 = arith.cmpi ne, %10, %c0_i32_8 : i32
    scf.if %11 {
      %c0_9 = arith.constant 0 : index
      %c0_10 = arith.constant 0 : index
      %12 = vector.load %arg9[%c0_9, %c0_10] : memref<8x1024xf32, #tpu.memory_space<vmem>>, vector<8x1024xf32>
      %c0_11 = arith.constant 0 : index
      %c0_12 = arith.constant 0 : index
      %13 = vector.load %arg3[%c0_11, %c0_12] : memref<1x1024xf32, #tpu.memory_space<vmem>>, vector<1x1024xf32>
      %14 = vector.broadcast %13 : vector<1x1024xf32> to vector<8x1024xf32>
      %15 = arith.addf %12, %14 : vector<8x1024xf32>
      %cst_13 = arith.constant 0.000000e+00 : f32
      %16 = vector.broadcast %cst_13 : f32 to vector<8x1024xf32>
      %17 = arith.maximumf %15, %16 : vector<8x1024xf32>
      %18 = arith.truncf %17 : vector<8x1024xf32> to vector<8x1024xbf16>
      %c0_14 = arith.constant 0 : index
      %c0_15 = arith.constant 0 : index
      %19 = vector.load %arg4[%c0_14, %c0_15] : memref<1024x128xbf16, #tpu.memory_space<vmem>>, vector<1024x128xbf16>
      %cst_16 = arith.constant dense<0.000000e+00> : vector<8x128xf32>
      %20 = tpu.matmul %18, %19, %cst_16 {dimension_numbers = #tpu.dot_dimension_numbers<[1], [0], [0], [1], [0, 0, 1, 1], [], []>} : vector<8x1024xbf16>, vector<1024x128xbf16>, vector<8x128xf32> -> vector<8x128xf32>
      %c0_17 = arith.constant 0 : index
      %c0_18 = arith.constant 0 : index
      %21 = vector.load %arg7[%c0_17, %c0_18] : memref<8x128xf32, #tpu.memory_space<vmem>>, vector<8x128xf32>
      tpu.vector_store %arg7[%c0_17, %c0_18], %20 {strides = array<i32>} : memref<8x128xf32, #tpu.memory_space<vmem>>, vector<8x128xf32>,
      %c0_19 = arith.constant 0 : index
      %c0_20 = arith.constant 0 : index
      %c0_21 = arith.constant 0 : index
      %22 = vector.load %arg5[%c0_19, %c0_20, %c0_21] : memref<8x8x256xbf16, #tpu.memory_space<vmem>>, vector<8x8x256xbf16>
      %c0_22 = arith.constant 0 : index
      %c0_23 = arith.constant 0 : index
      %23 = vector.load %arg6[%c0_22, %c0_23] : memref<256x128xbf16, #tpu.memory_space<vmem>>, vector<256x128xbf16>
      %cst_24 = arith.constant dense<0.000000e+00> : vector<8x8x128xf32>
      %24 = tpu.matmul %22, %23, %cst_24 {dimension_numbers = #tpu.dot_dimension_numbers<[2], [0], [0, 1], [1], [0, 0, 0, 1, 1, 1], [], []>} : vector<8x8x256xbf16>, vector<256x128xbf16>, vector<8x8x128xf32> -> vector<8x8x128xf32>
      %c0_25 = arith.constant 0 : index
      %c0_26 = arith.constant 0 : index
      %c0_27 = arith.constant 0 : index
      %25 = vector.load %arg8[%c0_25, %c0_26, %c0_27] : memref<8x8x128xf32, #tpu.memory_space<vmem>>, vector<8x8x128xf32>
      tpu.vector_store %arg8[%c0_25, %c0_26, %c0_27], %24 {strides = array<i32>} : memref<8x8x128xf32, #tpu.memory_space<vmem>>, vector<8x8x128xf32>,
    } else {
    }
    return
  }
  func.func @transform_0(%arg0: i32) -> (i32, i32) {
    %c0_i32 = arith.constant 0 : i32
    %c0_i32_0 = arith.constant 0 : i32
    return %c0_i32, %arg0 : i32, i32
  }
  func.func @transform_1(%arg0: i32) -> (i32, i32) {
    %c0_i32 = arith.constant 0 : i32
    %c0_i32_0 = arith.constant 0 : i32
    return %arg0, %c0_i32 : i32, i32
  }
  func.func @transform_2(%arg0: i32) -> (i32, i32) {
    %c0_i32 = arith.constant 0 : i32
    %c0_i32_0 = arith.constant 0 : i32
    %c0_i32_1 = arith.constant 0 : i32
    return %c0_i32, %c0_i32_0 : i32, i32
  }
  func.func @transform_3(%arg0: i32) -> (i32, i32) {
    %c0_i32 = arith.constant 0 : i32
    %c0_i32_0 = arith.constant 0 : i32
    %c0_i32_1 = arith.constant 0 : i32
    return %c0_i32, %c0_i32_0 : i32, i32
  }
  func.func @transform_4(%arg0: i32) -> (i32, i32, i32) {
    %c0_i32 = arith.constant 0 : i32
    %c0_i32_0 = arith.constant 0 : i32
    %c0_i32_1 = arith.constant 0 : i32
    %c0_i32_2 = arith.constant 0 : i32
    return %c0_i32, %c0_i32_0, %c0_i32_1 : i32, i32, i32
  }
  func.func @transform_5(%arg0: i32) -> (i32, i32) {
    %c0_i32 = arith.constant 0 : i32
    %c0_i32_0 = arith.constant 0 : i32
    %c0_i32_1 = arith.constant 0 : i32
    return %c0_i32, %c0_i32_0 : i32, i32
  }
  func.func @transform_6(%arg0: i32) -> (i32, i32) {
    %c0_i32 = arith.constant 0 : i32
    %c0_i32_0 = arith.constant 0 : i32
    %c0_i32_1 = arith.constant 0 : i32
    return %c0_i32, %c0_i32_0 : i32, i32
  }
  func.func @transform_7(%arg0: i32) -> (i32, i32, i32) {
    %c0_i32 = arith.constant 0 : i32
    %c0_i32_0 = arith.constant 0 : i32
    %c0_i32_1 = arith.constant 0 : i32
    %c0_i32_2 = arith.constant 0 : i32
    return %c0_i32, %c0_i32_0, %c0_i32_1 : i32, i32, i32
  }
}

</mosaic_0001>

<llo_original>
// kernel: precompute_image_encoder.1
$region0: #{precompute_image_encoder.1}
  #allocation0 [shape = 'u32[]', space=smem, size = 0x4, offset = 0x4, fixed_abs, tag = 'smem constant byte address 0x4 - core index']
  #allocation1 [shape = 'u32[144,128]{1,0:T(1,128)}', space=vmem, size = 0x12000, scoped, tag = 'internal scratch']
  #allocation2 [shape = 'f32[8,1024]{1,0:T(8,128)}', space=vmem, size = 0x8000, scoped, tag = 'scratch operand']
  %s0 = inlined_call_operand.vmem [shape: bf16[8,2048], index: 0, kind: input, shape index: {}]
  %s1 = inlined_call_operand.hbm [shape: bf16[2048,1024], index: 1, kind: input, shape index: {}]
  %s2 = inlined_call_operand.hbm [shape: f32[1,1024], index: 2, kind: input, shape index: {}]
  %s3 = inlined_call_operand.hbm [shape: bf16[1024,128], index: 3, kind: input, shape index: {}]
  %s4 = inlined_call_operand.vmem [shape: bf16[8,8,256], index: 4, kind: input, shape index: {}]
  %s5 = inlined_call_operand.hbm [shape: bf16[256,128], index: 5, kind: input, shape index: {}]
  %s6 = inlined_call_operand.hbm [shape: f32[8,128], index: 6, kind: output, shape index: {0}]
  %s7 = inlined_call_operand.hbm [shape: f32[8,8,128], index: 7, kind: output, shape index: {1}]
  %8 = xla_tuple %s6, %s7
  %s9 = sld [smem:[#allocation0]]
  $region89: #{precompute_image_encoder.1} parent=0
    _
  %s11 = ssub.s32 1, %s9
  %s12 = scalar_select 0, %s11, %s9
  $region1: #{precompute_image_encoder.1} parent=0
    #allocation3 [shape = 'u8[4194304]{0}', space=vmem, size = 0x400000, scoped, tag = 'input window, operand 1']
    #allocation4 [shape = 's32[2]{0}', space=sflag, size = 0x8, scoped, tag = 'scoped memory for precompute_image_encoder.1']
    #allocation5 [shape = 's32[2]{0}', space=sflag, size = 0x8, scoped, tag = 'scoped memory for precompute_image_encoder.1']
    #allocation6 [shape = 'u8[4096]{0}', space=vmem, size = 0x1000, scoped, tag = 'input window, operand 2, single buffered']
    #allocation7 [shape = 's32[1]{0}', space=sflag, size = 0x4, scoped, tag = 'scoped memory for precompute_image_encoder.1']
    #allocation8 [shape = 'u8[262144]{0}', space=vmem, size = 0x40000, scoped, tag = 'input window, operand 3, single buffered']
    #allocation9 [shape = 'u8[65536]{0}', space=vmem, size = 0x10000, scoped, tag = 'input window, operand 5, single buffered']
    #allocation10 [shape = 's32[1]{0}', space=sflag, size = 0x4, scoped, tag = 'scoped memory for precompute_image_encoder.1']
    #allocation11 [shape = 'u8[4096]{0}', space=vmem, size = 0x1000, scoped, tag = 'output window, operand 0, single buffered']
    #allocation12 [shape = 'u8[32768]{0}', space=vmem, size = 0x8000, scoped, tag = 'output window, operand 1, single buffered']
    #allocation13 [shape = 's32[1]{0}', space=sflag, size = 0x4, scoped, tag = 'scoped memory for precompute_image_encoder.1']
    %13 = vsyncpa [#allocation4], 0
    %s14 = scalar_lea.sflag [#allocation4], 1
    %15 = vsyncpa %s14, 0
    %16 = vsyncpa [#allocation7], 0
    %17 = vsyncpa [#allocation10], 0
    %18 = vsyncpa [#allocation5], 0
    %19 = vsyncpa [#allocation13], 0
    loop: start=0, step=1, limit=4
    $region2: #{precompute_image_encoder.1} parent=1 // loop_pre_header
      _
    $region3: #{precompute_image_encoder.1} parent=1 // loop_header
      %s21 = sphi 0, %s25
      %p22 = scmp.ge.s32.totalorder %s21, 4
      %s31 = sphi 0, %s33
      %s34 = sphi 0, %s31
      %s35 = sphi 0, %s34
      %s51 = sphi 0, %s35
      %s57 = sphi 0, %s59
      %s60 = sphi 0, %s57
      %s61 = sphi 0, %s60
      %s77 = sphi 0, %s61
      %s81 = sphi 0, %s81
      %s83 = sphi 0, %s81
      %s84 = sphi 0, %s83
      %s98 = sphi 0, %s84
      %s102 = sphi 0, %s102
      %s104 = sphi 0, %s102
      %s105 = sphi 0, %s104
      %s119 = sphi 0, %s105
      %s123 = sphi 0, %s123
      %s125 = sphi 0, %s123
      %s126 = sphi 0, %s125
      %s140 = sphi 0, %s126
      %s144 = sphi 0, %s144
      %s146 = sphi 0, %s144
      %s147 = sphi 0, %s146
      %s161 = sphi 0, %s147
      %s165 = sphi 0, %s165
      %s167 = sphi 0, %s165
      %s168 = sphi 0, %s167
      %s182 = sphi 0, %s168
      %s186 = sphi 0, %s186
      %s188 = sphi 0, %s186
      %s189 = sphi 0, %s188
      %s203 = sphi 0, %s189
    $region4: #{precompute_image_encoder.1} parent=1 // loop_header_branch
      %24 = sbr.rel (%p22) target = $region8
    $region5: #{precompute_image_encoder.1} parent=1 // loop_body
      %s26 = ssub.s32 %s21, 1
      %s27 = ssub.s32 %s21, 2
      %s28 = sadd.s32 %s21, 1
      %s29 = ssub.s32 %s21, %s28
      %p30 = scmp.eq.s32.totalorder %s29, 0
      %s32 = sadd.s32 %s31, 1
      %s33 = scalar_select %p30, %s31, %s32
      %p36 = pneg %p30
      %p37 = scmp.eq.s32.totalorder %s21, 1
      %p38 = por %p36, %p37
      %p39 = scmp.ne.s32.totalorder %s31, %s34
      %p40 = scmp.eq.s32.totalorder %s21, 0
      %p41 = por %p39, %p40
      %p42 = scmp.ne.s32.totalorder %s31, %s34
      %p43 = scmp.eq.s32.totalorder %s26, 1
      %p44 = por %p42, %p43
      %p45 = scmp.ne.s32.totalorder %s34, %s35
      %p46 = scmp.eq.s32.totalorder %s26, 0
      %p47 = por %p45, %p46
      %p48 = scmp.ne.s32.totalorder %s34, %s35
      %p49 = scmp.eq.s32.totalorder %s27, 1
      %p50 = por %p48, %p49
      %p52 = scmp.ne.s32.totalorder %s35, %s51
      %p53 = scmp.eq.s32.totalorder %s27, 0
      %p54 = por %p52, %p53
      %s55 = ssub.s32 %s21, %s28
      %p56 = scmp.eq.s32.totalorder %s55, 0
      %s58 = sadd.s32 %s57, 1
      %s59 = scalar_select %p56, %s57, %s58
      %p62 = pneg %p56
      %p63 = scmp.eq.s32.totalorder %s21, 1
      %p64 = por %p62, %p63
      %p65 = scmp.ne.s32.totalorder %s57, %s60
      %p66 = scmp.eq.s32.totalorder %s21, 0
      %p67 = por %p65, %p66
      %p68 = scmp.ne.s32.totalorder %s57, %s60
      %p69 = scmp.eq.s32.totalorder %s26, 1
      %p70 = por %p68, %p69
      %p71 = scmp.ne.s32.totalorder %s60, %s61
      %p72 = scmp.eq.s32.totalorder %s26, 0
      %p73 = por %p71, %p72
      %p74 = scmp.ne.s32.totalorder %s60, %s61
      %p75 = scmp.eq.s32.totalorder %s27, 1
      %p76 = por %p74, %p75
      %p78 = scmp.ne.s32.totalorder %s61, %s77
      %p79 = scmp.eq.s32.totalorder %s27, 0
      %p80 = por %p78, %p79
      %s82 = sadd.s32 %s81, 1
      %p85 = scmp.eq.s32.totalorder %s21, 1
      %p86 = scmp.ne.s32.totalorder %s81, %s83
      %p87 = scmp.eq.s32.totalorder %s21, 0
      %p88 = por %p86, %p87
      %p89 = scmp.ne.s32.totalorder %s81, %s83
      %p90 = scmp.eq.s32.totalorder %s26, 1
      %p91 = por %p89, %p90
      %p92 = scmp.ne.s32.totalorder %s83, %s84
      %p93 = scmp.eq.s32.totalorder %s26, 0
      %p94 = por %p92, %p93
      %p95 = scmp.ne.s32.totalorder %s83, %s84
      %p96 = scmp.eq.s32.totalorder %s27, 1
      %p97 = por %p95, %p96
      %p99 = scmp.ne.s32.totalorder %s84, %s98
      %p100 = scmp.eq.s32.totalorder %s27, 0
      %p101 = por %p99, %p100
      %s103 = sadd.s32 %s102, 1
      %p106 = scmp.eq.s32.totalorder %s21, 1
      %p107 = scmp.ne.s32.totalorder %s102, %s104
      %p108 = scmp.eq.s32.totalorder %s21, 0
      %p109 = por %p107, %p108
      %p110 = scmp.ne.s32.totalorder %s102, %s104
      %p111 = scmp.eq.s32.totalorder %s26, 1
      %p112 = por %p110, %p111
      %p113 = scmp.ne.s32.totalorder %s104, %s105
      %p114 = scmp.eq.s32.totalorder %s26, 0
      %p115 = por %p113, %p114
      %p116 = scmp.ne.s32.totalorder %s104, %s105
      %p117 = scmp.eq.s32.totalorder %s27, 1
      %p118 = por %p116, %p117
      %p120 = scmp.ne.s32.totalorder %s105, %s119
      %p121 = scmp.eq.s32.totalorder %s27, 0
      %p122 = por %p120, %p121
      %s124 = sadd.s32 %s123, 1
      %p127 = scmp.eq.s32.totalorder %s21, 1
      %p128 = scmp.ne.s32.totalorder %s123, %s125
      %p129 = scmp.eq.s32.totalorder %s21, 0
      %p130 = por %p128, %p129
      %p131 = scmp.ne.s32.totalorder %s123, %s125
      %p132 = scmp.eq.s32.totalorder %s26, 1
      %p133 = por %p131, %p132
      %p134 = scmp.ne.s32.totalorder %s125, %s126
      %p135 = scmp.eq.s32.totalorder %s26, 0
      %p136 = por %p134, %p135
      %p137 = scmp.ne.s32.totalorder %s125, %s126
      %p138 = scmp.eq.s32.totalorder %s27, 1
      %p139 = por %p137, %p138
      %p141 = scmp.ne.s32.totalorder %s126, %s140
      %p142 = scmp.eq.s32.totalorder %s27, 0
      %p143 = por %p141, %p142
      %s145 = sadd.s32 %s144, 1
      %p148 = scmp.eq.s32.totalorder %s21, 1
      %p149 = scmp.ne.s32.totalorder %s144, %s146
      %p150 = scmp.eq.s32.totalorder %s21, 0
      %p151 = por %p149, %p150
      %p152 = scmp.ne.s32.totalorder %s144, %s146
      %p153 = scmp.eq.s32.totalorder %s26, 1
      %p154 = por %p152, %p153
      %p155 = scmp.ne.s32.totalorder %s146, %s147
      %p156 = scmp.eq.s32.totalorder %s26, 0
      %p157 = por %p155, %p156
      %p158 = scmp.ne.s32.totalorder %s146, %s147
      %p159 = scmp.eq.s32.totalorder %s27, 1
      %p160 = por %p158, %p159
      %p162 = scmp.ne.s32.totalorder %s147, %s161
      %p163 = scmp.eq.s32.totalorder %s27, 0
      %p164 = por %p162, %p163
      %s166 = sadd.s32 %s165, 1
      %p169 = scmp.eq.s32.totalorder %s21, 1
      %p170 = scmp.ne.s32.totalorder %s165, %s167
      %p171 = scmp.eq.s32.totalorder %s21, 0
      %p172 = por %p170, %p171
      %p173 = scmp.ne.s32.totalorder %s165, %s167
      %p174 = scmp.eq.s32.totalorder %s26, 1
      %p175 = por %p173, %p174
      %p176 = scmp.ne.s32.totalorder %s167, %s168
      %p177 = scmp.eq.s32.totalorder %s26, 0
      %p178 = por %p176, %p177
      %p179 = scmp.ne.s32.totalorder %s167, %s168
      %p180 = scmp.eq.s32.totalorder %s27, 1
      %p181 = por %p179, %p180
      %p183 = scmp.ne.s32.totalorder %s168, %s182
      %p184 = scmp.eq.s32.totalorder %s27, 0
      %p185 = por %p183, %p184
      %s187 = sadd.s32 %s186, 1
      %p190 = scmp.eq.s32.totalorder %s21, 1
      %p191 = scmp.ne.s32.totalorder %s186, %s188
      %p192 = scmp.eq.s32.totalorder %s21, 0
      %p193 = por %p191, %p192
      %p194 = scmp.ne.s32.totalorder %s186, %s188
      %p195 = scmp.eq.s32.totalorder %s26, 1
      %p196 = por %p194, %p195
      %p197 = scmp.ne.s32.totalorder %s188, %s189
      %p198 = scmp.eq.s32.totalorder %s26, 0
      %p199 = por %p197, %p198
      %p200 = scmp.ne.s32.totalorder %s188, %s189
      %p201 = scmp.eq.s32.totalorder %s27, 1
      %p202 = por %p200, %p201
      %p204 = scmp.ne.s32.totalorder %s189, %s203
      %p205 = scmp.eq.s32.totalorder %s27, 0
      %p206 = por %p204, %p205
      %p207 = scmp.le.s32.totalorder 1, %s21
      %p208 = scmp.lt.s32.totalorder %s21, 3
      %p209 = pnand %p207, %p208
      %p210 = pneg %p209
      // Predicated region
      $region9: #{precompute_image_encoder.1} parent=5 // pred_check
        _
      $region10: #{precompute_image_encoder.1} parent=5 // pred_check_branch
        %212 = sbr.rel (%p209) target = $region12
      $region11: #{precompute_image_encoder.1} parent=5 // pred_region
        %s213 = ssub.s32 %s21, 1
        // Predicated region
        $region13: #{precompute_image_encoder.1} parent=11 // pred_check
          %p214 = pneg %p94
        $region14: #{precompute_image_encoder.1} parent=11 // pred_check_branch
          %216 = sbr.rel (%p214) target = $region16
        $region15: #{precompute_image_encoder.1} parent=11 // pred_region
          %s218 = ssub.s32 128, 128
          %219 = vsyncadd [#allocation7], %s218
          %s221 = sshll.u32 [#allocation6], 4
          %s222 = int_to_ptr.vmem [resolvable:$true] %s221
          %224 = dma.hbm_to_vmem [thread:$0]  %s2, 128, %s222, [#allocation7]
        $region16: #{precompute_image_encoder.1} parent=11 // pred_fallthru
          _
        // Predicated region
        $region17: #{precompute_image_encoder.1} parent=11 // pred_check
          %p225 = pneg %p115
        $region18: #{precompute_image_encoder.1} parent=11 // pred_check_branch
          %227 = sbr.rel (%p225) target = $region20
        $region19: #{precompute_image_encoder.1} parent=11 // pred_region
          %s229 = ssub.s32 8192, 8192
          %230 = vsyncadd [#allocation7], %s229
          %s231 = sshll.u32 [#allocation8], 4
          %s232 = int_to_ptr.vmem [resolvable:$true] %s231
          %237 = dma.hbm_to_vmem [thread:$0]  %s3, 8192, %s232, [#allocation7], 64, 64, 4
        $region20: #{precompute_image_encoder.1} parent=11 // pred_fallthru
          _
        // Predicated region
        $region21: #{precompute_image_encoder.1} parent=11 // pred_check
          %p238 = pneg %p136
        $region22: #{precompute_image_encoder.1} parent=11 // pred_check_branch
          %240 = sbr.rel (%p238) target = $region24
        $region23: #{precompute_image_encoder.1} parent=11 // pred_region
          _
        $region24: #{precompute_image_encoder.1} parent=11 // pred_fallthru
          _
        // Predicated region
        $region25: #{precompute_image_encoder.1} parent=11 // pred_check
          %p241 = pneg %p157
        $region26: #{precompute_image_encoder.1} parent=11 // pred_check_branch
          %243 = sbr.rel (%p241) target = $region28
        $region27: #{precompute_image_encoder.1} parent=11 // pred_region
          %s245 = ssub.s32 2048, 2048
          %246 = vsyncadd [#allocation10], %s245
          %s247 = sshll.u32 [#allocation9], 4
          %s248 = int_to_ptr.vmem [resolvable:$true] %s247
          %253 = dma.hbm_to_vmem [thread:$0]  %s5, 2048, %s248, [#allocation10], 64, 64, 4
        $region28: #{precompute_image_encoder.1} parent=11 // pred_fallthru
          _
      $region12: #{precompute_image_encoder.1} parent=5 // pred_fallthru
        _
      %p254 = scmp.lt.s32.totalorder %s21, 2
      // Predicated region
      $region29: #{precompute_image_encoder.1} parent=5 // pred_check
        %p255 = pneg %p254
      $region30: #{precompute_image_encoder.1} parent=5 // pred_check_branch
        %257 = sbr.rel (%p255) target = $region32
      $region31: #{precompute_image_encoder.1} parent=5 // pred_region
        // Predicated region
        $region33: #{precompute_image_encoder.1} parent=31 // pred_check
          %p258 = pneg %p41
        $region34: #{precompute_image_encoder.1} parent=31 // pred_check_branch
          %260 = sbr.rel (%p258) target = $region36
        $region35: #{precompute_image_encoder.1} parent=31 // pred_region
          %s261 = smul.u32 8, %s21
          %p262 = scmp.lt.s32.totalorder %s261, 15
          %s263 = scalar_select %p262, %s261, 15
          %s264 = smul.addr %s263, 4
          %s265 = scalar_lea.vmem %s0, %s264
          %s266 = smul.u32 8, %s21
        $region36: #{precompute_image_encoder.1} parent=31 // pred_fallthru
          _
        // Predicated region
        $region37: #{precompute_image_encoder.1} parent=31 // pred_check
          %p267 = pneg %p67
        $region38: #{precompute_image_encoder.1} parent=31 // pred_check_branch
          %269 = sbr.rel (%p267) target = $region40
        $region39: #{precompute_image_encoder.1} parent=31 // pred_region
          %s270 = sand.u32 %s57, 1
          %s271 = scalar_lea.sflag [#allocation4], %s270
          %s272 = sand.u32 %s57, 1
          %s273 = smul.addr %s272, 4096
          %s274 = scalar_lea.vmem [#allocation3], %s273
          %s275 = smul.u32 128, %s21
          %s277 = ssub.s32 65536, 65536
          %278 = vsyncadd %s271, %s277
          %s279 = smul.addr %s275, 8
          %s280 = smul.addr %s279, 64
          %s281 = scalar_lea.hbm %s1, %s280
          %s282 = sshll.u32 %s274, 4
          %s283 = int_to_ptr.vmem [resolvable:$true] %s282
          %288 = dma.hbm_to_vmem [thread:$0]  %s281, 65536, %s283, %s271, 512, 512, 32
        $region40: #{precompute_image_encoder.1} parent=31 // pred_fallthru
          _
      $region32: #{precompute_image_encoder.1} parent=5 // pred_fallthru
        _
      %p289 = scmp.le.s32.totalorder 1, %s21
      %p290 = scmp.lt.s32.totalorder %s21, 3
      %p291 = pnand %p289, %p290
      %p292 = pneg %p291
      // Predicated region
      $region41: #{precompute_image_encoder.1} parent=5 // pred_check
        _
      $region42: #{precompute_image_encoder.1} parent=5 // pred_check_branch
        %294 = sbr.rel (%p291) target = $region44
      $region43: #{precompute_image_encoder.1} parent=5 // pred_region
        %s295 = ssub.s32 %s21, 1
        %s296 = sand.u32 %s60, 1
        %s297 = scalar_lea.sflag [#allocation4], %s296
        %s298 = sand.u32 %s60, 1
        %s299 = smul.addr %s298, 4096
        %s300 = scalar_lea.vmem [#allocation3], %s299
        // Predicated region
        $region45: #{precompute_image_encoder.1} parent=43 // pred_check
          %p301 = pneg %p73
        $region46: #{precompute_image_encoder.1} parent=43 // pred_check_branch
          %303 = sbr.rel (%p301) target = $region48
        $region47: #{precompute_image_encoder.1} parent=43 // pred_region
          %304 = dma.done %s297, 65536
        $region48: #{precompute_image_encoder.1} parent=43 // pred_fallthru
          _
        // Predicated region
        $region49: #{precompute_image_encoder.1} parent=43 // pred_check
          %p305 = pneg %p94
        $region50: #{precompute_image_encoder.1} parent=43 // pred_check_branch
          %307 = sbr.rel (%p305) target = $region52
        $region51: #{precompute_image_encoder.1} parent=43 // pred_region
          %308 = dma.done [#allocation7], 128
        $region52: #{precompute_image_encoder.1} parent=43 // pred_fallthru
          _
        // Predicated region
        $region53: #{precompute_image_encoder.1} parent=43 // pred_check
          %p309 = pneg %p115
        $region54: #{precompute_image_encoder.1} parent=43 // pred_check_branch
          %311 = sbr.rel (%p309) target = $region56
        $region55: #{precompute_image_encoder.1} parent=43 // pred_region
          %312 = dma.done [#allocation7], 8192
        $region56: #{precompute_image_encoder.1} parent=43 // pred_fallthru
          _
        // Predicated region
        $region57: #{precompute_image_encoder.1} parent=43 // pred_check
          %p313 = pneg %p157
        $region58: #{precompute_image_encoder.1} parent=43 // pred_check_branch
          %315 = sbr.rel (%p313) target = $region60
        $region59: #{precompute_image_encoder.1} parent=43 // pred_region
          %316 = dma.done [#allocation10], 2048
        $region60: #{precompute_image_encoder.1} parent=43 // pred_fallthru
          _
        %s317 = smul.u32 8, %s26
        %p318 = scmp.lt.s32.totalorder %s317, 15
        %s319 = scalar_select %p318, %s317, 15
        %s320 = smul.addr %s319, 4
        %s321 = scalar_lea.vmem %s0, %s320
        %p322 = pneg %p47
        %p323 = pneg %p44
        %s324 = sand.u32 %s60, 1
        %s325 = scalar_lea.sflag [#allocation4], %s324
        %s326 = sand.u32 %s60, 1
        %s327 = smul.addr %s326, 4096
        %s328 = scalar_lea.vmem [#allocation3], %s327
        %p329 = pneg %p73
        %p330 = pneg %p70
        %p331 = pneg %p94
        %p332 = pneg %p91
        %p333 = pneg %p115
        %p334 = pneg %p112
        %p335 = pneg %p136
        %p336 = pneg %p133
        %p337 = pneg %p157
        %p338 = pneg %p154
        %p339 = pneg %p178
        %p340 = pneg %p175
        %p341 = pneg %p199
        %p342 = pneg %p196
        %s343 = smul.u32 8, %s26
        %p344 = scmp.lt.s32.totalorder %s343, 15
        %s345 = scalar_select %p344, %s343, 15
        %s346 = smul.addr %s345, 4
        %s347 = scalar_lea.vmem %s0, %s346
        %s348 = smul.u32 8, %s26
        %s349 = smul.u32 128, %s26
        %p351 = scmp.eq.s32.totalorder %s26, 0
        // Predicated region
        $region61: #{precompute_image_encoder.1} parent=43 // pred_check
          %p352 = pneg %p351
        $region62: #{precompute_image_encoder.1} parent=43 // pred_check_branch
          %354 = sbr.rel (%p352) target = $region64
        $region63: #{precompute_image_encoder.1} parent=43 // pred_region
          %355 = vst [vmem:[#allocation2] sm:$0xff] 0.0
          %356 = vst [vmem:[#allocation2 + $0x8] sm:$0xff] 0.0
          %357 = vst [vmem:[#allocation2 + $0x10] sm:$0xff] 0.0
          %358 = vst [vmem:[#allocation2 + $0x18] sm:$0xff] 0.0
          %359 = vst [vmem:[#allocation2 + $0x20] sm:$0xff] 0.0
          %360 = vst [vmem:[#allocation2 + $0x28] sm:$0xff] 0.0
          %361 = vst [vmem:[#allocation2 + $0x30] sm:$0xff] 0.0
          %362 = vst [vmem:[#allocation2 + $0x38] sm:$0xff] 0.0
        $region64: #{precompute_image_encoder.1} parent=43 // pred_fallthru
          _
        %v363 = vld [vmem:[#allocation2] sm:$0xff]
        %v364 = vld [vmem:[#allocation2 + $0x8] sm:$0xff]
        %v365 = vld [vmem:[#allocation2 + $0x10] sm:$0xff]
        %v366 = vld [vmem:[#allocation2 + $0x18] sm:$0xff]
        %v367 = vld [vmem:[#allocation2 + $0x20] sm:$0xff]
        %v368 = vld [vmem:[#allocation2 + $0x28] sm:$0xff]
        %v369 = vld [vmem:[#allocation2 + $0x30] sm:$0xff]
        %v370 = vld [vmem:[#allocation2 + $0x38] sm:$0xff]
        %v371 = vld [vmem:[%s347] sm:$0xff]
        %v372 = vld [vmem:[%s347 + $0x8] sm:$0xff]
        %v373 = vld [vmem:[%s347 + $0x10] sm:$0xff]
        %v374 = vld [vmem:[%s347 + $0x18] sm:$0xff]
        %v375 = vld [vmem:[%s300] sm:$0xff]
        %v376 = vld [vmem:[%s300 + $0x8] sm:$0xff]
        %v377 = vld [vmem:[%s300 + $0x10] sm:$0xff]
        %v378 = vld [vmem:[%s300 + $0x18] sm:$0xff]
        %v379 = vld [vmem:[%s300 + $0x20] sm:$0xff]
        %v380 = vld [vmem:[%s300 + $0x28] sm:$0xff]
        %v381 = vld [vmem:[%s300 + $0x30] sm:$0xff]
        %v382 = vld [vmem:[%s300 + $0x38] sm:$0xff]
        %v383 = vld [vmem:[%s300 + $0x40] sm:$0xff]
        %v384 = vld [vmem:[%s300 + $0x48] sm:$0xff]
        %v385 = vld [vmem:[%s300 + $0x50] sm:$0xff]
        %v386 = vld [vmem:[%s300 + $0x58] sm:$0xff]
        %v387 = vld [vmem:[%s300 + $0x60] sm:$0xff]
        %v388 = vld [vmem:[%s300 + $0x68] sm:$0xff]
        %v389 = vld [vmem:[%s300 + $0x70] sm:$0xff]
        %v390 = vld [vmem:[%s300 + $0x78] sm:$0xff]
        %v391 = vld [vmem:[%s300 + $0x80] sm:$0xff]
        %v392 = vld [vmem:[%s300 + $0x88] sm:$0xff]
        %v393 = vld [vmem:[%s300 + $0x90] sm:$0xff]
        %v394 = vld [vmem:[%s300 + $0x98] sm:$0xff]
        %v395 = vld [vmem:[%s300 + $0xa0] sm:$0xff]
        %v396 = vld [vmem:[%s300 + $0xa8] sm:$0xff]
        %v397 = vld [vmem:[%s300 + $0xb0] sm:$0xff]
        %v398 = vld [vmem:[%s300 + $0xb8] sm:$0xff]
        %v399 = vld [vmem:[%s300 + $0xc0] sm:$0xff]
        %v400 = vld [vmem:[%s300 + $0xc8] sm:$0xff]
        %v401 = vld [vmem:[%s300 + $0xd0] sm:$0xff]
        %v402 = vld [vmem:[%s300 + $0xd8] sm:$0xff]
        %v403 = vld [vmem:[%s300 + $0xe0] sm:$0xff]
        %v404 = vld [vmem:[%s300 + $0xe8] sm:$0xff]
        %v405 = vld [vmem:[%s300 + $0xf0] sm:$0xff]
        %v406 = vld [vmem:[%s300 + $0xf8] sm:$0xff]
        %v407 = vld [vmem:[%s300 + $0x100] sm:$0xff]
        %v408 = vld [vmem:[%s300 + $0x108] sm:$0xff]
        %v409 = vld [vmem:[%s300 + $0x110] sm:$0xff]
        %v410 = vld [vmem:[%s300 + $0x118] sm:$0xff]
        %v411 = vld [vmem:[%s300 + $0x120] sm:$0xff]
        %v412 = vld [vmem:[%s300 + $0x128] sm:$0xff]
        %v413 = vld [vmem:[%s300 + $0x130] sm:$0xff]
        %v414 = vld [vmem:[%s300 + $0x138] sm:$0xff]
        %v415 = vld [vmem:[%s300 + $0x140] sm:$0xff]
        %v416 = vld [vmem:[%s300 + $0x148] sm:$0xff]
        %v417 = vld [vmem:[%s300 + $0x150] sm:$0xff]
        %v418 = vld [vmem:[%s300 + $0x158] sm:$0xff]
        %v419 = vld [vmem:[%s300 + $0x160] sm:$0xff]
        %v420 = vld [vmem:[%s300 + $0x168] sm:$0xff]
        %v421 = vld [vmem:[%s300 + $0x170] sm:$0xff]
        %v422 = vld [vmem:[%s300 + $0x178] sm:$0xff]
        %v423 = vld [vmem:[%s300 + $0x180] sm:$0xff]
        %v424 = vld [vmem:[%s300 + $0x188] sm:$0xff]
        %v425 = vld [vmem:[%s300 + $0x190] sm:$0xff]
        %v426 = vld [vmem:[%s300 + $0x198] sm:$0xff]
        %v427 = vld [vmem:[%s300 + $0x1a0] sm:$0xff]
        %v428 = vld [vmem:[%s300 + $0x1a8] sm:$0xff]
        %v429 = vld [vmem:[%s300 + $0x1b0] sm:$0xff]
        %v430 = vld [vmem:[%s300 + $0x1b8] sm:$0xff]
        %v431 = vld [vmem:[%s300 + $0x1c0] sm:$0xff]
        %v432 = vld [vmem:[%s300 + $0x1c8] sm:$0xff]
        %v433 = vld [vmem:[%s300 + $0x1d0] sm:$0xff]
        %v434 = vld [vmem:[%s300 + $0x1d8] sm:$0xff]
        %v435 = vld [vmem:[%s300 + $0x1e0] sm:$0xff]
        %v436 = vld [vmem:[%s300 + $0x1e8] sm:$0xff]
        %v437 = vld [vmem:[%s300 + $0x1f0] sm:$0xff]
        %v438 = vld [vmem:[%s300 + $0x1f8] sm:$0xff]
        %v439 = vld [vmem:[%s300 + $0x200] sm:$0xff]
        %v440 = vld [vmem:[%s300 + $0x208] sm:$0xff]
        %v441 = vld [vmem:[%s300 + $0x210] sm:$0xff]
        %v442 = vld [vmem:[%s300 + $0x218] sm:$0xff]
        %v443 = vld [vmem:[%s300 + $0x220] sm:$0xff]
        %v444 = vld [vmem:[%s300 + $0x228] sm:$0xff]
        %v445 = vld [vmem:[%s300 + $0x230] sm:$0xff]
        %v446 = vld [vmem:[%s300 + $0x238] sm:$0xff]
        %v447 = vld [vmem:[%s300 + $0x240] sm:$0xff]
        %v448 = vld [vmem:[%s300 + $0x248] sm:$0xff]
        %v449 = vld [vmem:[%s300 + $0x250] sm:$0xff]
        %v450 = vld [vmem:[%s300 + $0x258] sm:$0xff]
        %v451 = vld [vmem:[%s300 + $0x260] sm:$0xff]
        %v452 = vld [vmem:[%s300 + $0x268] sm:$0xff]
        %v453 = vld [vmem:[%s300 + $0x270] sm:$0xff]
        %v454 = vld [vmem:[%s300 + $0x278] sm:$0xff]
        %v455 = vld [vmem:[%s300 + $0x280] sm:$0xff]
        %v456 = vld [vmem:[%s300 + $0x288] sm:$0xff]
        %v457 = vld [vmem:[%s300 + $0x290] sm:$0xff]
        %v458 = vld [vmem:[%s300 + $0x298] sm:$0xff]
        %v459 = vld [vmem:[%s300 + $0x2a0] sm:$0xff]
        %v460 = vld [vmem:[%s300 + $0x2a8] sm:$0xff]
        %v461 = vld [vmem:[%s300 + $0x2b0] sm:$0xff]
        %v462 = vld [vmem:[%s300 + $0x2b8] sm:$0xff]
        %v463 = vld [vmem:[%s300 + $0x2c0] sm:$0xff]
        %v464 = vld [vmem:[%s300 + $0x2c8] sm:$0xff]
        %v465 = vld [vmem:[%s300 + $0x2d0] sm:$0xff]
        %v466 = vld [vmem:[%s300 + $0x2d8] sm:$0xff]
        %v467 = vld [vmem:[%s300 + $0x2e0] sm:$0xff]
        %v468 = vld [vmem:[%s300 + $0x2e8] sm:$0xff]
        %v469 = vld [vmem:[%s300 + $0x2f0] sm:$0xff]
        %v470 = vld [vmem:[%s300 + $0x2f8] sm:$0xff]
        %v471 = vld [vmem:[%s300 + $0x300] sm:$0xff]
        %v472 = vld [vmem:[%s300 + $0x308] sm:$0xff]
        %v473 = vld [vmem:[%s300 + $0x310] sm:$0xff]
        %v474 = vld [vmem:[%s300 + $0x318] sm:$0xff]
        %v475 = vld [vmem:[%s300 + $0x320] sm:$0xff]
        %v476 = vld [vmem:[%s300 + $0x328] sm:$0xff]
        %v477 = vld [vmem:[%s300 + $0x330] sm:$0xff]
        %v478 = vld [vmem:[%s300 + $0x338] sm:$0xff]
        %v479 = vld [vmem:[%s300 + $0x340] sm:$0xff]
        %v480 = vld [vmem:[%s300 + $0x348] sm:$0xff]
        %v481 = vld [vmem:[%s300 + $0x350] sm:$0xff]
        %v482 = vld [vmem:[%s300 + $0x358] sm:$0xff]
        %v483 = vld [vmem:[%s300 + $0x360] sm:$0xff]
        %v484 = vld [vmem:[%s300 + $0x368] sm:$0xff]
        %v485 = vld [vmem:[%s300 + $0x370] sm:$0xff]
        %v486 = vld [vmem:[%s300 + $0x378] sm:$0xff]
        %v487 = vld [vmem:[%s300 + $0x380] sm:$0xff]
        %v488 = vld [vmem:[%s300 + $0x388] sm:$0xff]
        %v489 = vld [vmem:[%s300 + $0x390] sm:$0xff]
        %v490 = vld [vmem:[%s300 + $0x398] sm:$0xff]
        %v491 = vld [vmem:[%s300 + $0x3a0] sm:$0xff]
        %v492 = vld [vmem:[%s300 + $0x3a8] sm:$0xff]
        %v493 = vld [vmem:[%s300 + $0x3b0] sm:$0xff]
        %v494 = vld [vmem:[%s300 + $0x3b8] sm:$0xff]
        %v495 = vld [vmem:[%s300 + $0x3c0] sm:$0xff]
        %v496 = vld [vmem:[%s300 + $0x3c8] sm:$0xff]
        %v497 = vld [vmem:[%s300 + $0x3d0] sm:$0xff]
        %v498 = vld [vmem:[%s300 + $0x3d8] sm:$0xff]
        %v499 = vld [vmem:[%s300 + $0x3e0] sm:$0xff]
        %v500 = vld [vmem:[%s300 + $0x3e8] sm:$0xff]
        %v501 = vld [vmem:[%s300 + $0x3f0] sm:$0xff]
        %v502 = vld [vmem:[%s300 + $0x3f8] sm:$0xff]
        %v503 = vld [vmem:[%s300 + $0x400] sm:$0xff]
        %v504 = vld [vmem:[%s300 + $0x408] sm:$0xff]
        %v505 = vld [vmem:[%s300 + $0x410] sm:$0xff]
        %v506 = vld [vmem:[%s300 + $0x418] sm:$0xff]
        %v507 = vld [vmem:[%s300 + $0x420] sm:$0xff]
        %v508 = vld [vmem:[%s300 + $0x428] sm:$0xff]
        %v509 = vld [vmem:[%s300 + $0x430] sm:$0xff]
        %v510 = vld [vmem:[%s300 + $0x438] sm:$0xff]
        %v511 = vld [vmem:[%s300 + $0x440] sm:$0xff]
        %v512 = vld [vmem:[%s300 + $0x448] sm:$0xff]
        %v513 = vld [vmem:[%s300 + $0x450] sm:$0xff]
        %v514 = vld [vmem:[%s300 + $0x458] sm:$0xff]
        %v515 = vld [vmem:[%s300 + $0x460] sm:$0xff]
        %v516 = vld [vmem:[%s300 + $0x468] sm:$0xff]
        %v517 = vld [vmem:[%s300 + $0x470] sm:$0xff]
        %v518 = vld [vmem:[%s300 + $0x478] sm:$0xff]
        %v519 = vld [vmem:[%s300 + $0x480] sm:$0xff]
        %v520 = vld [vmem:[%s300 + $0x488] sm:$0xff]
        %v521 = vld [vmem:[%s300 + $0x490] sm:$0xff]
        %v522 = vld [vmem:[%s300 + $0x498] sm:$0xff]
        %v523 = vld [vmem:[%s300 + $0x4a0] sm:$0xff]
        %v524 = vld [vmem:[%s300 + $0x4a8] sm:$0xff]
        %v525 = vld [vmem:[%s300 + $0x4b0] sm:$0xff]
        %v526 = vld [vmem:[%s300 + $0x4b8] sm:$0xff]
        %v527 = vld [vmem:[%s300 + $0x4c0] sm:$0xff]
        %v528 = vld [vmem:[%s300 + $0x4c8] sm:$0xff]
        %v529 = vld [vmem:[%s300 + $0x4d0] sm:$0xff]
        %v530 = vld [vmem:[%s300 + $0x4d8] sm:$0xff]
        %v531 = vld [vmem:[%s300 + $0x4e0] sm:$0xff]
        %v532 = vld [vmem:[%s300 + $0x4e8] sm:$0xff]
        %v533 = vld [vmem:[%s300 + $0x4f0] sm:$0xff]
        %v534 = vld [vmem:[%s300 + $0x4f8] sm:$0xff]
        %v535 = vld [vmem:[%s300 + $0x500] sm:$0xff]
        %v536 = vld [vmem:[%s300 + $0x508] sm:$0xff]
        %v537 = vld [vmem:[%s300 + $0x510] sm:$0xff]
        %v538 = vld [vmem:[%s300 + $0x518] sm:$0xff]
        %v539 = vld [vmem:[%s300 + $0x520] sm:$0xff]
        %v540 = vld [vmem:[%s300 + $0x528] sm:$0xff]
        %v541 = vld [vmem:[%s300 + $0x530] sm:$0xff]
        %v542 = vld [vmem:[%s300 + $0x538] sm:$0xff]
        %v543 = vld [vmem:[%s300 + $0x540] sm:$0xff]
        %v544 = vld [vmem:[%s300 + $0x548] sm:$0xff]
        %v545 = vld [vmem:[%s300 + $0x550] sm:$0xff]
        %v546 = vld [vmem:[%s300 + $0x558] sm:$0xff]
        %v547 = vld [vmem:[%s300 + $0x560] sm:$0xff]
        %v548 = vld [vmem:[%s300 + $0x568] sm:$0xff]
        %v549 = vld [vmem:[%s300 + $0x570] sm:$0xff]
        %v550 = vld [vmem:[%s300 + $0x578] sm:$0xff]
        %v551 = vld [vmem:[%s300 + $0x580] sm:$0xff]
        %v552 = vld [vmem:[%s300 + $0x588] sm:$0xff]
        %v553 = vld [vmem:[%s300 + $0x590] sm:$0xff]
        %v554 = vld [vmem:[%s300 + $0x598] sm:$0xff]
        %v555 = vld [vmem:[%s300 + $0x5a0] sm:$0xff]
        %v556 = vld [vmem:[%s300 + $0x5a8] sm:$0xff]
        %v557 = vld [vmem:[%s300 + $0x5b0] sm:$0xff]
        %v558 = vld [vmem:[%s300 + $0x5b8] sm:$0xff]
        %v559 = vld [vmem:[%s300 + $0x5c0] sm:$0xff]
        %v560 = vld [vmem:[%s300 + $0x5c8] sm:$0xff]
        %v561 = vld [vmem:[%s300 + $0x5d0] sm:$0xff]
        %v562 = vld [vmem:[%s300 + $0x5d8] sm:$0xff]
        %v563 = vld [vmem:[%s300 + $0x5e0] sm:$0xff]
        %v564 = vld [vmem:[%s300 + $0x5e8] sm:$0xff]
        %v565 = vld [vmem:[%s300 + $0x5f0] sm:$0xff]
        %v566 = vld [vmem:[%s300 + $0x5f8] sm:$0xff]
        %v567 = vld [vmem:[%s300 + $0x600] sm:$0xff]
        %v568 = vld [vmem:[%s300 + $0x608] sm:$0xff]
        %v569 = vld [vmem:[%s300 + $0x610] sm:$0xff]
        %v570 = vld [vmem:[%s300 + $0x618] sm:$0xff]
        %v571 = vld [vmem:[%s300 + $0x620] sm:$0xff]
        %v572 = vld [vmem:[%s300 + $0x628] sm:$0xff]
        %v573 = vld [vmem:[%s300 + $0x630] sm:$0xff]
        %v574 = vld [vmem:[%s300 + $0x638] sm:$0xff]
        %v575 = vld [vmem:[%s300 + $0x640] sm:$0xff]
        %v576 = vld [vmem:[%s300 + $0x648] sm:$0xff]
        %v577 = vld [vmem:[%s300 + $0x650] sm:$0xff]
        %v578 = vld [vmem:[%s300 + $0x658] sm:$0xff]
        %v579 = vld [vmem:[%s300 + $0x660] sm:$0xff]
        %v580 = vld [vmem:[%s300 + $0x668] sm:$0xff]
        %v581 = vld [vmem:[%s300 + $0x670] sm:$0xff]
        %v582 = vld [vmem:[%s300 + $0x678] sm:$0xff]
        %v583 = vld [vmem:[%s300 + $0x680] sm:$0xff]
        %v584 = vld [vmem:[%s300 + $0x688] sm:$0xff]
        %v585 = vld [vmem:[%s300 + $0x690] sm:$0xff]
        %v586 = vld [vmem:[%s300 + $0x698] sm:$0xff]
        %v587 = vld [vmem:[%s300 + $0x6a0] sm:$0xff]
        %v588 = vld [vmem:[%s300 + $0x6a8] sm:$0xff]
        %v589 = vld [vmem:[%s300 + $0x6b0] sm:$0xff]
        %v590 = vld [vmem:[%s300 + $0x6b8] sm:$0xff]
        %v591 = vld [vmem:[%s300 + $0x6c0] sm:$0xff]
        %v592 = vld [vmem:[%s300 + $0x6c8] sm:$0xff]
        %v593 = vld [vmem:[%s300 + $0x6d0] sm:$0xff]
        %v594 = vld [vmem:[%s300 + $0x6d8] sm:$0xff]
        %v595 = vld [vmem:[%s300 + $0x6e0] sm:$0xff]
        %v596 = vld [vmem:[%s300 + $0x6e8] sm:$0xff]
        %v597 = vld [vmem:[%s300 + $0x6f0] sm:$0xff]
        %v598 = vld [vmem:[%s300 + $0x6f8] sm:$0xff]
        %v599 = vld [vmem:[%s300 + $0x700] sm:$0xff]
        %v600 = vld [vmem:[%s300 + $0x708] sm:$0xff]
        %v601 = vld [vmem:[%s300 + $0x710] sm:$0xff]
        %v602 = vld [vmem:[%s300 + $0x718] sm:$0xff]
        %v603 = vld [vmem:[%s300 + $0x720] sm:$0xff]
        %v604 = vld [vmem:[%s300 + $0x728] sm:$0xff]
        %v605 = vld [vmem:[%s300 + $0x730] sm:$0xff]
        %v606 = vld [vmem:[%s300 + $0x738] sm:$0xff]
        %v607 = vld [vmem:[%s300 + $0x740] sm:$0xff]
        %v608 = vld [vmem:[%s300 + $0x748] sm:$0xff]
        %v609 = vld [vmem:[%s300 + $0x750] sm:$0xff]
        %v610 = vld [vmem:[%s300 + $0x758] sm:$0xff]
        %v611 = vld [vmem:[%s300 + $0x760] sm:$0xff]
        %v612 = vld [vmem:[%s300 + $0x768] sm:$0xff]
        %v613 = vld [vmem:[%s300 + $0x770] sm:$0xff]
        %v614 = vld [vmem:[%s300 + $0x778] sm:$0xff]
        %v615 = vld [vmem:[%s300 + $0x780] sm:$0xff]
        %v616 = vld [vmem:[%s300 + $0x788] sm:$0xff]
        %v617 = vld [vmem:[%s300 + $0x790] sm:$0xff]
        %v618 = vld [vmem:[%s300 + $0x798] sm:$0xff]
        %v619 = vld [vmem:[%s300 + $0x7a0] sm:$0xff]
        %v620 = vld [vmem:[%s300 + $0x7a8] sm:$0xff]
        %v621 = vld [vmem:[%s300 + $0x7b0] sm:$0xff]
        %v622 = vld [vmem:[%s300 + $0x7b8] sm:$0xff]
        %v623 = vld [vmem:[%s300 + $0x7c0] sm:$0xff]
        %v624 = vld [vmem:[%s300 + $0x7c8] sm:$0xff]
        %v625 = vld [vmem:[%s300 + $0x7d0] sm:$0xff]
        %v626 = vld [vmem:[%s300 + $0x7d8] sm:$0xff]
        %v627 = vld [vmem:[%s300 + $0x7e0] sm:$0xff]
        %v628 = vld [vmem:[%s300 + $0x7e8] sm:$0xff]
        %v629 = vld [vmem:[%s300 + $0x7f0] sm:$0xff]
        %v630 = vld [vmem:[%s300 + $0x7f8] sm:$0xff]
        %v631 = vld [vmem:[%s300 + $0x800] sm:$0xff]
        %v632 = vld [vmem:[%s300 + $0x808] sm:$0xff]
        %v633 = vld [vmem:[%s300 + $0x810] sm:$0xff]
        %v634 = vld [vmem:[%s300 + $0x818] sm:$0xff]
        %v635 = vld [vmem:[%s300 + $0x820] sm:$0xff]
        %v636 = vld [vmem:[%s300 + $0x828] sm:$0xff]
        %v637 = vld [vmem:[%s300 + $0x830] sm:$0xff]
        %v638 = vld [vmem:[%s300 + $0x838] sm:$0xff]
        %v639 = vld [vmem:[%s300 + $0x840] sm:$0xff]
        %v640 = vld [vmem:[%s300 + $0x848] sm:$0xff]
        %v641 = vld [vmem:[%s300 + $0x850] sm:$0xff]
        %v642 = vld [vmem:[%s300 + $0x858] sm:$0xff]
        %v643 = vld [vmem:[%s300 + $0x860] sm:$0xff]
        %v644 = vld [vmem:[%s300 + $0x868] sm:$0xff]
        %v645 = vld [vmem:[%s300 + $0x870] sm:$0xff]
        %v646 = vld [vmem:[%s300 + $0x878] sm:$0xff]
        %v647 = vld [vmem:[%s300 + $0x880] sm:$0xff]
        %v648 = vld [vmem:[%s300 + $0x888] sm:$0xff]
        %v649 = vld [vmem:[%s300 + $0x890] sm:$0xff]
        %v650 = vld [vmem:[%s300 + $0x898] sm:$0xff]
        %v651 = vld [vmem:[%s300 + $0x8a0] sm:$0xff]
        %v652 = vld [vmem:[%s300 + $0x8a8] sm:$0xff]
        %v653 = vld [vmem:[%s300 + $0x8b0] sm:$0xff]
        %v654 = vld [vmem:[%s300 + $0x8b8] sm:$0xff]
        %v655 = vld [vmem:[%s300 + $0x8c0] sm:$0xff]
        %v656 = vld [vmem:[%s300 + $0x8c8] sm:$0xff]
        %v657 = vld [vmem:[%s300 + $0x8d0] sm:$0xff]
        %v658 = vld [vmem:[%s300 + $0x8d8] sm:$0xff]
        %v659 = vld [vmem:[%s300 + $0x8e0] sm:$0xff]
        %v660 = vld [vmem:[%s300 + $0x8e8] sm:$0xff]
        %v661 = vld [vmem:[%s300 + $0x8f0] sm:$0xff]
        %v662 = vld [vmem:[%s300 + $0x8f8] sm:$0xff]
        %v663 = vld [vmem:[%s300 + $0x900] sm:$0xff]
        %v664 = vld [vmem:[%s300 + $0x908] sm:$0xff]
        %v665 = vld [vmem:[%s300 + $0x910] sm:$0xff]
        %v666 = vld [vmem:[%s300 + $0x918] sm:$0xff]
        %v667 = vld [vmem:[%s300 + $0x920] sm:$0xff]
        %v668 = vld [vmem:[%s300 + $0x928] sm:$0xff]
        %v669 = vld [vmem:[%s300 + $0x930] sm:$0xff]
        %v670 = vld [vmem:[%s300 + $0x938] sm:$0xff]
        %v671 = vld [vmem:[%s300 + $0x940] sm:$0xff]
        %v672 = vld [vmem:[%s300 + $0x948] sm:$0xff]
        %v673 = vld [vmem:[%s300 + $0x950] sm:$0xff]
        %v674 = vld [vmem:[%s300 + $0x958] sm:$0xff]
        %v675 = vld [vmem:[%s300 + $0x960] sm:$0xff]
        %v676 = vld [vmem:[%s300 + $0x968] sm:$0xff]
        %v677 = vld [vmem:[%s300 + $0x970] sm:$0xff]
        %v678 = vld [vmem:[%s300 + $0x978] sm:$0xff]
        %v679 = vld [vmem:[%s300 + $0x980] sm:$0xff]
        %v680 = vld [vmem:[%s300 + $0x988] sm:$0xff]
        %v681 = vld [vmem:[%s300 + $0x990] sm:$0xff]
        %v682 = vld [vmem:[%s300 + $0x998] sm:$0xff]
        %v683 = vld [vmem:[%s300 + $0x9a0] sm:$0xff]
        %v684 = vld [vmem:[%s300 + $0x9a8] sm:$0xff]
        %v685 = vld [vmem:[%s300 + $0x9b0] sm:$0xff]
        %v686 = vld [vmem:[%s300 + $0x9b8] sm:$0xff]
        %v687 = vld [vmem:[%s300 + $0x9c0] sm:$0xff]
        %v688 = vld [vmem:[%s300 + $0x9c8] sm:$0xff]
        %v689 = vld [vmem:[%s300 + $0x9d0] sm:$0xff]
        %v690 = vld [vmem:[%s300 + $0x9d8] sm:$0xff]
        %v691 = vld [vmem:[%s300 + $0x9e0] sm:$0xff]
        %v692 = vld [vmem:[%s300 + $0x9e8] sm:$0xff]
        %v693 = vld [vmem:[%s300 + $0x9f0] sm:$0xff]
        %v694 = vld [vmem:[%s300 + $0x9f8] sm:$0xff]
        %v695 = vld [vmem:[%s300 + $0xa00] sm:$0xff]
        %v696 = vld [vmem:[%s300 + $0xa08] sm:$0xff]
        %v697 = vld [vmem:[%s300 + $0xa10] sm:$0xff]
        %v698 = vld [vmem:[%s300 + $0xa18] sm:$0xff]
        %v699 = vld [vmem:[%s300 + $0xa20] sm:$0xff]
        %v700 = vld [vmem:[%s300 + $0xa28] sm:$0xff]
        %v701 = vld [vmem:[%s300 + $0xa30] sm:$0xff]
        %v702 = vld [vmem:[%s300 + $0xa38] sm:$0xff]
        %v703 = vld [vmem:[%s300 + $0xa40] sm:$0xff]
        %v704 = vld [vmem:[%s300 + $0xa48] sm:$0xff]
        %v705 = vld [vmem:[%s300 + $0xa50] sm:$0xff]
        %v706 = vld [vmem:[%s300 + $0xa58] sm:$0xff]
        %v707 = vld [vmem:[%s300 + $0xa60] sm:$0xff]
        %v708 = vld [vmem:[%s300 + $0xa68] sm:$0xff]
        %v709 = vld [vmem:[%s300 + $0xa70] sm:$0xff]
        %v710 = vld [vmem:[%s300 + $0xa78] sm:$0xff]
        %v711 = vld [vmem:[%s300 + $0xa80] sm:$0xff]
        %v712 = vld [vmem:[%s300 + $0xa88] sm:$0xff]
        %v713 = vld [vmem:[%s300 + $0xa90] sm:$0xff]
        %v714 = vld [vmem:[%s300 + $0xa98] sm:$0xff]
        %v715 = vld [vmem:[%s300 + $0xaa0] sm:$0xff]
        %v716 = vld [vmem:[%s300 + $0xaa8] sm:$0xff]
        %v717 = vld [vmem:[%s300 + $0xab0] sm:$0xff]
        %v718 = vld [vmem:[%s300 + $0xab8] sm:$0xff]
        %v719 = vld [vmem:[%s300 + $0xac0] sm:$0xff]
        %v720 = vld [vmem:[%s300 + $0xac8] sm:$0xff]
        %v721 = vld [vmem:[%s300 + $0xad0] sm:$0xff]
        %v722 = vld [vmem:[%s300 + $0xad8] sm:$0xff]
        %v723 = vld [vmem:[%s300 + $0xae0] sm:$0xff]
        %v724 = vld [vmem:[%s300 + $0xae8] sm:$0xff]
        %v725 = vld [vmem:[%s300 + $0xaf0] sm:$0xff]
        %v726 = vld [vmem:[%s300 + $0xaf8] sm:$0xff]
        %v727 = vld [vmem:[%s300 + $0xb00] sm:$0xff]
        %v728 = vld [vmem:[%s300 + $0xb08] sm:$0xff]
        %v729 = vld [vmem:[%s300 + $0xb10] sm:$0xff]
        %v730 = vld [vmem:[%s300 + $0xb18] sm:$0xff]
        %v731 = vld [vmem:[%s300 + $0xb20] sm:$0xff]
        %v732 = vld [vmem:[%s300 + $0xb28] sm:$0xff]
        %v733 = vld [vmem:[%s300 + $0xb30] sm:$0xff]
        %v734 = vld [vmem:[%s300 + $0xb38] sm:$0xff]
        %v735 = vld [vmem:[%s300 + $0xb40] sm:$0xff]
        %v736 = vld [vmem:[%s300 + $0xb48] sm:$0xff]
        %v737 = vld [vmem:[%s300 + $0xb50] sm:$0xff]
        %v738 = vld [vmem:[%s300 + $0xb58] sm:$0xff]
        %v739 = vld [vmem:[%s300 + $0xb60] sm:$0xff]
        %v740 = vld [vmem:[%s300 + $0xb68] sm:$0xff]
        %v741 = vld [vmem:[%s300 + $0xb70] sm:$0xff]
        %v742 = vld [vmem:[%s300 + $0xb78] sm:$0xff]
        %v743 = vld [vmem:[%s300 + $0xb80] sm:$0xff]
        %v744 = vld [vmem:[%s300 + $0xb88] sm:$0xff]
        %v745 = vld [vmem:[%s300 + $0xb90] sm:$0xff]
        %v746 = vld [vmem:[%s300 + $0xb98] sm:$0xff]
        %v747 = vld [vmem:[%s300 + $0xba0] sm:$0xff]
        %v748 = vld [vmem:[%s300 + $0xba8] sm:$0xff]
        %v749 = vld [vmem:[%s300 + $0xbb0] sm:$0xff]
        %v750 = vld [vmem:[%s300 + $0xbb8] sm:$0xff]
        %v751 = vld [vmem:[%s300 + $0xbc0] sm:$0xff]
        %v752 = vld [vmem:[%s300 + $0xbc8] sm:$0xff]
        %v753 = vld [vmem:[%s300 + $0xbd0] sm:$0xff]
        %v754 = vld [vmem:[%s300 + $0xbd8] sm:$0xff]
        %v755 = vld [vmem:[%s300 + $0xbe0] sm:$0xff]
        %v756 = vld [vmem:[%s300 + $0xbe8] sm:$0xff]
        %v757 = vld [vmem:[%s300 + $0xbf0] sm:$0xff]
        %v758 = vld [vmem:[%s300 + $0xbf8] sm:$0xff]
        %v759 = vld [vmem:[%s300 + $0xc00] sm:$0xff]
        %v760 = vld [vmem:[%s300 + $0xc08] sm:$0xff]
        %v761 = vld [vmem:[%s300 + $0xc10] sm:$0xff]
        %v762 = vld [vmem:[%s300 + $0xc18] sm:$0xff]
        %v763 = vld [vmem:[%s300 + $0xc20] sm:$0xff]
        %v764 = vld [vmem:[%s300 + $0xc28] sm:$0xff]
        %v765 = vld [vmem:[%s300 + $0xc30] sm:$0xff]
        %v766 = vld [vmem:[%s300 + $0xc38] sm:$0xff]
        %v767 = vld [vmem:[%s300 + $0xc40] sm:$0xff]
        %v768 = vld [vmem:[%s300 + $0xc48] sm:$0xff]
        %v769 = vld [vmem:[%s300 + $0xc50] sm:$0xff]
        %v770 = vld [vmem:[%s300 + $0xc58] sm:$0xff]
        %v771 = vld [vmem:[%s300 + $0xc60] sm:$0xff]
        %v772 = vld [vmem:[%s300 + $0xc68] sm:$0xff]
        %v773 = vld [vmem:[%s300 + $0xc70] sm:$0xff]
        %v774 = vld [vmem:[%s300 + $0xc78] sm:$0xff]
        %v775 = vld [vmem:[%s300 + $0xc80] sm:$0xff]
        %v776 = vld [vmem:[%s300 + $0xc88] sm:$0xff]
        %v777 = vld [vmem:[%s300 + $0xc90] sm:$0xff]
        %v778 = vld [vmem:[%s300 + $0xc98] sm:$0xff]
        %v779 = vld [vmem:[%s300 + $0xca0] sm:$0xff]
        %v780 = vld [vmem:[%s300 + $0xca8] sm:$0xff]
        %v781 = vld [vmem:[%s300 + $0xcb0] sm:$0xff]
        %v782 = vld [vmem:[%s300 + $0xcb8] sm:$0xff]
        %v783 = vld [vmem:[%s300 + $0xcc0] sm:$0xff]
        %v784 = vld [vmem:[%s300 + $0xcc8] sm:$0xff]
        %v785 = vld [vmem:[%s300 + $0xcd0] sm:$0xff]
        %v786 = vld [vmem:[%s300 + $0xcd8] sm:$0xff]
        %v787 = vld [vmem:[%s300 + $0xce0] sm:$0xff]
        %v788 = vld [vmem:[%s300 + $0xce8] sm:$0xff]
        %v789 = vld [vmem:[%s300 + $0xcf0] sm:$0xff]
        %v790 = vld [vmem:[%s300 + $0xcf8] sm:$0xff]
        %v791 = vld [vmem:[%s300 + $0xd00] sm:$0xff]
        %v792 = vld [vmem:[%s300 + $0xd08] sm:$0xff]
        %v793 = vld [vmem:[%s300 + $0xd10] sm:$0xff]
        %v794 = vld [vmem:[%s300 + $0xd18] sm:$0xff]
        %v795 = vld [vmem:[%s300 + $0xd20] sm:$0xff]
        %v796 = vld [vmem:[%s300 + $0xd28] sm:$0xff]
        %v797 = vld [vmem:[%s300 + $0xd30] sm:$0xff]
        %v798 = vld [vmem:[%s300 + $0xd38] sm:$0xff]
        %v799 = vld [vmem:[%s300 + $0xd40] sm:$0xff]
        %v800 = vld [vmem:[%s300 + $0xd48] sm:$0xff]
        %v801 = vld [vmem:[%s300 + $0xd50] sm:$0xff]
        %v802 = vld [vmem:[%s300 + $0xd58] sm:$0xff]
        %v803 = vld [vmem:[%s300 + $0xd60] sm:$0xff]
        %v804 = vld [vmem:[%s300 + $0xd68] sm:$0xff]
        %v805 = vld [vmem:[%s300 + $0xd70] sm:$0xff]
        %v806 = vld [vmem:[%s300 + $0xd78] sm:$0xff]
        %v807 = vld [vmem:[%s300 + $0xd80] sm:$0xff]
        %v808 = vld [vmem:[%s300 + $0xd88] sm:$0xff]
        %v809 = vld [vmem:[%s300 + $0xd90] sm:$0xff]
        %v810 = vld [vmem:[%s300 + $0xd98] sm:$0xff]
        %v811 = vld [vmem:[%s300 + $0xda0] sm:$0xff]
        %v812 = vld [vmem:[%s300 + $0xda8] sm:$0xff]
        %v813 = vld [vmem:[%s300 + $0xdb0] sm:$0xff]
        %v814 = vld [vmem:[%s300 + $0xdb8] sm:$0xff]
        %v815 = vld [vmem:[%s300 + $0xdc0] sm:$0xff]
        %v816 = vld [vmem:[%s300 + $0xdc8] sm:$0xff]
        %v817 = vld [vmem:[%s300 + $0xdd0] sm:$0xff]
        %v818 = vld [vmem:[%s300 + $0xdd8] sm:$0xff]
        %v819 = vld [vmem:[%s300 + $0xde0] sm:$0xff]
        %v820 = vld [vmem:[%s300 + $0xde8] sm:$0xff]
        %v821 = vld [vmem:[%s300 + $0xdf0] sm:$0xff]
        %v822 = vld [vmem:[%s300 + $0xdf8] sm:$0xff]
        %v823 = vld [vmem:[%s300 + $0xe00] sm:$0xff]
        %v824 = vld [vmem:[%s300 + $0xe08] sm:$0xff]
        %v825 = vld [vmem:[%s300 + $0xe10] sm:$0xff]
        %v826 = vld [vmem:[%s300 + $0xe18] sm:$0xff]
        %v827 = vld [vmem:[%s300 + $0xe20] sm:$0xff]
        %v828 = vld [vmem:[%s300 + $0xe28] sm:$0xff]
        %v829 = vld [vmem:[%s300 + $0xe30] sm:$0xff]
        %v830 = vld [vmem:[%s300 + $0xe38] sm:$0xff]
        %v831 = vld [vmem:[%s300 + $0xe40] sm:$0xff]
        %v832 = vld [vmem:[%s300 + $0xe48] sm:$0xff]
        %v833 = vld [vmem:[%s300 + $0xe50] sm:$0xff]
        %v834 = vld [vmem:[%s300 + $0xe58] sm:$0xff]
        %v835 = vld [vmem:[%s300 + $0xe60] sm:$0xff]
        %v836 = vld [vmem:[%s300 + $0xe68] sm:$0xff]
        %v837 = vld [vmem:[%s300 + $0xe70] sm:$0xff]
        %v838 = vld [vmem:[%s300 + $0xe78] sm:$0xff]
        %v839 = vld [vmem:[%s300 + $0xe80] sm:$0xff]
        %v840 = vld [vmem:[%s300 + $0xe88] sm:$0xff]
        %v841 = vld [vmem:[%s300 + $0xe90] sm:$0xff]
        %v842 = vld [vmem:[%s300 + $0xe98] sm:$0xff]
        %v843 = vld [vmem:[%s300 + $0xea0] sm:$0xff]
        %v844 = vld [vmem:[%s300 + $0xea8] sm:$0xff]
        %v845 = vld [vmem:[%s300 + $0xeb0] sm:$0xff]
        %v846 = vld [vmem:[%s300 + $0xeb8] sm:$0xff]
        %v847 = vld [vmem:[%s300 + $0xec0] sm:$0xff]
        %v848 = vld [vmem:[%s300 + $0xec8] sm:$0xff]
        %v849 = vld [vmem:[%s300 + $0xed0] sm:$0xff]
        %v850 = vld [vmem:[%s300 + $0xed8] sm:$0xff]
        %v851 = vld [vmem:[%s300 + $0xee0] sm:$0xff]
        %v852 = vld [vmem:[%s300 + $0xee8] sm:$0xff]
        %v853 = vld [vmem:[%s300 + $0xef0] sm:$0xff]
        %v854 = vld [vmem:[%s300 + $0xef8] sm:$0xff]
        %v855 = vld [vmem:[%s300 + $0xf00] sm:$0xff]
        %v856 = vld [vmem:[%s300 + $0xf08] sm:$0xff]
        %v857 = vld [vmem:[%s300 + $0xf10] sm:$0xff]
        %v858 = vld [vmem:[%s300 + $0xf18] sm:$0xff]
        %v859 = vld [vmem:[%s300 + $0xf20] sm:$0xff]
        %v860 = vld [vmem:[%s300 + $0xf28] sm:$0xff]
        %v861 = vld [vmem:[%s300 + $0xf30] sm:$0xff]
        %v862 = vld [vmem:[%s300 + $0xf38] sm:$0xff]
        %v863 = vld [vmem:[%s300 + $0xf40] sm:$0xff]
        %v864 = vld [vmem:[%s300 + $0xf48] sm:$0xff]
        %v865 = vld [vmem:[%s300 + $0xf50] sm:$0xff]
        %v866 = vld [vmem:[%s300 + $0xf58] sm:$0xff]
        %v867 = vld [vmem:[%s300 + $0xf60] sm:$0xff]
        %v868 = vld [vmem:[%s300 + $0xf68] sm:$0xff]
        %v869 = vld [vmem:[%s300 + $0xf70] sm:$0xff]
        %v870 = vld [vmem:[%s300 + $0xf78] sm:$0xff]
        %v871 = vld [vmem:[%s300 + $0xf80] sm:$0xff]
        %v872 = vld [vmem:[%s300 + $0xf88] sm:$0xff]
        %v873 = vld [vmem:[%s300 + $0xf90] sm:$0xff]
        %v874 = vld [vmem:[%s300 + $0xf98] sm:$0xff]
        %v875 = vld [vmem:[%s300 + $0xfa0] sm:$0xff]
        %v876 = vld [vmem:[%s300 + $0xfa8] sm:$0xff]
        %v877 = vld [vmem:[%s300 + $0xfb0] sm:$0xff]
        %v878 = vld [vmem:[%s300 + $0xfb8] sm:$0xff]
        %v879 = vld [vmem:[%s300 + $0xfc0] sm:$0xff]
        %v880 = vld [vmem:[%s300 + $0xfc8] sm:$0xff]
        %v881 = vld [vmem:[%s300 + $0xfd0] sm:$0xff]
        %v882 = vld [vmem:[%s300 + $0xfd8] sm:$0xff]
        %v883 = vld [vmem:[%s300 + $0xfe0] sm:$0xff]
        %v884 = vld [vmem:[%s300 + $0xfe8] sm:$0xff]
        %v885 = vld [vmem:[%s300 + $0xff0] sm:$0xff]
        %v886 = vld [vmem:[%s300 + $0xff8] sm:$0xff]
        %v891 = vunpack.c.l.b16 %v371
        %v892 = vunpack.c.h.b16 %v371
        %v893 = vunpack.c.l.b16 %v372
        %v894 = vunpack.c.h.b16 %v372
        %v895 = vunpack.c.l.b16 %v373
        %v896 = vunpack.c.h.b16 %v373
        %v897 = vunpack.c.l.b16 %v374
        %v898 = vunpack.c.h.b16 %v374
        %v899 = vpack.c.b16 %v891, %v891
        %v900 = vpack.c.b16 %v892, %v892
        %v901 = vpack.c.b16 %v893, %v893
        %v902 = vpack.c.b16 %v894, %v894
        %v903 = vpack.c.b16 %v895, %v895
        %v904 = vpack.c.b16 %v896, %v896
        %v905 = vpack.c.b16 %v897, %v897
        %v906 = vpack.c.b16 %v898, %v898
        %v1427 = vunpack.c.l.b16 %v375
        %v1428 = vunpack.c.h.b16 %v375
        %v1429 = vunpack.c.l.b16 %v376
        %v1430 = vunpack.c.h.b16 %v376
        %v1431 = vunpack.c.l.b16 %v377
        %v1432 = vunpack.c.h.b16 %v377
        %v1433 = vunpack.c.l.b16 %v378
        %v1434 = vunpack.c.h.b16 %v378
        %v1435 = vunpack.c.l.b16 %v379
        %v1436 = vunpack.c.h.b16 %v379
        %v1437 = vunpack.c.l.b16 %v380
        %v1438 = vunpack.c.h.b16 %v380
        %v1439 = vunpack.c.l.b16 %v381
        %v1440 = vunpack.c.h.b16 %v381
        %v1441 = vunpack.c.l.b16 %v382
        %v1442 = vunpack.c.h.b16 %v382
        %v1443 = vunpack.c.l.b16 %v383
        %v1444 = vunpack.c.h.b16 %v383
        %v1445 = vunpack.c.l.b16 %v384
        %v1446 = vunpack.c.h.b16 %v384
        %v1447 = vunpack.c.l.b16 %v385
        %v1448 = vunpack.c.h.b16 %v385
        %v1449 = vunpack.c.l.b16 %v386
        %v1450 = vunpack.c.h.b16 %v386
        %v1451 = vunpack.c.l.b16 %v387
        %v1452 = vunpack.c.h.b16 %v387
        %v1453 = vunpack.c.l.b16 %v388
        %v1454 = vunpack.c.h.b16 %v388
        %v1455 = vunpack.c.l.b16 %v389
        %v1456 = vunpack.c.h.b16 %v389
        %v1457 = vunpack.c.l.b16 %v390
        %v1458 = vunpack.c.h.b16 %v390
        %v1459 = vunpack.c.l.b16 %v391
        %v1460 = vunpack.c.h.b16 %v391
        %v1461 = vunpack.c.l.b16 %v392
        %v1462 = vunpack.c.h.b16 %v392
        %v1463 = vunpack.c.l.b16 %v393
        %v1464 = vunpack.c.h.b16 %v393
        %v1465 = vunpack.c.l.b16 %v394
        %v1466 = vunpack.c.h.b16 %v394
        %v1467 = vunpack.c.l.b16 %v395
        %v1468 = vunpack.c.h.b16 %v395
        %v1469 = vunpack.c.l.b16 %v396
        %v1470 = vunpack.c.h.b16 %v396
        %v1471 = vunpack.c.l.b16 %v397
        %v1472 = vunpack.c.h.b16 %v397
        %v1473 = vunpack.c.l.b16 %v398
        %v1474 = vunpack.c.h.b16 %v398
        %v1475 = vunpack.c.l.b16 %v399
        %v1476 = vunpack.c.h.b16 %v399
        %v1477 = vunpack.c.l.b16 %v400
        %v1478 = vunpack.c.h.b16 %v400
        %v1479 = vunpack.c.l.b16 %v401
        %v1480 = vunpack.c.h.b16 %v401
        %v1481 = vunpack.c.l.b16 %v402
        %v1482 = vunpack.c.h.b16 %v402
        %v1483 = vunpack.c.l.b16 %v403
        %v1484 = vunpack.c.h.b16 %v403
        %v1485 = vunpack.c.l.b16 %v404
        %v1486 = vunpack.c.h.b16 %v404
        %v1487 = vunpack.c.l.b16 %v405
        %v1488 = vunpack.c.h.b16 %v405
        %v1489 = vunpack.c.l.b16 %v406
        %v1490 = vunpack.c.h.b16 %v406
        %v1491 = vunpack.c.l.b16 %v407
        %v1492 = vunpack.c.h.b16 %v407
        %v1493 = vunpack.c.l.b16 %v408
        %v1494 = vunpack.c.h.b16 %v408
        %v1495 = vunpack.c.l.b16 %v409
        %v1496 = vunpack.c.h.b16 %v409
        %v1497 = vunpack.c.l.b16 %v410
        %v1498 = vunpack.c.h.b16 %v410
        %v1499 = vunpack.c.l.b16 %v411
        %v1500 = vunpack.c.h.b16 %v411
        %v1501 = vunpack.c.l.b16 %v412
        %v1502 = vunpack.c.h.b16 %v412
        %v1503 = vunpack.c.l.b16 %v413
        %v1504 = vunpack.c.h.b16 %v413
        %v1505 = vunpack.c.l.b16 %v414
        %v1506 = vunpack.c.h.b16 %v414
        %v1507 = vunpack.c.l.b16 %v415
        %v1508 = vunpack.c.h.b16 %v415
        %v1509 = vunpack.c.l.b16 %v416
        %v1510 = vunpack.c.h.b16 %v416
        %v1511 = vunpack.c.l.b16 %v417
        %v1512 = vunpack.c.h.b16 %v417
        %v1513 = vunpack.c.l.b16 %v418
        %v1514 = vunpack.c.h.b16 %v418
        %v1515 = vunpack.c.l.b16 %v419
        %v1516 = vunpack.c.h.b16 %v419
        %v1517 = vunpack.c.l.b16 %v420
        %v1518 = vunpack.c.h.b16 %v420
        %v1519 = vunpack.c.l.b16 %v421
        %v1520 = vunpack.c.h.b16 %v421
        %v1521 = vunpack.c.l.b16 %v422
        %v1522 = vunpack.c.h.b16 %v422
        %v1523 = vunpack.c.l.b16 %v423
        %v1524 = vunpack.c.h.b16 %v423
        %v1525 = vunpack.c.l.b16 %v424
        %v1526 = vunpack.c.h.b16 %v424
        %v1527 = vunpack.c.l.b16 %v425
        %v1528 = vunpack.c.h.b16 %v425
        %v1529 = vunpack.c.l.b16 %v426
        %v1530 = vunpack.c.h.b16 %v426
        %v1531 = vunpack.c.l.b16 %v427
        %v1532 = vunpack.c.h.b16 %v427
        %v1533 = vunpack.c.l.b16 %v428
        %v1534 = vunpack.c.h.b16 %v428
        %v1535 = vunpack.c.l.b16 %v429
        %v1536 = vunpack.c.h.b16 %v429
        %v1537 = vunpack.c.l.b16 %v430
        %v1538 = vunpack.c.h.b16 %v430
        %v1539 = vunpack.c.l.b16 %v431
        %v1540 = vunpack.c.h.b16 %v431
        %v1541 = vunpack.c.l.b16 %v432
        %v1542 = vunpack.c.h.b16 %v432
        %v1543 = vunpack.c.l.b16 %v433
        %v1544 = vunpack.c.h.b16 %v433
        %v1545 = vunpack.c.l.b16 %v434
        %v1546 = vunpack.c.h.b16 %v434
        %v1547 = vunpack.c.l.b16 %v435
        %v1548 = vunpack.c.h.b16 %v435
        %v1549 = vunpack.c.l.b16 %v436
        %v1550 = vunpack.c.h.b16 %v436
        %v1551 = vunpack.c.l.b16 %v437
        %v1552 = vunpack.c.h.b16 %v437
        %v1553 = vunpack.c.l.b16 %v438
        %v1554 = vunpack.c.h.b16 %v438
        %v1555 = vunpack.c.l.b16 %v439
        %v1556 = vunpack.c.h.b16 %v439
        %v1557 = vunpack.c.l.b16 %v440
        %v1558 = vunpack.c.h.b16 %v440
        %v1559 = vunpack.c.l.b16 %v441
        %v1560 = vunpack.c.h.b16 %v441
        %v1561 = vunpack.c.l.b16 %v442
        %v1562 = vunpack.c.h.b16 %v442
        %v1563 = vunpack.c.l.b16 %v443
        %v1564 = vunpack.c.h.b16 %v443
        %v1565 = vunpack.c.l.b16 %v444
        %v1566 = vunpack.c.h.b16 %v444
        %v1567 = vunpack.c.l.b16 %v445
        %v1568 = vunpack.c.h.b16 %v445
        %v1569 = vunpack.c.l.b16 %v446
        %v1570 = vunpack.c.h.b16 %v446
        %v1571 = vunpack.c.l.b16 %v447
        %v1572 = vunpack.c.h.b16 %v447
        %v1573 = vunpack.c.l.b16 %v448
        %v1574 = vunpack.c.h.b16 %v448
        %v1575 = vunpack.c.l.b16 %v449
        %v1576 = vunpack.c.h.b16 %v449
        %v1577 = vunpack.c.l.b16 %v450
        %v1578 = vunpack.c.h.b16 %v450
        %v1579 = vunpack.c.l.b16 %v451
        %v1580 = vunpack.c.h.b16 %v451
        %v1581 = vunpack.c.l.b16 %v452
        %v1582 = vunpack.c.h.b16 %v452
        %v1583 = vunpack.c.l.b16 %v453
        %v1584 = vunpack.c.h.b16 %v453
        %v1585 = vunpack.c.l.b16 %v454
        %v1586 = vunpack.c.h.b16 %v454
        %v1587 = vunpack.c.l.b16 %v455
        %v1588 = vunpack.c.h.b16 %v455
        %v1589 = vunpack.c.l.b16 %v456
        %v1590 = vunpack.c.h.b16 %v456
        %v1591 = vunpack.c.l.b16 %v457
        %v1592 = vunpack.c.h.b16 %v457
        %v1593 = vunpack.c.l.b16 %v458
        %v1594 = vunpack.c.h.b16 %v458
        %v1595 = vunpack.c.l.b16 %v459
        %v1596 = vunpack.c.h.b16 %v459
        %v1597 = vunpack.c.l.b16 %v460
        %v1598 = vunpack.c.h.b16 %v460
        %v1599 = vunpack.c.l.b16 %v461
        %v1600 = vunpack.c.h.b16 %v461
        %v1601 = vunpack.c.l.b16 %v462
        %v1602 = vunpack.c.h.b16 %v462
        %v1603 = vunpack.c.l.b16 %v463
        %v1604 = vunpack.c.h.b16 %v463
        %v1605 = vunpack.c.l.b16 %v464
        %v1606 = vunpack.c.h.b16 %v464
        %v1607 = vunpack.c.l.b16 %v465
        %v1608 = vunpack.c.h.b16 %v465
        %v1609 = vunpack.c.l.b16 %v466
        %v1610 = vunpack.c.h.b16 %v466
        %v1611 = vunpack.c.l.b16 %v467
        %v1612 = vunpack.c.h.b16 %v467
        %v1613 = vunpack.c.l.b16 %v468
        %v1614 = vunpack.c.h.b16 %v468
        %v1615 = vunpack.c.l.b16 %v469
        %v1616 = vunpack.c.h.b16 %v469
        %v1617 = vunpack.c.l.b16 %v470
        %v1618 = vunpack.c.h.b16 %v470
        %v1619 = vunpack.c.l.b16 %v471
        %v1620 = vunpack.c.h.b16 %v471
        %v1621 = vunpack.c.l.b16 %v472
        %v1622 = vunpack.c.h.b16 %v472
        %v1623 = vunpack.c.l.b16 %v473
        %v1624 = vunpack.c.h.b16 %v473
        %v1625 = vunpack.c.l.b16 %v474
        %v1626 = vunpack.c.h.b16 %v474
        %v1627 = vunpack.c.l.b16 %v475
        %v1628 = vunpack.c.h.b16 %v475
        %v1629 = vunpack.c.l.b16 %v476
        %v1630 = vunpack.c.h.b16 %v476
        %v1631 = vunpack.c.l.b16 %v477
        %v1632 = vunpack.c.h.b16 %v477
        %v1633 = vunpack.c.l.b16 %v478
        %v1634 = vunpack.c.h.b16 %v478
        %v1635 = vunpack.c.l.b16 %v479
        %v1636 = vunpack.c.h.b16 %v479
        %v1637 = vunpack.c.l.b16 %v480
        %v1638 = vunpack.c.h.b16 %v480
        %v1639 = vunpack.c.l.b16 %v481
        %v1640 = vunpack.c.h.b16 %v481
        %v1641 = vunpack.c.l.b16 %v482
        %v1642 = vunpack.c.h.b16 %v482
        %v1643 = vunpack.c.l.b16 %v483
        %v1644 = vunpack.c.h.b16 %v483
        %v1645 = vunpack.c.l.b16 %v484
        %v1646 = vunpack.c.h.b16 %v484
        %v1647 = vunpack.c.l.b16 %v485
        %v1648 = vunpack.c.h.b16 %v485
        %v1649 = vunpack.c.l.b16 %v486
        %v1650 = vunpack.c.h.b16 %v486
        %v1651 = vunpack.c.l.b16 %v487
        %v1652 = vunpack.c.h.b16 %v487
        %v1653 = vunpack.c.l.b16 %v488
        %v1654 = vunpack.c.h.b16 %v488
        %v1655 = vunpack.c.l.b16 %v489
        %v1656 = vunpack.c.h.b16 %v489
        %v1657 = vunpack.c.l.b16 %v490
        %v1658 = vunpack.c.h.b16 %v490
        %v1659 = vunpack.c.l.b16 %v491
        %v1660 = vunpack.c.h.b16 %v491
        %v1661 = vunpack.c.l.b16 %v492
        %v1662 = vunpack.c.h.b16 %v492
        %v1663 = vunpack.c.l.b16 %v493
        %v1664 = vunpack.c.h.b16 %v493
        %v1665 = vunpack.c.l.b16 %v494
        %v1666 = vunpack.c.h.b16 %v494
        %v1667 = vunpack.c.l.b16 %v495
        %v1668 = vunpack.c.h.b16 %v495
        %v1669 = vunpack.c.l.b16 %v496
        %v1670 = vunpack.c.h.b16 %v496
        %v1671 = vunpack.c.l.b16 %v497
        %v1672 = vunpack.c.h.b16 %v497
        %v1673 = vunpack.c.l.b16 %v498
        %v1674 = vunpack.c.h.b16 %v498
        %v1675 = vunpack.c.l.b16 %v499
        %v1676 = vunpack.c.h.b16 %v499
        %v1677 = vunpack.c.l.b16 %v500
        %v1678 = vunpack.c.h.b16 %v500
        %v1679 = vunpack.c.l.b16 %v501
        %v1680 = vunpack.c.h.b16 %v501
        %v1681 = vunpack.c.l.b16 %v502
        %v1682 = vunpack.c.h.b16 %v502
        %v1683 = vunpack.c.l.b16 %v503
        %v1684 = vunpack.c.h.b16 %v503
        %v1685 = vunpack.c.l.b16 %v504
        %v1686 = vunpack.c.h.b16 %v504
        %v1687 = vunpack.c.l.b16 %v505
        %v1688 = vunpack.c.h.b16 %v505
        %v1689 = vunpack.c.l.b16 %v506
        %v1690 = vunpack.c.h.b16 %v506
        %v1691 = vunpack.c.l.b16 %v507
        %v1692 = vunpack.c.h.b16 %v507
        %v1693 = vunpack.c.l.b16 %v508
        %v1694 = vunpack.c.h.b16 %v508
        %v1695 = vunpack.c.l.b16 %v509
        %v1696 = vunpack.c.h.b16 %v509
        %v1697 = vunpack.c.l.b16 %v510
        %v1698 = vunpack.c.h.b16 %v510
        %v1699 = vunpack.c.l.b16 %v511
        %v1700 = vunpack.c.h.b16 %v511
        %v1701 = vunpack.c.l.b16 %v512
        %v1702 = vunpack.c.h.b16 %v512
        %v1703 = vunpack.c.l.b16 %v513
        %v1704 = vunpack.c.h.b16 %v513
        %v1705 = vunpack.c.l.b16 %v514
        %v1706 = vunpack.c.h.b16 %v514
        %v1707 = vunpack.c.l.b16 %v515
        %v1708 = vunpack.c.h.b16 %v515
        %v1709 = vunpack.c.l.b16 %v516
        %v1710 = vunpack.c.h.b16 %v516
        %v1711 = vunpack.c.l.b16 %v517
        %v1712 = vunpack.c.h.b16 %v517
        %v1713 = vunpack.c.l.b16 %v518
        %v1714 = vunpack.c.h.b16 %v518
        %v1715 = vunpack.c.l.b16 %v519
        %v1716 = vunpack.c.h.b16 %v519
        %v1717 = vunpack.c.l.b16 %v520
        %v1718 = vunpack.c.h.b16 %v520
        %v1719 = vunpack.c.l.b16 %v521
        %v1720 = vunpack.c.h.b16 %v521
        %v1721 = vunpack.c.l.b16 %v522
        %v1722 = vunpack.c.h.b16 %v522
        %v1723 = vunpack.c.l.b16 %v523
        %v1724 = vunpack.c.h.b16 %v523
        %v1725 = vunpack.c.l.b16 %v524
        %v1726 = vunpack.c.h.b16 %v524
        %v1727 = vunpack.c.l.b16 %v525
        %v1728 = vunpack.c.h.b16 %v525
        %v1729 = vunpack.c.l.b16 %v526
        %v1730 = vunpack.c.h.b16 %v526
        %v1731 = vunpack.c.l.b16 %v527
        %v1732 = vunpack.c.h.b16 %v527
        %v1733 = vunpack.c.l.b16 %v528
        %v1734 = vunpack.c.h.b16 %v528
        %v1735 = vunpack.c.l.b16 %v529
        %v1736 = vunpack.c.h.b16 %v529
        %v1737 = vunpack.c.l.b16 %v530
        %v1738 = vunpack.c.h.b16 %v530
        %v1739 = vunpack.c.l.b16 %v531
        %v1740 = vunpack.c.h.b16 %v531
        %v1741 = vunpack.c.l.b16 %v532
        %v1742 = vunpack.c.h.b16 %v532
        %v1743 = vunpack.c.l.b16 %v533
        %v1744 = vunpack.c.h.b16 %v533
        %v1745 = vunpack.c.l.b16 %v534
        %v1746 = vunpack.c.h.b16 %v534
        %v1747 = vunpack.c.l.b16 %v535
        %v1748 = vunpack.c.h.b16 %v535
        %v1749 = vunpack.c.l.b16 %v536
        %v1750 = vunpack.c.h.b16 %v536
        %v1751 = vunpack.c.l.b16 %v537
        %v1752 = vunpack.c.h.b16 %v537
        %v1753 = vunpack.c.l.b16 %v538
        %v1754 = vunpack.c.h.b16 %v538
        %v1755 = vunpack.c.l.b16 %v539
        %v1756 = vunpack.c.h.b16 %v539
        %v1757 = vunpack.c.l.b16 %v540
        %v1758 = vunpack.c.h.b16 %v540
        %v1759 = vunpack.c.l.b16 %v541
        %v1760 = vunpack.c.h.b16 %v541
        %v1761 = vunpack.c.l.b16 %v542
        %v1762 = vunpack.c.h.b16 %v542
        %v1763 = vunpack.c.l.b16 %v543
        %v1764 = vunpack.c.h.b16 %v543
        %v1765 = vunpack.c.l.b16 %v544
        %v1766 = vunpack.c.h.b16 %v544
        %v1767 = vunpack.c.l.b16 %v545
        %v1768 = vunpack.c.h.b16 %v545
        %v1769 = vunpack.c.l.b16 %v546
        %v1770 = vunpack.c.h.b16 %v546
        %v1771 = vunpack.c.l.b16 %v547
        %v1772 = vunpack.c.h.b16 %v547
        %v1773 = vunpack.c.l.b16 %v548
        %v1774 = vunpack.c.h.b16 %v548
        %v1775 = vunpack.c.l.b16 %v549
        %v1776 = vunpack.c.h.b16 %v549
        %v1777 = vunpack.c.l.b16 %v550
        %v1778 = vunpack.c.h.b16 %v550
        %v1779 = vunpack.c.l.b16 %v551
        %v1780 = vunpack.c.h.b16 %v551
        %v1781 = vunpack.c.l.b16 %v552
        %v1782 = vunpack.c.h.b16 %v552
        %v1783 = vunpack.c.l.b16 %v553
        %v1784 = vunpack.c.h.b16 %v553
        %v1785 = vunpack.c.l.b16 %v554
        %v1786 = vunpack.c.h.b16 %v554
        %v1787 = vunpack.c.l.b16 %v555
        %v1788 = vunpack.c.h.b16 %v555
        %v1789 = vunpack.c.l.b16 %v556
        %v1790 = vunpack.c.h.b16 %v556
        %v1791 = vunpack.c.l.b16 %v557
        %v1792 = vunpack.c.h.b16 %v557
        %v1793 = vunpack.c.l.b16 %v558
        %v1794 = vunpack.c.h.b16 %v558
        %v1795 = vunpack.c.l.b16 %v559
        %v1796 = vunpack.c.h.b16 %v559
        %v1797 = vunpack.c.l.b16 %v560
        %v1798 = vunpack.c.h.b16 %v560
        %v1799 = vunpack.c.l.b16 %v561
        %v1800 = vunpack.c.h.b16 %v561
        %v1801 = vunpack.c.l.b16 %v562
        %v1802 = vunpack.c.h.b16 %v562
        %v1803 = vunpack.c.l.b16 %v563
        %v1804 = vunpack.c.h.b16 %v563
        %v1805 = vunpack.c.l.b16 %v564
        %v1806 = vunpack.c.h.b16 %v564
        %v1807 = vunpack.c.l.b16 %v565
        %v1808 = vunpack.c.h.b16 %v565
        %v1809 = vunpack.c.l.b16 %v566
        %v1810 = vunpack.c.h.b16 %v566
        %v1811 = vunpack.c.l.b16 %v567
        %v1812 = vunpack.c.h.b16 %v567
        %v1813 = vunpack.c.l.b16 %v568
        %v1814 = vunpack.c.h.b16 %v568
        %v1815 = vunpack.c.l.b16 %v569
        %v1816 = vunpack.c.h.b16 %v569
        %v1817 = vunpack.c.l.b16 %v570
        %v1818 = vunpack.c.h.b16 %v570
        %v1819 = vunpack.c.l.b16 %v571
        %v1820 = vunpack.c.h.b16 %v571
        %v1821 = vunpack.c.l.b16 %v572
        %v1822 = vunpack.c.h.b16 %v572
        %v1823 = vunpack.c.l.b16 %v573
        %v1824 = vunpack.c.h.b16 %v573
        %v1825 = vunpack.c.l.b16 %v574
        %v1826 = vunpack.c.h.b16 %v574
        %v1827 = vunpack.c.l.b16 %v575
        %v1828 = vunpack.c.h.b16 %v575
        %v1829 = vunpack.c.l.b16 %v576
        %v1830 = vunpack.c.h.b16 %v576
        %v1831 = vunpack.c.l.b16 %v577
        %v1832 = vunpack.c.h.b16 %v577
        %v1833 = vunpack.c.l.b16 %v578
        %v1834 = vunpack.c.h.b16 %v578
        %v1835 = vunpack.c.l.b16 %v579
        %v1836 = vunpack.c.h.b16 %v579
        %v1837 = vunpack.c.l.b16 %v580
        %v1838 = vunpack.c.h.b16 %v580
        %v1839 = vunpack.c.l.b16 %v581
        %v1840 = vunpack.c.h.b16 %v581
        %v1841 = vunpack.c.l.b16 %v582
        %v1842 = vunpack.c.h.b16 %v582
        %v1843 = vunpack.c.l.b16 %v583
        %v1844 = vunpack.c.h.b16 %v583
        %v1845 = vunpack.c.l.b16 %v584
        %v1846 = vunpack.c.h.b16 %v584
        %v1847 = vunpack.c.l.b16 %v585
        %v1848 = vunpack.c.h.b16 %v585
        %v1849 = vunpack.c.l.b16 %v586
        %v1850 = vunpack.c.h.b16 %v586
        %v1851 = vunpack.c.l.b16 %v587
        %v1852 = vunpack.c.h.b16 %v587
        %v1853 = vunpack.c.l.b16 %v588
        %v1854 = vunpack.c.h.b16 %v588
        %v1855 = vunpack.c.l.b16 %v589
        %v1856 = vunpack.c.h.b16 %v589
        %v1857 = vunpack.c.l.b16 %v590
        %v1858 = vunpack.c.h.b16 %v590
        %v1859 = vunpack.c.l.b16 %v591
        %v1860 = vunpack.c.h.b16 %v591
        %v1861 = vunpack.c.l.b16 %v592
        %v1862 = vunpack.c.h.b16 %v592
        %v1863 = vunpack.c.l.b16 %v593
        %v1864 = vunpack.c.h.b16 %v593
        %v1865 = vunpack.c.l.b16 %v594
        %v1866 = vunpack.c.h.b16 %v594
        %v1867 = vunpack.c.l.b16 %v595
        %v1868 = vunpack.c.h.b16 %v595
        %v1869 = vunpack.c.l.b16 %v596
        %v1870 = vunpack.c.h.b16 %v596
        %v1871 = vunpack.c.l.b16 %v597
        %v1872 = vunpack.c.h.b16 %v597
        %v1873 = vunpack.c.l.b16 %v598
        %v1874 = vunpack.c.h.b16 %v598
        %v1875 = vunpack.c.l.b16 %v599
        %v1876 = vunpack.c.h.b16 %v599
        %v1877 = vunpack.c.l.b16 %v600
        %v1878 = vunpack.c.h.b16 %v600
        %v1879 = vunpack.c.l.b16 %v601
        %v1880 = vunpack.c.h.b16 %v601
        %v1881 = vunpack.c.l.b16 %v602
        %v1882 = vunpack.c.h.b16 %v602
        %v1883 = vunpack.c.l.b16 %v603
        %v1884 = vunpack.c.h.b16 %v603
        %v1885 = vunpack.c.l.b16 %v604
        %v1886 = vunpack.c.h.b16 %v604
        %v1887 = vunpack.c.l.b16 %v605
        %v1888 = vunpack.c.h.b16 %v605
        %v1889 = vunpack.c.l.b16 %v606
        %v1890 = vunpack.c.h.b16 %v606
        %v1891 = vunpack.c.l.b16 %v607
        %v1892 = vunpack.c.h.b16 %v607
        %v1893 = vunpack.c.l.b16 %v608
        %v1894 = vunpack.c.h.b16 %v608
        %v1895 = vunpack.c.l.b16 %v609
        %v1896 = vunpack.c.h.b16 %v609
        %v1897 = vunpack.c.l.b16 %v610
        %v1898 = vunpack.c.h.b16 %v610
        %v1899 = vunpack.c.l.b16 %v611
        %v1900 = vunpack.c.h.b16 %v611
        %v1901 = vunpack.c.l.b16 %v612
        %v1902 = vunpack.c.h.b16 %v612
        %v1903 = vunpack.c.l.b16 %v613
        %v1904 = vunpack.c.h.b16 %v613
        %v1905 = vunpack.c.l.b16 %v614
        %v1906 = vunpack.c.h.b16 %v614
        %v1907 = vunpack.c.l.b16 %v615
        %v1908 = vunpack.c.h.b16 %v615
        %v1909 = vunpack.c.l.b16 %v616
        %v1910 = vunpack.c.h.b16 %v616
        %v1911 = vunpack.c.l.b16 %v617
        %v1912 = vunpack.c.h.b16 %v617
        %v1913 = vunpack.c.l.b16 %v618
        %v1914 = vunpack.c.h.b16 %v618
        %v1915 = vunpack.c.l.b16 %v619
        %v1916 = vunpack.c.h.b16 %v619
        %v1917 = vunpack.c.l.b16 %v620
        %v1918 = vunpack.c.h.b16 %v620
        %v1919 = vunpack.c.l.b16 %v621
        %v1920 = vunpack.c.h.b16 %v621
        %v1921 = vunpack.c.l.b16 %v622
        %v1922 = vunpack.c.h.b16 %v622
        %v1923 = vunpack.c.l.b16 %v623
        %v1924 = vunpack.c.h.b16 %v623
        %v1925 = vunpack.c.l.b16 %v624
        %v1926 = vunpack.c.h.b16 %v624
        %v1927 = vunpack.c.l.b16 %v625
        %v1928 = vunpack.c.h.b16 %v625
        %v1929 = vunpack.c.l.b16 %v626
        %v1930 = vunpack.c.h.b16 %v626
        %v1931 = vunpack.c.l.b16 %v627
        %v1932 = vunpack.c.h.b16 %v627
        %v1933 = vunpack.c.l.b16 %v628
        %v1934 = vunpack.c.h.b16 %v628
        %v1935 = vunpack.c.l.b16 %v629
        %v1936 = vunpack.c.h.b16 %v629
        %v1937 = vunpack.c.l.b16 %v630
        %v1938 = vunpack.c.h.b16 %v630
        %v1939 = vunpack.c.l.b16 %v631
        %v1940 = vunpack.c.h.b16 %v631
        %v1941 = vunpack.c.l.b16 %v632
        %v1942 = vunpack.c.h.b16 %v632
        %v1943 = vunpack.c.l.b16 %v633
        %v1944 = vunpack.c.h.b16 %v633
        %v1945 = vunpack.c.l.b16 %v634
        %v1946 = vunpack.c.h.b16 %v634
        %v1947 = vunpack.c.l.b16 %v635
        %v1948 = vunpack.c.h.b16 %v635
        %v1949 = vunpack.c.l.b16 %v636
        %v1950 = vunpack.c.h.b16 %v636
        %v1951 = vunpack.c.l.b16 %v637
        %v1952 = vunpack.c.h.b16 %v637
        %v1953 = vunpack.c.l.b16 %v638
        %v1954 = vunpack.c.h.b16 %v638
        %v1955 = vunpack.c.l.b16 %v639
        %v1956 = vunpack.c.h.b16 %v639
        %v1957 = vunpack.c.l.b16 %v640
        %v1958 = vunpack.c.h.b16 %v640
        %v1959 = vunpack.c.l.b16 %v641
        %v1960 = vunpack.c.h.b16 %v641
        %v1961 = vunpack.c.l.b16 %v642
        %v1962 = vunpack.c.h.b16 %v642
        %v1963 = vunpack.c.l.b16 %v643
        %v1964 = vunpack.c.h.b16 %v643
        %v1965 = vunpack.c.l.b16 %v644
        %v1966 = vunpack.c.h.b16 %v644
        %v1967 = vunpack.c.l.b16 %v645
        %v1968 = vunpack.c.h.b16 %v645
        %v1969 = vunpack.c.l.b16 %v646
        %v1970 = vunpack.c.h.b16 %v646
        %v1971 = vunpack.c.l.b16 %v647
        %v1972 = vunpack.c.h.b16 %v647
        %v1973 = vunpack.c.l.b16 %v648
        %v1974 = vunpack.c.h.b16 %v648
        %v1975 = vunpack.c.l.b16 %v649
        %v1976 = vunpack.c.h.b16 %v649
        %v1977 = vunpack.c.l.b16 %v650
        %v1978 = vunpack.c.h.b16 %v650
        %v1979 = vunpack.c.l.b16 %v651
        %v1980 = vunpack.c.h.b16 %v651
        %v1981 = vunpack.c.l.b16 %v652
        %v1982 = vunpack.c.h.b16 %v652
        %v1983 = vunpack.c.l.b16 %v653
        %v1984 = vunpack.c.h.b16 %v653
        %v1985 = vunpack.c.l.b16 %v654
        %v1986 = vunpack.c.h.b16 %v654
        %v1987 = vunpack.c.l.b16 %v655
        %v1988 = vunpack.c.h.b16 %v655
        %v1989 = vunpack.c.l.b16 %v656
        %v1990 = vunpack.c.h.b16 %v656
        %v1991 = vunpack.c.l.b16 %v657
        %v1992 = vunpack.c.h.b16 %v657
        %v1993 = vunpack.c.l.b16 %v658
        %v1994 = vunpack.c.h.b16 %v658
        %v1995 = vunpack.c.l.b16 %v659
        %v1996 = vunpack.c.h.b16 %v659
        %v1997 = vunpack.c.l.b16 %v660
        %v1998 = vunpack.c.h.b16 %v660
        %v1999 = vunpack.c.l.b16 %v661
        %v2000 = vunpack.c.h.b16 %v661
        %v2001 = vunpack.c.l.b16 %v662
        %v2002 = vunpack.c.h.b16 %v662
        %v2003 = vunpack.c.l.b16 %v663
        %v2004 = vunpack.c.h.b16 %v663
        %v2005 = vunpack.c.l.b16 %v664
        %v2006 = vunpack.c.h.b16 %v664
        %v2007 = vunpack.c.l.b16 %v665
        %v2008 = vunpack.c.h.b16 %v665
        %v2009 = vunpack.c.l.b16 %v666
        %v2010 = vunpack.c.h.b16 %v666
        %v2011 = vunpack.c.l.b16 %v667
        %v2012 = vunpack.c.h.b16 %v667
        %v2013 = vunpack.c.l.b16 %v668
        %v2014 = vunpack.c.h.b16 %v668
        %v2015 = vunpack.c.l.b16 %v669
        %v2016 = vunpack.c.h.b16 %v669
        %v2017 = vunpack.c.l.b16 %v670
        %v2018 = vunpack.c.h.b16 %v670
        %v2019 = vunpack.c.l.b16 %v671
        %v2020 = vunpack.c.h.b16 %v671
        %v2021 = vunpack.c.l.b16 %v672
        %v2022 = vunpack.c.h.b16 %v672
        %v2023 = vunpack.c.l.b16 %v673
        %v2024 = vunpack.c.h.b16 %v673
        %v2025 = vunpack.c.l.b16 %v674
        %v2026 = vunpack.c.h.b16 %v674
        %v2027 = vunpack.c.l.b16 %v675
        %v2028 = vunpack.c.h.b16 %v675
        %v2029 = vunpack.c.l.b16 %v676
        %v2030 = vunpack.c.h.b16 %v676
        %v2031 = vunpack.c.l.b16 %v677
        %v2032 = vunpack.c.h.b16 %v677
        %v2033 = vunpack.c.l.b16 %v678
        %v2034 = vunpack.c.h.b16 %v678
        %v2035 = vunpack.c.l.b16 %v679
        %v2036 = vunpack.c.h.b16 %v679
        %v2037 = vunpack.c.l.b16 %v680
        %v2038 = vunpack.c.h.b16 %v680
        %v2039 = vunpack.c.l.b16 %v681
        %v2040 = vunpack.c.h.b16 %v681
        %v2041 = vunpack.c.l.b16 %v682
        %v2042 = vunpack.c.h.b16 %v682
        %v2043 = vunpack.c.l.b16 %v683
        %v2044 = vunpack.c.h.b16 %v683
        %v2045 = vunpack.c.l.b16 %v684
        %v2046 = vunpack.c.h.b16 %v684
        %v2047 = vunpack.c.l.b16 %v685
        %v2048 = vunpack.c.h.b16 %v685
        %v2049 = vunpack.c.l.b16 %v686
        %v2050 = vunpack.c.h.b16 %v686
        %v2051 = vunpack.c.l.b16 %v687
        %v2052 = vunpack.c.h.b16 %v687
        %v2053 = vunpack.c.l.b16 %v688
        %v2054 = vunpack.c.h.b16 %v688
        %v2055 = vunpack.c.l.b16 %v689
        %v2056 = vunpack.c.h.b16 %v689
        %v2057 = vunpack.c.l.b16 %v690
        %v2058 = vunpack.c.h.b16 %v690
        %v2059 = vunpack.c.l.b16 %v691
        %v2060 = vunpack.c.h.b16 %v691
        %v2061 = vunpack.c.l.b16 %v692
        %v2062 = vunpack.c.h.b16 %v692
        %v2063 = vunpack.c.l.b16 %v693
        %v2064 = vunpack.c.h.b16 %v693
        %v2065 = vunpack.c.l.b16 %v694
        %v2066 = vunpack.c.h.b16 %v694
        %v2067 = vunpack.c.l.b16 %v695
        %v2068 = vunpack.c.h.b16 %v695
        %v2069 = vunpack.c.l.b16 %v696
        %v2070 = vunpack.c.h.b16 %v696
        %v2071 = vunpack.c.l.b16 %v697
        %v2072 = vunpack.c.h.b16 %v697
        %v2073 = vunpack.c.l.b16 %v698
        %v2074 = vunpack.c.h.b16 %v698
        %v2075 = vunpack.c.l.b16 %v699
        %v2076 = vunpack.c.h.b16 %v699
        %v2077 = vunpack.c.l.b16 %v700
        %v2078 = vunpack.c.h.b16 %v700
        %v2079 = vunpack.c.l.b16 %v701
        %v2080 = vunpack.c.h.b16 %v701
        %v2081 = vunpack.c.l.b16 %v702
        %v2082 = vunpack.c.h.b16 %v702
        %v2083 = vunpack.c.l.b16 %v703
        %v2084 = vunpack.c.h.b16 %v703
        %v2085 = vunpack.c.l.b16 %v704
        %v2086 = vunpack.c.h.b16 %v704
        %v2087 = vunpack.c.l.b16 %v705
        %v2088 = vunpack.c.h.b16 %v705
        %v2089 = vunpack.c.l.b16 %v706
        %v2090 = vunpack.c.h.b16 %v706
        %v2091 = vunpack.c.l.b16 %v707
        %v2092 = vunpack.c.h.b16 %v707
        %v2093 = vunpack.c.l.b16 %v708
        %v2094 = vunpack.c.h.b16 %v708
        %v2095 = vunpack.c.l.b16 %v709
        %v2096 = vunpack.c.h.b16 %v709
        %v2097 = vunpack.c.l.b16 %v710
        %v2098 = vunpack.c.h.b16 %v710
        %v2099 = vunpack.c.l.b16 %v711
        %v2100 = vunpack.c.h.b16 %v711
        %v2101 = vunpack.c.l.b16 %v712
        %v2102 = vunpack.c.h.b16 %v712
        %v2103 = vunpack.c.l.b16 %v713
        %v2104 = vunpack.c.h.b16 %v713
        %v2105 = vunpack.c.l.b16 %v714
        %v2106 = vunpack.c.h.b16 %v714
        %v2107 = vunpack.c.l.b16 %v715
        %v2108 = vunpack.c.h.b16 %v715
        %v2109 = vunpack.c.l.b16 %v716
        %v2110 = vunpack.c.h.b16 %v716
        %v2111 = vunpack.c.l.b16 %v717
        %v2112 = vunpack.c.h.b16 %v717
        %v2113 = vunpack.c.l.b16 %v718
        %v2114 = vunpack.c.h.b16 %v718
        %v2115 = vunpack.c.l.b16 %v719
        %v2116 = vunpack.c.h.b16 %v719
        %v2117 = vunpack.c.l.b16 %v720
        %v2118 = vunpack.c.h.b16 %v720
        %v2119 = vunpack.c.l.b16 %v721
        %v2120 = vunpack.c.h.b16 %v721
        %v2121 = vunpack.c.l.b16 %v722
        %v2122 = vunpack.c.h.b16 %v722
        %v2123 = vunpack.c.l.b16 %v723
        %v2124 = vunpack.c.h.b16 %v723
        %v2125 = vunpack.c.l.b16 %v724
        %v2126 = vunpack.c.h.b16 %v724
        %v2127 = vunpack.c.l.b16 %v725
        %v2128 = vunpack.c.h.b16 %v725
        %v2129 = vunpack.c.l.b16 %v726
        %v2130 = vunpack.c.h.b16 %v726
        %v2131 = vunpack.c.l.b16 %v727
        %v2132 = vunpack.c.h.b16 %v727
        %v2133 = vunpack.c.l.b16 %v728
        %v2134 = vunpack.c.h.b16 %v728
        %v2135 = vunpack.c.l.b16 %v729
        %v2136 = vunpack.c.h.b16 %v729
        %v2137 = vunpack.c.l.b16 %v730
        %v2138 = vunpack.c.h.b16 %v730
        %v2139 = vunpack.c.l.b16 %v731
        %v2140 = vunpack.c.h.b16 %v731
        %v2141 = vunpack.c.l.b16 %v732
        %v2142 = vunpack.c.h.b16 %v732
        %v2143 = vunpack.c.l.b16 %v733
        %v2144 = vunpack.c.h.b16 %v733
        %v2145 = vunpack.c.l.b16 %v734
        %v2146 = vunpack.c.h.b16 %v734
        %v2147 = vunpack.c.l.b16 %v735
        %v2148 = vunpack.c.h.b16 %v735
        %v2149 = vunpack.c.l.b16 %v736
        %v2150 = vunpack.c.h.b16 %v736
        %v2151 = vunpack.c.l.b16 %v737
        %v2152 = vunpack.c.h.b16 %v737
        %v2153 = vunpack.c.l.b16 %v738
        %v2154 = vunpack.c.h.b16 %v738
        %v2155 = vunpack.c.l.b16 %v739
        %v2156 = vunpack.c.h.b16 %v739
        %v2157 = vunpack.c.l.b16 %v740
        %v2158 = vunpack.c.h.b16 %v740
        %v2159 = vunpack.c.l.b16 %v741
        %v2160 = vunpack.c.h.b16 %v741
        %v2161 = vunpack.c.l.b16 %v742
        %v2162 = vunpack.c.h.b16 %v742
        %v2163 = vunpack.c.l.b16 %v743
        %v2164 = vunpack.c.h.b16 %v743
        %v2165 = vunpack.c.l.b16 %v744
        %v2166 = vunpack.c.h.b16 %v744
        %v2167 = vunpack.c.l.b16 %v745
        %v2168 = vunpack.c.h.b16 %v745
        %v2169 = vunpack.c.l.b16 %v746
        %v2170 = vunpack.c.h.b16 %v746
        %v2171 = vunpack.c.l.b16 %v747
        %v2172 = vunpack.c.h.b16 %v747
        %v2173 = vunpack.c.l.b16 %v748
        %v2174 = vunpack.c.h.b16 %v748
        %v2175 = vunpack.c.l.b16 %v749
        %v2176 = vunpack.c.h.b16 %v749
        %v2177 = vunpack.c.l.b16 %v750
        %v2178 = vunpack.c.h.b16 %v750
        %v2179 = vunpack.c.l.b16 %v751
        %v2180 = vunpack.c.h.b16 %v751
        %v2181 = vunpack.c.l.b16 %v752
        %v2182 = vunpack.c.h.b16 %v752
        %v2183 = vunpack.c.l.b16 %v753
        %v2184 = vunpack.c.h.b16 %v753
        %v2185 = vunpack.c.l.b16 %v754
        %v2186 = vunpack.c.h.b16 %v754
        %v2187 = vunpack.c.l.b16 %v755
        %v2188 = vunpack.c.h.b16 %v755
        %v2189 = vunpack.c.l.b16 %v756
        %v2190 = vunpack.c.h.b16 %v756
        %v2191 = vunpack.c.l.b16 %v757
        %v2192 = vunpack.c.h.b16 %v757
        %v2193 = vunpack.c.l.b16 %v758
        %v2194 = vunpack.c.h.b16 %v758
        %v2195 = vunpack.c.l.b16 %v759
        %v2196 = vunpack.c.h.b16 %v759
        %v2197 = vunpack.c.l.b16 %v760
        %v2198 = vunpack.c.h.b16 %v760
        %v2199 = vunpack.c.l.b16 %v761
        %v2200 = vunpack.c.h.b16 %v761
        %v2201 = vunpack.c.l.b16 %v762
        %v2202 = vunpack.c.h.b16 %v762
        %v2203 = vunpack.c.l.b16 %v763
        %v2204 = vunpack.c.h.b16 %v763
        %v2205 = vunpack.c.l.b16 %v764
        %v2206 = vunpack.c.h.b16 %v764
        %v2207 = vunpack.c.l.b16 %v765
        %v2208 = vunpack.c.h.b16 %v765
        %v2209 = vunpack.c.l.b16 %v766
        %v2210 = vunpack.c.h.b16 %v766
        %v2211 = vunpack.c.l.b16 %v767
        %v2212 = vunpack.c.h.b16 %v767
        %v2213 = vunpack.c.l.b16 %v768
        %v2214 = vunpack.c.h.b16 %v768
        %v2215 = vunpack.c.l.b16 %v769
        %v2216 = vunpack.c.h.b16 %v769
        %v2217 = vunpack.c.l.b16 %v770
        %v2218 = vunpack.c.h.b16 %v770
        %v2219 = vunpack.c.l.b16 %v771
        %v2220 = vunpack.c.h.b16 %v771
        %v2221 = vunpack.c.l.b16 %v772
        %v2222 = vunpack.c.h.b16 %v772
        %v2223 = vunpack.c.l.b16 %v773
        %v2224 = vunpack.c.h.b16 %v773
        %v2225 = vunpack.c.l.b16 %v774
        %v2226 = vunpack.c.h.b16 %v774
        %v2227 = vunpack.c.l.b16 %v775
        %v2228 = vunpack.c.h.b16 %v775
        %v2229 = vunpack.c.l.b16 %v776
        %v2230 = vunpack.c.h.b16 %v776
        %v2231 = vunpack.c.l.b16 %v777
        %v2232 = vunpack.c.h.b16 %v777
        %v2233 = vunpack.c.l.b16 %v778
        %v2234 = vunpack.c.h.b16 %v778
        %v2235 = vunpack.c.l.b16 %v779
        %v2236 = vunpack.c.h.b16 %v779
        %v2237 = vunpack.c.l.b16 %v780
        %v2238 = vunpack.c.h.b16 %v780
        %v2239 = vunpack.c.l.b16 %v781
        %v2240 = vunpack.c.h.b16 %v781
        %v2241 = vunpack.c.l.b16 %v782
        %v2242 = vunpack.c.h.b16 %v782
        %v2243 = vunpack.c.l.b16 %v783
        %v2244 = vunpack.c.h.b16 %v783
        %v2245 = vunpack.c.l.b16 %v784
        %v2246 = vunpack.c.h.b16 %v784
        %v2247 = vunpack.c.l.b16 %v785
        %v2248 = vunpack.c.h.b16 %v785
        %v2249 = vunpack.c.l.b16 %v786
        %v2250 = vunpack.c.h.b16 %v786
        %v2251 = vunpack.c.l.b16 %v787
        %v2252 = vunpack.c.h.b16 %v787
        %v2253 = vunpack.c.l.b16 %v788
        %v2254 = vunpack.c.h.b16 %v788
        %v2255 = vunpack.c.l.b16 %v789
        %v2256 = vunpack.c.h.b16 %v789
        %v2257 = vunpack.c.l.b16 %v790
        %v2258 = vunpack.c.h.b16 %v790
        %v2259 = vunpack.c.l.b16 %v791
        %v2260 = vunpack.c.h.b16 %v791
        %v2261 = vunpack.c.l.b16 %v792
        %v2262 = vunpack.c.h.b16 %v792
        %v2263 = vunpack.c.l.b16 %v793
        %v2264 = vunpack.c.h.b16 %v793
        %v2265 = vunpack.c.l.b16 %v794
        %v2266 = vunpack.c.h.b16 %v794
        %v2267 = vunpack.c.l.b16 %v795
        %v2268 = vunpack.c.h.b16 %v795
        %v2269 = vunpack.c.l.b16 %v796
        %v2270 = vunpack.c.h.b16 %v796
        %v2271 = vunpack.c.l.b16 %v797
        %v2272 = vunpack.c.h.b16 %v797
        %v2273 = vunpack.c.l.b16 %v798
        %v2274 = vunpack.c.h.b16 %v798
        %v2275 = vunpack.c.l.b16 %v799
        %v2276 = vunpack.c.h.b16 %v799
        %v2277 = vunpack.c.l.b16 %v800
        %v2278 = vunpack.c.h.b16 %v800
        %v2279 = vunpack.c.l.b16 %v801
        %v2280 = vunpack.c.h.b16 %v801
        %v2281 = vunpack.c.l.b16 %v802
        %v2282 = vunpack.c.h.b16 %v802
        %v2283 = vunpack.c.l.b16 %v803
        %v2284 = vunpack.c.h.b16 %v803
        %v2285 = vunpack.c.l.b16 %v804
        %v2286 = vunpack.c.h.b16 %v804
        %v2287 = vunpack.c.l.b16 %v805
        %v2288 = vunpack.c.h.b16 %v805
        %v2289 = vunpack.c.l.b16 %v806
        %v2290 = vunpack.c.h.b16 %v806
        %v2291 = vunpack.c.l.b16 %v807
        %v2292 = vunpack.c.h.b16 %v807
        %v2293 = vunpack.c.l.b16 %v808
        %v2294 = vunpack.c.h.b16 %v808
        %v2295 = vunpack.c.l.b16 %v809
        %v2296 = vunpack.c.h.b16 %v809
        %v2297 = vunpack.c.l.b16 %v810
        %v2298 = vunpack.c.h.b16 %v810
        %v2299 = vunpack.c.l.b16 %v811
        %v2300 = vunpack.c.h.b16 %v811
        %v2301 = vunpack.c.l.b16 %v812
        %v2302 = vunpack.c.h.b16 %v812
        %v2303 = vunpack.c.l.b16 %v813
        %v2304 = vunpack.c.h.b16 %v813
        %v2305 = vunpack.c.l.b16 %v814
        %v2306 = vunpack.c.h.b16 %v814
        %v2307 = vunpack.c.l.b16 %v815
        %v2308 = vunpack.c.h.b16 %v815
        %v2309 = vunpack.c.l.b16 %v816
        %v2310 = vunpack.c.h.b16 %v816
        %v2311 = vunpack.c.l.b16 %v817
        %v2312 = vunpack.c.h.b16 %v817
        %v2313 = vunpack.c.l.b16 %v818
        %v2314 = vunpack.c.h.b16 %v818
        %v2315 = vunpack.c.l.b16 %v819
        %v2316 = vunpack.c.h.b16 %v819
        %v2317 = vunpack.c.l.b16 %v820
        %v2318 = vunpack.c.h.b16 %v820
        %v2319 = vunpack.c.l.b16 %v821
        %v2320 = vunpack.c.h.b16 %v821
        %v2321 = vunpack.c.l.b16 %v822
        %v2322 = vunpack.c.h.b16 %v822
        %v2323 = vunpack.c.l.b16 %v823
        %v2324 = vunpack.c.h.b16 %v823
        %v2325 = vunpack.c.l.b16 %v824
        %v2326 = vunpack.c.h.b16 %v824
        %v2327 = vunpack.c.l.b16 %v825
        %v2328 = vunpack.c.h.b16 %v825
        %v2329 = vunpack.c.l.b16 %v826
        %v2330 = vunpack.c.h.b16 %v826
        %v2331 = vunpack.c.l.b16 %v827
        %v2332 = vunpack.c.h.b16 %v827
        %v2333 = vunpack.c.l.b16 %v828
        %v2334 = vunpack.c.h.b16 %v828
        %v2335 = vunpack.c.l.b16 %v829
        %v2336 = vunpack.c.h.b16 %v829
        %v2337 = vunpack.c.l.b16 %v830
        %v2338 = vunpack.c.h.b16 %v830
        %v2339 = vunpack.c.l.b16 %v831
        %v2340 = vunpack.c.h.b16 %v831
        %v2341 = vunpack.c.l.b16 %v832
        %v2342 = vunpack.c.h.b16 %v832
        %v2343 = vunpack.c.l.b16 %v833
        %v2344 = vunpack.c.h.b16 %v833
        %v2345 = vunpack.c.l.b16 %v834
        %v2346 = vunpack.c.h.b16 %v834
        %v2347 = vunpack.c.l.b16 %v835
        %v2348 = vunpack.c.h.b16 %v835
        %v2349 = vunpack.c.l.b16 %v836
        %v2350 = vunpack.c.h.b16 %v836
        %v2351 = vunpack.c.l.b16 %v837
        %v2352 = vunpack.c.h.b16 %v837
        %v2353 = vunpack.c.l.b16 %v838
        %v2354 = vunpack.c.h.b16 %v838
        %v2355 = vunpack.c.l.b16 %v839
        %v2356 = vunpack.c.h.b16 %v839
        %v2357 = vunpack.c.l.b16 %v840
        %v2358 = vunpack.c.h.b16 %v840
        %v2359 = vunpack.c.l.b16 %v841
        %v2360 = vunpack.c.h.b16 %v841
        %v2361 = vunpack.c.l.b16 %v842
        %v2362 = vunpack.c.h.b16 %v842
        %v2363 = vunpack.c.l.b16 %v843
        %v2364 = vunpack.c.h.b16 %v843
        %v2365 = vunpack.c.l.b16 %v844
        %v2366 = vunpack.c.h.b16 %v844
        %v2367 = vunpack.c.l.b16 %v845
        %v2368 = vunpack.c.h.b16 %v845
        %v2369 = vunpack.c.l.b16 %v846
        %v2370 = vunpack.c.h.b16 %v846
        %v2371 = vunpack.c.l.b16 %v847
        %v2372 = vunpack.c.h.b16 %v847
        %v2373 = vunpack.c.l.b16 %v848
        %v2374 = vunpack.c.h.b16 %v848
        %v2375 = vunpack.c.l.b16 %v849
        %v2376 = vunpack.c.h.b16 %v849
        %v2377 = vunpack.c.l.b16 %v850
        %v2378 = vunpack.c.h.b16 %v850
        %v2379 = vunpack.c.l.b16 %v851
        %v2380 = vunpack.c.h.b16 %v851
        %v2381 = vunpack.c.l.b16 %v852
        %v2382 = vunpack.c.h.b16 %v852
        %v2383 = vunpack.c.l.b16 %v853
        %v2384 = vunpack.c.h.b16 %v853
        %v2385 = vunpack.c.l.b16 %v854
        %v2386 = vunpack.c.h.b16 %v854
        %v2387 = vunpack.c.l.b16 %v855
        %v2388 = vunpack.c.h.b16 %v855
        %v2389 = vunpack.c.l.b16 %v856
        %v2390 = vunpack.c.h.b16 %v856
        %v2391 = vunpack.c.l.b16 %v857
        %v2392 = vunpack.c.h.b16 %v857
        %v2393 = vunpack.c.l.b16 %v858
        %v2394 = vunpack.c.h.b16 %v858
        %v2395 = vunpack.c.l.b16 %v859
        %v2396 = vunpack.c.h.b16 %v859
        %v2397 = vunpack.c.l.b16 %v860
        %v2398 = vunpack.c.h.b16 %v860
        %v2399 = vunpack.c.l.b16 %v861
        %v2400 = vunpack.c.h.b16 %v861
        %v2401 = vunpack.c.l.b16 %v862
        %v2402 = vunpack.c.h.b16 %v862
        %v2403 = vunpack.c.l.b16 %v863
        %v2404 = vunpack.c.h.b16 %v863
        %v2405 = vunpack.c.l.b16 %v864
        %v2406 = vunpack.c.h.b16 %v864
        %v2407 = vunpack.c.l.b16 %v865
        %v2408 = vunpack.c.h.b16 %v865
        %v2409 = vunpack.c.l.b16 %v866
        %v2410 = vunpack.c.h.b16 %v866
        %v2411 = vunpack.c.l.b16 %v867
        %v2412 = vunpack.c.h.b16 %v867
        %v2413 = vunpack.c.l.b16 %v868
        %v2414 = vunpack.c.h.b16 %v868
        %v2415 = vunpack.c.l.b16 %v869
        %v2416 = vunpack.c.h.b16 %v869
        %v2417 = vunpack.c.l.b16 %v870
        %v2418 = vunpack.c.h.b16 %v870
        %v2419 = vunpack.c.l.b16 %v871
        %v2420 = vunpack.c.h.b16 %v871
        %v2421 = vunpack.c.l.b16 %v872
        %v2422 = vunpack.c.h.b16 %v872
        %v2423 = vunpack.c.l.b16 %v873
        %v2424 = vunpack.c.h.b16 %v873
        %v2425 = vunpack.c.l.b16 %v874
        %v2426 = vunpack.c.h.b16 %v874
        %v2427 = vunpack.c.l.b16 %v875
        %v2428 = vunpack.c.h.b16 %v875
        %v2429 = vunpack.c.l.b16 %v876
        %v2430 = vunpack.c.h.b16 %v876
        %v2431 = vunpack.c.l.b16 %v877
        %v2432 = vunpack.c.h.b16 %v877
        %v2433 = vunpack.c.l.b16 %v878
        %v2434 = vunpack.c.h.b16 %v878
        %v2435 = vunpack.c.l.b16 %v879
        %v2436 = vunpack.c.h.b16 %v879
        %v2437 = vunpack.c.l.b16 %v880
        %v2438 = vunpack.c.h.b16 %v880
        %v2439 = vunpack.c.l.b16 %v881
        %v2440 = vunpack.c.h.b16 %v881
        %v2441 = vunpack.c.l.b16 %v882
        %v2442 = vunpack.c.h.b16 %v882
        %v2443 = vunpack.c.l.b16 %v883
        %v2444 = vunpack.c.h.b16 %v883
        %v2445 = vunpack.c.l.b16 %v884
        %v2446 = vunpack.c.h.b16 %v884
        %v2447 = vunpack.c.l.b16 %v885
        %v2448 = vunpack.c.h.b16 %v885
        %v2449 = vunpack.c.l.b16 %v886
        %v2450 = vunpack.c.h.b16 %v886
        %v2451 = vpack.c.b16 %v1435, %v1427
        %v2452 = vpack.c.b16 %v1436, %v1428
        %v2453 = vpack.c.b16 %v1437, %v1429
        %v2454 = vpack.c.b16 %v1438, %v1430
        %v2455 = vpack.c.b16 %v1439, %v1431
        %v2456 = vpack.c.b16 %v1440, %v1432
        %v2457 = vpack.c.b16 %v1441, %v1433
        %v2458 = vpack.c.b16 %v1442, %v1434
        %v2459 = vpack.c.b16 %v1451, %v1443
        %v2460 = vpack.c.b16 %v1452, %v1444
        %v2461 = vpack.c.b16 %v1453, %v1445
        %v2462 = vpack.c.b16 %v1454, %v1446
        %v2463 = vpack.c.b16 %v1455, %v1447
        %v2464 = vpack.c.b16 %v1456, %v1448
        %v2465 = vpack.c.b16 %v1457, %v1449
        %v2466 = vpack.c.b16 %v1458, %v1450
        %v2467 = vpack.c.b16 %v1467, %v1459
        %v2468 = vpack.c.b16 %v1468, %v1460
        %v2469 = vpack.c.b16 %v1469, %v1461
        %v2470 = vpack.c.b16 %v1470, %v1462
        %v2471 = vpack.c.b16 %v1471, %v1463
        %v2472 = vpack.c.b16 %v1472, %v1464
        %v2473 = vpack.c.b16 %v1473, %v1465
        %v2474 = vpack.c.b16 %v1474, %v1466
        %v2475 = vpack.c.b16 %v1483, %v1475
        %v2476 = vpack.c.b16 %v1484, %v1476
        %v2477 = vpack.c.b16 %v1485, %v1477
        %v2478 = vpack.c.b16 %v1486, %v1478
        %v2479 = vpack.c.b16 %v1487, %v1479
        %v2480 = vpack.c.b16 %v1488, %v1480
        %v2481 = vpack.c.b16 %v1489, %v1481
        %v2482 = vpack.c.b16 %v1490, %v1482
        %v2483 = vpack.c.b16 %v1499, %v1491
        %v2484 = vpack.c.b16 %v1500, %v1492
        %v2485 = vpack.c.b16 %v1501, %v1493
        %v2486 = vpack.c.b16 %v1502, %v1494
        %v2487 = vpack.c.b16 %v1503, %v1495
        %v2488 = vpack.c.b16 %v1504, %v1496
        %v2489 = vpack.c.b16 %v1505, %v1497
        %v2490 = vpack.c.b16 %v1506, %v1498
        %v2491 = vpack.c.b16 %v1515, %v1507
        %v2492 = vpack.c.b16 %v1516, %v1508
        %v2493 = vpack.c.b16 %v1517, %v1509
        %v2494 = vpack.c.b16 %v1518, %v1510
        %v2495 = vpack.c.b16 %v1519, %v1511
        %v2496 = vpack.c.b16 %v1520, %v1512
        %v2497 = vpack.c.b16 %v1521, %v1513
        %v2498 = vpack.c.b16 %v1522, %v1514
        %v2499 = vpack.c.b16 %v1531, %v1523
        %v2500 = vpack.c.b16 %v1532, %v1524
        %v2501 = vpack.c.b16 %v1533, %v1525
        %v2502 = vpack.c.b16 %v1534, %v1526
        %v2503 = vpack.c.b16 %v1535, %v1527
        %v2504 = vpack.c.b16 %v1536, %v1528
        %v2505 = vpack.c.b16 %v1537, %v1529
        %v2506 = vpack.c.b16 %v1538, %v1530
        %v2507 = vpack.c.b16 %v1547, %v1539
        %v2508 = vpack.c.b16 %v1548, %v1540
        %v2509 = vpack.c.b16 %v1549, %v1541
        %v2510 = vpack.c.b16 %v1550, %v1542
        %v2511 = vpack.c.b16 %v1551, %v1543
        %v2512 = vpack.c.b16 %v1552, %v1544
        %v2513 = vpack.c.b16 %v1553, %v1545
        %v2514 = vpack.c.b16 %v1554, %v1546
        %v2515 = vpack.c.b16 %v1563, %v1555
        %v2516 = vpack.c.b16 %v1564, %v1556
        %v2517 = vpack.c.b16 %v1565, %v1557
        %v2518 = vpack.c.b16 %v1566, %v1558
        %v2519 = vpack.c.b16 %v1567, %v1559
        %v2520 = vpack.c.b16 %v1568, %v1560
        %v2521 = vpack.c.b16 %v1569, %v1561
        %v2522 = vpack.c.b16 %v1570, %v1562
        %v2523 = vpack.c.b16 %v1579, %v1571
        %v2524 = vpack.c.b16 %v1580, %v1572
        %v2525 = vpack.c.b16 %v1581, %v1573
        %v2526 = vpack.c.b16 %v1582, %v1574
        %v2527 = vpack.c.b16 %v1583, %v1575
        %v2528 = vpack.c.b16 %v1584, %v1576
        %v2529 = vpack.c.b16 %v1585, %v1577
        %v2530 = vpack.c.b16 %v1586, %v1578
        %v2531 = vpack.c.b16 %v1595, %v1587
        %v2532 = vpack.c.b16 %v1596, %v1588
        %v2533 = vpack.c.b16 %v1597, %v1589
        %v2534 = vpack.c.b16 %v1598, %v1590
        %v2535 = vpack.c.b16 %v1599, %v1591
        %v2536 = vpack.c.b16 %v1600, %v1592
        %v2537 = vpack.c.b16 %v1601, %v1593
        %v2538 = vpack.c.b16 %v1602, %v1594
        %v2539 = vpack.c.b16 %v1611, %v1603
        %v2540 = vpack.c.b16 %v1612, %v1604
        %v2541 = vpack.c.b16 %v1613, %v1605
        %v2542 = vpack.c.b16 %v1614, %v1606
        %v2543 = vpack.c.b16 %v1615, %v1607
        %v2544 = vpack.c.b16 %v1616, %v1608
        %v2545 = vpack.c.b16 %v1617, %v1609
        %v2546 = vpack.c.b16 %v1618, %v1610
        %v2547 = vpack.c.b16 %v1627, %v1619
        %v2548 = vpack.c.b16 %v1628, %v1620
        %v2549 = vpack.c.b16 %v1629, %v1621
        %v2550 = vpack.c.b16 %v1630, %v1622
        %v2551 = vpack.c.b16 %v1631, %v1623
        %v2552 = vpack.c.b16 %v1632, %v1624
        %v2553 = vpack.c.b16 %v1633, %v1625
        %v2554 = vpack.c.b16 %v1634, %v1626
        %v2555 = vpack.c.b16 %v1643, %v1635
        %v2556 = vpack.c.b16 %v1644, %v1636
        %v2557 = vpack.c.b16 %v1645, %v1637
        %v2558 = vpack.c.b16 %v1646, %v1638
        %v2559 = vpack.c.b16 %v1647, %v1639
        %v2560 = vpack.c.b16 %v1648, %v1640
        %v2561 = vpack.c.b16 %v1649, %v1641
        %v2562 = vpack.c.b16 %v1650, %v1642
        %v2563 = vpack.c.b16 %v1659, %v1651
        %v2564 = vpack.c.b16 %v1660, %v1652
        %v2565 = vpack.c.b16 %v1661, %v1653
        %v2566 = vpack.c.b16 %v1662, %v1654
        %v2567 = vpack.c.b16 %v1663, %v1655
        %v2568 = vpack.c.b16 %v1664, %v1656
        %v2569 = vpack.c.b16 %v1665, %v1657
        %v2570 = vpack.c.b16 %v1666, %v1658
        %v2571 = vpack.c.b16 %v1675, %v1667
        %v2572 = vpack.c.b16 %v1676, %v1668
        %v2573 = vpack.c.b16 %v1677, %v1669
        %v2574 = vpack.c.b16 %v1678, %v1670
        %v2575 = vpack.c.b16 %v1679, %v1671
        %v2576 = vpack.c.b16 %v1680, %v1672
        %v2577 = vpack.c.b16 %v1681, %v1673
        %v2578 = vpack.c.b16 %v1682, %v1674
        %v2579 = vpack.c.b16 %v1691, %v1683
        %v2580 = vpack.c.b16 %v1692, %v1684
        %v2581 = vpack.c.b16 %v1693, %v1685
        %v2582 = vpack.c.b16 %v1694, %v1686
        %v2583 = vpack.c.b16 %v1695, %v1687
        %v2584 = vpack.c.b16 %v1696, %v1688
        %v2585 = vpack.c.b16 %v1697, %v1689
        %v2586 = vpack.c.b16 %v1698, %v1690
        %v2587 = vpack.c.b16 %v1707, %v1699
        %v2588 = vpack.c.b16 %v1708, %v1700
        %v2589 = vpack.c.b16 %v1709, %v1701
        %v2590 = vpack.c.b16 %v1710, %v1702
        %v2591 = vpack.c.b16 %v1711, %v1703
        %v2592 = vpack.c.b16 %v1712, %v1704
        %v2593 = vpack.c.b16 %v1713, %v1705
        %v2594 = vpack.c.b16 %v1714, %v1706
        %v2595 = vpack.c.b16 %v1723, %v1715
        %v2596 = vpack.c.b16 %v1724, %v1716
        %v2597 = vpack.c.b16 %v1725, %v1717
        %v2598 = vpack.c.b16 %v1726, %v1718
        %v2599 = vpack.c.b16 %v1727, %v1719
        %v2600 = vpack.c.b16 %v1728, %v1720
        %v2601 = vpack.c.b16 %v1729, %v1721
        %v2602 = vpack.c.b16 %v1730, %v1722
        %v2603 = vpack.c.b16 %v1739, %v1731
        %v2604 = vpack.c.b16 %v1740, %v1732
        %v2605 = vpack.c.b16 %v1741, %v1733
        %v2606 = vpack.c.b16 %v1742, %v1734
        %v2607 = vpack.c.b16 %v1743, %v1735
        %v2608 = vpack.c.b16 %v1744, %v1736
        %v2609 = vpack.c.b16 %v1745, %v1737
        %v2610 = vpack.c.b16 %v1746, %v1738
        %v2611 = vpack.c.b16 %v1755, %v1747
        %v2612 = vpack.c.b16 %v1756, %v1748
        %v2613 = vpack.c.b16 %v1757, %v1749
        %v2614 = vpack.c.b16 %v1758, %v1750
        %v2615 = vpack.c.b16 %v1759, %v1751
        %v2616 = vpack.c.b16 %v1760, %v1752
        %v2617 = vpack.c.b16 %v1761, %v1753
        %v2618 = vpack.c.b16 %v1762, %v1754
        %v2619 = vpack.c.b16 %v1771, %v1763
        %v2620 = vpack.c.b16 %v1772, %v1764
        %v2621 = vpack.c.b16 %v1773, %v1765
        %v2622 = vpack.c.b16 %v1774, %v1766
        %v2623 = vpack.c.b16 %v1775, %v1767
        %v2624 = vpack.c.b16 %v1776, %v1768
        %v2625 = vpack.c.b16 %v1777, %v1769
        %v2626 = vpack.c.b16 %v1778, %v1770
        %v2627 = vpack.c.b16 %v1787, %v1779
        %v2628 = vpack.c.b16 %v1788, %v1780
        %v2629 = vpack.c.b16 %v1789, %v1781
        %v2630 = vpack.c.b16 %v1790, %v1782
        %v2631 = vpack.c.b16 %v1791, %v1783
        %v2632 = vpack.c.b16 %v1792, %v1784
        %v2633 = vpack.c.b16 %v1793, %v1785
        %v2634 = vpack.c.b16 %v1794, %v1786
        %v2635 = vpack.c.b16 %v1803, %v1795
        %v2636 = vpack.c.b16 %v1804, %v1796
        %v2637 = vpack.c.b16 %v1805, %v1797
        %v2638 = vpack.c.b16 %v1806, %v1798
        %v2639 = vpack.c.b16 %v1807, %v1799
        %v2640 = vpack.c.b16 %v1808, %v1800
        %v2641 = vpack.c.b16 %v1809, %v1801
        %v2642 = vpack.c.b16 %v1810, %v1802
        %v2643 = vpack.c.b16 %v1819, %v1811
        %v2644 = vpack.c.b16 %v1820, %v1812
        %v2645 = vpack.c.b16 %v1821, %v1813
        %v2646 = vpack.c.b16 %v1822, %v1814
        %v2647 = vpack.c.b16 %v1823, %v1815
        %v2648 = vpack.c.b16 %v1824, %v1816
        %v2649 = vpack.c.b16 %v1825, %v1817
        %v2650 = vpack.c.b16 %v1826, %v1818
        %v2651 = vpack.c.b16 %v1835, %v1827
        %v2652 = vpack.c.b16 %v1836, %v1828
        %v2653 = vpack.c.b16 %v1837, %v1829
        %v2654 = vpack.c.b16 %v1838, %v1830
        %v2655 = vpack.c.b16 %v1839, %v1831
        %v2656 = vpack.c.b16 %v1840, %v1832
        %v2657 = vpack.c.b16 %v1841, %v1833
        %v2658 = vpack.c.b16 %v1842, %v1834
        %v2659 = vpack.c.b16 %v1851, %v1843
        %v2660 = vpack.c.b16 %v1852, %v1844
        %v2661 = vpack.c.b16 %v1853, %v1845
        %v2662 = vpack.c.b16 %v1854, %v1846
        %v2663 = vpack.c.b16 %v1855, %v1847
        %v2664 = vpack.c.b16 %v1856, %v1848
        %v2665 = vpack.c.b16 %v1857, %v1849
        %v2666 = vpack.c.b16 %v1858, %v1850
        %v2667 = vpack.c.b16 %v1867, %v1859
        %v2668 = vpack.c.b16 %v1868, %v1860
        %v2669 = vpack.c.b16 %v1869, %v1861
        %v2670 = vpack.c.b16 %v1870, %v1862
        %v2671 = vpack.c.b16 %v1871, %v1863
        %v2672 = vpack.c.b16 %v1872, %v1864
        %v2673 = vpack.c.b16 %v1873, %v1865
        %v2674 = vpack.c.b16 %v1874, %v1866
        %v2675 = vpack.c.b16 %v1883, %v1875
        %v2676 = vpack.c.b16 %v1884, %v1876
        %v2677 = vpack.c.b16 %v1885, %v1877
        %v2678 = vpack.c.b16 %v1886, %v1878
        %v2679 = vpack.c.b16 %v1887, %v1879
        %v2680 = vpack.c.b16 %v1888, %v1880
        %v2681 = vpack.c.b16 %v1889, %v1881
        %v2682 = vpack.c.b16 %v1890, %v1882
        %v2683 = vpack.c.b16 %v1899, %v1891
        %v2684 = vpack.c.b16 %v1900, %v1892
        %v2685 = vpack.c.b16 %v1901, %v1893
        %v2686 = vpack.c.b16 %v1902, %v1894
        %v2687 = vpack.c.b16 %v1903, %v1895
        %v2688 = vpack.c.b16 %v1904, %v1896
        %v2689 = vpack.c.b16 %v1905, %v1897
        %v2690 = vpack.c.b16 %v1906, %v1898
        %v2691 = vpack.c.b16 %v1915, %v1907
        %v2692 = vpack.c.b16 %v1916, %v1908
        %v2693 = vpack.c.b16 %v1917, %v1909
        %v2694 = vpack.c.b16 %v1918, %v1910
        %v2695 = vpack.c.b16 %v1919, %v1911
        %v2696 = vpack.c.b16 %v1920, %v1912
        %v2697 = vpack.c.b16 %v1921, %v1913
        %v2698 = vpack.c.b16 %v1922, %v1914
        %v2699 = vpack.c.b16 %v1931, %v1923
        %v2700 = vpack.c.b16 %v1932, %v1924
        %v2701 = vpack.c.b16 %v1933, %v1925
        %v2702 = vpack.c.b16 %v1934, %v1926
        %v2703 = vpack.c.b16 %v1935, %v1927
        %v2704 = vpack.c.b16 %v1936, %v1928
        %v2705 = vpack.c.b16 %v1937, %v1929
        %v2706 = vpack.c.b16 %v1938, %v1930
        %v2707 = vpack.c.b16 %v1947, %v1939
        %v2708 = vpack.c.b16 %v1948, %v1940
        %v2709 = vpack.c.b16 %v1949, %v1941
        %v2710 = vpack.c.b16 %v1950, %v1942
        %v2711 = vpack.c.b16 %v1951, %v1943
        %v2712 = vpack.c.b16 %v1952, %v1944
        %v2713 = vpack.c.b16 %v1953, %v1945
        %v2714 = vpack.c.b16 %v1954, %v1946
        %v2715 = vpack.c.b16 %v1963, %v1955
        %v2716 = vpack.c.b16 %v1964, %v1956
        %v2717 = vpack.c.b16 %v1965, %v1957
        %v2718 = vpack.c.b16 %v1966, %v1958
        %v2719 = vpack.c.b16 %v1967, %v1959
        %v2720 = vpack.c.b16 %v1968, %v1960
        %v2721 = vpack.c.b16 %v1969, %v1961
        %v2722 = vpack.c.b16 %v1970, %v1962
        %v2723 = vpack.c.b16 %v1979, %v1971
        %v2724 = vpack.c.b16 %v1980, %v1972
        %v2725 = vpack.c.b16 %v1981, %v1973
        %v2726 = vpack.c.b16 %v1982, %v1974
        %v2727 = vpack.c.b16 %v1983, %v1975
        %v2728 = vpack.c.b16 %v1984, %v1976
        %v2729 = vpack.c.b16 %v1985, %v1977
        %v2730 = vpack.c.b16 %v1986, %v1978
        %v2731 = vpack.c.b16 %v1995, %v1987
        %v2732 = vpack.c.b16 %v1996, %v1988
        %v2733 = vpack.c.b16 %v1997, %v1989
        %v2734 = vpack.c.b16 %v1998, %v1990
        %v2735 = vpack.c.b16 %v1999, %v1991
        %v2736 = vpack.c.b16 %v2000, %v1992
        %v2737 = vpack.c.b16 %v2001, %v1993
        %v2738 = vpack.c.b16 %v2002, %v1994
        %v2739 = vpack.c.b16 %v2011, %v2003
        %v2740 = vpack.c.b16 %v2012, %v2004
        %v2741 = vpack.c.b16 %v2013, %v2005
        %v2742 = vpack.c.b16 %v2014, %v2006
        %v2743 = vpack.c.b16 %v2015, %v2007
        %v2744 = vpack.c.b16 %v2016, %v2008
        %v2745 = vpack.c.b16 %v2017, %v2009
        %v2746 = vpack.c.b16 %v2018, %v2010
        %v2747 = vpack.c.b16 %v2027, %v2019
        %v2748 = vpack.c.b16 %v2028, %v2020
        %v2749 = vpack.c.b16 %v2029, %v2021
        %v2750 = vpack.c.b16 %v2030, %v2022
        %v2751 = vpack.c.b16 %v2031, %v2023
        %v2752 = vpack.c.b16 %v2032, %v2024
        %v2753 = vpack.c.b16 %v2033, %v2025
        %v2754 = vpack.c.b16 %v2034, %v2026
        %v2755 = vpack.c.b16 %v2043, %v2035
        %v2756 = vpack.c.b16 %v2044, %v2036
        %v2757 = vpack.c.b16 %v2045, %v2037
        %v2758 = vpack.c.b16 %v2046, %v2038
        %v2759 = vpack.c.b16 %v2047, %v2039
        %v2760 = vpack.c.b16 %v2048, %v2040
        %v2761 = vpack.c.b16 %v2049, %v2041
        %v2762 = vpack.c.b16 %v2050, %v2042
        %v2763 = vpack.c.b16 %v2059, %v2051
        %v2764 = vpack.c.b16 %v2060, %v2052
        %v2765 = vpack.c.b16 %v2061, %v2053
        %v2766 = vpack.c.b16 %v2062, %v2054
        %v2767 = vpack.c.b16 %v2063, %v2055
        %v2768 = vpack.c.b16 %v2064, %v2056
        %v2769 = vpack.c.b16 %v2065, %v2057
        %v2770 = vpack.c.b16 %v2066, %v2058
        %v2771 = vpack.c.b16 %v2075, %v2067
        %v2772 = vpack.c.b16 %v2076, %v2068
        %v2773 = vpack.c.b16 %v2077, %v2069
        %v2774 = vpack.c.b16 %v2078, %v2070
        %v2775 = vpack.c.b16 %v2079, %v2071
        %v2776 = vpack.c.b16 %v2080, %v2072
        %v2777 = vpack.c.b16 %v2081, %v2073
        %v2778 = vpack.c.b16 %v2082, %v2074
        %v2779 = vpack.c.b16 %v2091, %v2083
        %v2780 = vpack.c.b16 %v2092, %v2084
        %v2781 = vpack.c.b16 %v2093, %v2085
        %v2782 = vpack.c.b16 %v2094, %v2086
        %v2783 = vpack.c.b16 %v2095, %v2087
        %v2784 = vpack.c.b16 %v2096, %v2088
        %v2785 = vpack.c.b16 %v2097, %v2089
        %v2786 = vpack.c.b16 %v2098, %v2090
        %v2787 = vpack.c.b16 %v2107, %v2099
        %v2788 = vpack.c.b16 %v2108, %v2100
        %v2789 = vpack.c.b16 %v2109, %v2101
        %v2790 = vpack.c.b16 %v2110, %v2102
        %v2791 = vpack.c.b16 %v2111, %v2103
        %v2792 = vpack.c.b16 %v2112, %v2104
        %v2793 = vpack.c.b16 %v2113, %v2105
        %v2794 = vpack.c.b16 %v2114, %v2106
        %v2795 = vpack.c.b16 %v2123, %v2115
        %v2796 = vpack.c.b16 %v2124, %v2116
        %v2797 = vpack.c.b16 %v2125, %v2117
        %v2798 = vpack.c.b16 %v2126, %v2118
        %v2799 = vpack.c.b16 %v2127, %v2119
        %v2800 = vpack.c.b16 %v2128, %v2120
        %v2801 = vpack.c.b16 %v2129, %v2121
        %v2802 = vpack.c.b16 %v2130, %v2122
        %v2803 = vpack.c.b16 %v2139, %v2131
        %v2804 = vpack.c.b16 %v2140, %v2132
        %v2805 = vpack.c.b16 %v2141, %v2133
        %v2806 = vpack.c.b16 %v2142, %v2134
        %v2807 = vpack.c.b16 %v2143, %v2135
        %v2808 = vpack.c.b16 %v2144, %v2136
        %v2809 = vpack.c.b16 %v2145, %v2137
        %v2810 = vpack.c.b16 %v2146, %v2138
        %v2811 = vpack.c.b16 %v2155, %v2147
        %v2812 = vpack.c.b16 %v2156, %v2148
        %v2813 = vpack.c.b16 %v2157, %v2149
        %v2814 = vpack.c.b16 %v2158, %v2150
        %v2815 = vpack.c.b16 %v2159, %v2151
        %v2816 = vpack.c.b16 %v2160, %v2152
        %v2817 = vpack.c.b16 %v2161, %v2153
        %v2818 = vpack.c.b16 %v2162, %v2154
        %v2819 = vpack.c.b16 %v2171, %v2163
        %v2820 = vpack.c.b16 %v2172, %v2164
        %v2821 = vpack.c.b16 %v2173, %v2165
        %v2822 = vpack.c.b16 %v2174, %v2166
        %v2823 = vpack.c.b16 %v2175, %v2167
        %v2824 = vpack.c.b16 %v2176, %v2168
        %v2825 = vpack.c.b16 %v2177, %v2169
        %v2826 = vpack.c.b16 %v2178, %v2170
        %v2827 = vpack.c.b16 %v2187, %v2179
        %v2828 = vpack.c.b16 %v2188, %v2180
        %v2829 = vpack.c.b16 %v2189, %v2181
        %v2830 = vpack.c.b16 %v2190, %v2182
        %v2831 = vpack.c.b16 %v2191, %v2183
        %v2832 = vpack.c.b16 %v2192, %v2184
        %v2833 = vpack.c.b16 %v2193, %v2185
        %v2834 = vpack.c.b16 %v2194, %v2186
        %v2835 = vpack.c.b16 %v2203, %v2195
        %v2836 = vpack.c.b16 %v2204, %v2196
        %v2837 = vpack.c.b16 %v2205, %v2197
        %v2838 = vpack.c.b16 %v2206, %v2198
        %v2839 = vpack.c.b16 %v2207, %v2199
        %v2840 = vpack.c.b16 %v2208, %v2200
        %v2841 = vpack.c.b16 %v2209, %v2201
        %v2842 = vpack.c.b16 %v2210, %v2202
        %v2843 = vpack.c.b16 %v2219, %v2211
        %v2844 = vpack.c.b16 %v2220, %v2212
        %v2845 = vpack.c.b16 %v2221, %v2213
        %v2846 = vpack.c.b16 %v2222, %v2214
        %v2847 = vpack.c.b16 %v2223, %v2215
        %v2848 = vpack.c.b16 %v2224, %v2216
        %v2849 = vpack.c.b16 %v2225, %v2217
        %v2850 = vpack.c.b16 %v2226, %v2218
        %v2851 = vpack.c.b16 %v2235, %v2227
        %v2852 = vpack.c.b16 %v2236, %v2228
        %v2853 = vpack.c.b16 %v2237, %v2229
        %v2854 = vpack.c.b16 %v2238, %v2230
        %v2855 = vpack.c.b16 %v2239, %v2231
        %v2856 = vpack.c.b16 %v2240, %v2232
        %v2857 = vpack.c.b16 %v2241, %v2233
        %v2858 = vpack.c.b16 %v2242, %v2234
        %v2859 = vpack.c.b16 %v2251, %v2243
        %v2860 = vpack.c.b16 %v2252, %v2244
        %v2861 = vpack.c.b16 %v2253, %v2245
        %v2862 = vpack.c.b16 %v2254, %v2246
        %v2863 = vpack.c.b16 %v2255, %v2247
        %v2864 = vpack.c.b16 %v2256, %v2248
        %v2865 = vpack.c.b16 %v2257, %v2249
        %v2866 = vpack.c.b16 %v2258, %v2250
        %v2867 = vpack.c.b16 %v2267, %v2259
        %v2868 = vpack.c.b16 %v2268, %v2260
        %v2869 = vpack.c.b16 %v2269, %v2261
        %v2870 = vpack.c.b16 %v2270, %v2262
        %v2871 = vpack.c.b16 %v2271, %v2263
        %v2872 = vpack.c.b16 %v2272, %v2264
        %v2873 = vpack.c.b16 %v2273, %v2265
        %v2874 = vpack.c.b16 %v2274, %v2266
        %v2875 = vpack.c.b16 %v2283, %v2275
        %v2876 = vpack.c.b16 %v2284, %v2276
        %v2877 = vpack.c.b16 %v2285, %v2277
        %v2878 = vpack.c.b16 %v2286, %v2278
        %v2879 = vpack.c.b16 %v2287, %v2279
        %v2880 = vpack.c.b16 %v2288, %v2280
        %v2881 = vpack.c.b16 %v2289, %v2281
        %v2882 = vpack.c.b16 %v2290, %v2282
        %v2883 = vpack.c.b16 %v2299, %v2291
        %v2884 = vpack.c.b16 %v2300, %v2292
        %v2885 = vpack.c.b16 %v2301, %v2293
        %v2886 = vpack.c.b16 %v2302, %v2294
        %v2887 = vpack.c.b16 %v2303, %v2295
        %v2888 = vpack.c.b16 %v2304, %v2296
        %v2889 = vpack.c.b16 %v2305, %v2297
        %v2890 = vpack.c.b16 %v2306, %v2298
        %v2891 = vpack.c.b16 %v2315, %v2307
        %v2892 = vpack.c.b16 %v2316, %v2308
        %v2893 = vpack.c.b16 %v2317, %v2309
        %v2894 = vpack.c.b16 %v2318, %v2310
        %v2895 = vpack.c.b16 %v2319, %v2311
        %v2896 = vpack.c.b16 %v2320, %v2312
        %v2897 = vpack.c.b16 %v2321, %v2313
        %v2898 = vpack.c.b16 %v2322, %v2314
        %v2899 = vpack.c.b16 %v2331, %v2323
        %v2900 = vpack.c.b16 %v2332, %v2324
        %v2901 = vpack.c.b16 %v2333, %v2325
        %v2902 = vpack.c.b16 %v2334, %v2326
        %v2903 = vpack.c.b16 %v2335, %v2327
        %v2904 = vpack.c.b16 %v2336, %v2328
        %v2905 = vpack.c.b16 %v2337, %v2329
        %v2906 = vpack.c.b16 %v2338, %v2330
        %v2907 = vpack.c.b16 %v2347, %v2339
        %v2908 = vpack.c.b16 %v2348, %v2340
        %v2909 = vpack.c.b16 %v2349, %v2341
        %v2910 = vpack.c.b16 %v2350, %v2342
        %v2911 = vpack.c.b16 %v2351, %v2343
        %v2912 = vpack.c.b16 %v2352, %v2344
        %v2913 = vpack.c.b16 %v2353, %v2345
        %v2914 = vpack.c.b16 %v2354, %v2346
        %v2915 = vpack.c.b16 %v2363, %v2355
        %v2916 = vpack.c.b16 %v2364, %v2356
        %v2917 = vpack.c.b16 %v2365, %v2357
        %v2918 = vpack.c.b16 %v2366, %v2358
        %v2919 = vpack.c.b16 %v2367, %v2359
        %v2920 = vpack.c.b16 %v2368, %v2360
        %v2921 = vpack.c.b16 %v2369, %v2361
        %v2922 = vpack.c.b16 %v2370, %v2362
        %v2923 = vpack.c.b16 %v2379, %v2371
        %v2924 = vpack.c.b16 %v2380, %v2372
        %v2925 = vpack.c.b16 %v2381, %v2373
        %v2926 = vpack.c.b16 %v2382, %v2374
        %v2927 = vpack.c.b16 %v2383, %v2375
        %v2928 = vpack.c.b16 %v2384, %v2376
        %v2929 = vpack.c.b16 %v2385, %v2377
        %v2930 = vpack.c.b16 %v2386, %v2378
        %v2931 = vpack.c.b16 %v2395, %v2387
        %v2932 = vpack.c.b16 %v2396, %v2388
        %v2933 = vpack.c.b16 %v2397, %v2389
        %v2934 = vpack.c.b16 %v2398, %v2390
        %v2935 = vpack.c.b16 %v2399, %v2391
        %v2936 = vpack.c.b16 %v2400, %v2392
        %v2937 = vpack.c.b16 %v2401, %v2393
        %v2938 = vpack.c.b16 %v2402, %v2394
        %v2939 = vpack.c.b16 %v2411, %v2403
        %v2940 = vpack.c.b16 %v2412, %v2404
        %v2941 = vpack.c.b16 %v2413, %v2405
        %v2942 = vpack.c.b16 %v2414, %v2406
        %v2943 = vpack.c.b16 %v2415, %v2407
        %v2944 = vpack.c.b16 %v2416, %v2408
        %v2945 = vpack.c.b16 %v2417, %v2409
        %v2946 = vpack.c.b16 %v2418, %v2410
        %v2947 = vpack.c.b16 %v2427, %v2419
        %v2948 = vpack.c.b16 %v2428, %v2420
        %v2949 = vpack.c.b16 %v2429, %v2421
        %v2950 = vpack.c.b16 %v2430, %v2422
        %v2951 = vpack.c.b16 %v2431, %v2423
        %v2952 = vpack.c.b16 %v2432, %v2424
        %v2953 = vpack.c.b16 %v2433, %v2425
        %v2954 = vpack.c.b16 %v2434, %v2426
        %v2955 = vpack.c.b16 %v2443, %v2435
        %v2956 = vpack.c.b16 %v2444, %v2436
        %v2957 = vpack.c.b16 %v2445, %v2437
        %v2958 = vpack.c.b16 %v2446, %v2438
        %v2959 = vpack.c.b16 %v2447, %v2439
        %v2960 = vpack.c.b16 %v2448, %v2440
        %v2961 = vpack.c.b16 %v2449, %v2441
        %v2962 = vpack.c.b16 %v2450, %v2442
        %3475 = vmatprep.subr.bf16.mxu0 %v2452
        %3476 = vmatpush1.bf16.msra.mxu0 %v2451
        %3477 = vmatprep.subr.bf16.mxu0 %v2460
        %3478 = vmatpush1.bf16.msra.mxu0 %v2459
        %3479 = vmatprep.subr.bf16.mxu0 %v2468
        %3480 = vmatpush1.bf16.msra.mxu0 %v2467
        %3481 = vmatprep.subr.bf16.mxu0 %v2476
        %3482 = vmatpush1.bf16.msra.mxu0 %v2475
        %3483 = vmatprep.subr.bf16.mxu0 %v2484
        %3484 = vmatpush1.bf16.msra.mxu0 %v2483
        %3485 = vmatprep.subr.bf16.mxu0 %v2492
        %3486 = vmatpush1.bf16.msra.mxu0 %v2491
        %3487 = vmatprep.subr.bf16.mxu0 %v2500
        %3488 = vmatpush1.bf16.msra.mxu0 %v2499
        %3489 = vmatprep.subr.bf16.mxu0 %v2508
        %3490 = vmatpush1.bf16.msra.mxu0 %v2507
        %3491 = vmatprep.subr.bf16.mxu0 %v2516
        %3492 = vmatpush1.bf16.msra.mxu0 %v2515
        %3493 = vmatprep.subr.bf16.mxu0 %v2524
        %3494 = vmatpush1.bf16.msra.mxu0 %v2523
        %3495 = vmatprep.subr.bf16.mxu0 %v2532
        %3496 = vmatpush1.bf16.msra.mxu0 %v2531
        %3497 = vmatprep.subr.bf16.mxu0 %v2540
        %3498 = vmatpush1.bf16.msra.mxu0 %v2539
        %3499 = vmatprep.subr.bf16.mxu0 %v2548
        %3500 = vmatpush1.bf16.msra.mxu0 %v2547
        %3501 = vmatprep.subr.bf16.mxu0 %v2556
        %3502 = vmatpush1.bf16.msra.mxu0 %v2555
        %3503 = vmatprep.subr.bf16.mxu0 %v2564
        %3504 = vmatpush1.bf16.msra.mxu0 %v2563
        %3505 = vmatprep.subr.bf16.mxu0 %v2572
        %3506 = vmatpush1.bf16.msra.mxu0 %v2571
        %3507 = vmatprep.mubr.bf16.mxu0 %v900
        %3508 = vmatmul.mubr.bf16.gmra.mrb[0].mxu0 %v899
        %v3509 = vpop.f32.mrb[0].mxu0
        %v3510 = vadd.f32 0.0, %v3509
        %v3511 = vpop.f32.mrb[0].mxu0
        %v3512 = vadd.f32 0.0, %v3511
        %v3513 = vpop.f32.mrb[0].mxu0
        %v3514 = vpop.f32.mrb[0].mxu0
        %3515 = vdwg.mxu0
        %3516 = vmatprep.subr.bf16.mxu0 %v2580
        %3517 = vmatpush1.bf16.msra.mxu0 %v2579
        %3518 = vmatprep.subr.bf16.mxu0 %v2588
        %3519 = vmatpush1.bf16.msra.mxu0 %v2587
        %3520 = vmatprep.subr.bf16.mxu0 %v2596
        %3521 = vmatpush1.bf16.msra.mxu0 %v2595
        %3522 = vmatprep.subr.bf16.mxu0 %v2604
        %3523 = vmatpush1.bf16.msra.mxu0 %v2603
        %3524 = vmatprep.subr.bf16.mxu0 %v2612
        %3525 = vmatpush1.bf16.msra.mxu0 %v2611
        %3526 = vmatprep.subr.bf16.mxu0 %v2620
        %3527 = vmatpush1.bf16.msra.mxu0 %v2619
        %3528 = vmatprep.subr.bf16.mxu0 %v2628
        %3529 = vmatpush1.bf16.msra.mxu0 %v2627
        %3530 = vmatprep.subr.bf16.mxu0 %v2636
        %3531 = vmatpush1.bf16.msra.mxu0 %v2635
        %3532 = vmatprep.subr.bf16.mxu0 %v2644
        %3533 = vmatpush1.bf16.msra.mxu0 %v2643
        %3534 = vmatprep.subr.bf16.mxu0 %v2652
        %3535 = vmatpush1.bf16.msra.mxu0 %v2651
        %3536 = vmatprep.subr.bf16.mxu0 %v2660
        %3537 = vmatpush1.bf16.msra.mxu0 %v2659
        %3538 = vmatprep.subr.bf16.mxu0 %v2668
        %3539 = vmatpush1.bf16.msra.mxu0 %v2667
        %3540 = vmatprep.subr.bf16.mxu0 %v2676
        %3541 = vmatpush1.bf16.msra.mxu0 %v2675
        %3542 = vmatprep.subr.bf16.mxu0 %v2684
        %3543 = vmatpush1.bf16.msra.mxu0 %v2683
        %3544 = vmatprep.subr.bf16.mxu0 %v2692
        %3545 = vmatpush1.bf16.msra.mxu0 %v2691
        %3546 = vmatprep.subr.bf16.mxu0 %v2700
        %3547 = vmatpush1.bf16.msra.mxu0 %v2699
        %3548 = vmatprep.mubr.bf16.mxu0 %v902
        %3549 = vmatmul.mubr.bf16.gmra.mrb[0].mxu0 %v901
        %v3550 = vpop.f32.mrb[0].mxu0
        %v3551 = vadd.f32 %v3510, %v3550
        %v3552 = vpop.f32.mrb[0].mxu0
        %v3553 = vadd.f32 %v3512, %v3552
        %v3554 = vpop.f32.mrb[0].mxu0
        %v3555 = vpop.f32.mrb[0].mxu0
        %3556 = vdwg.mxu0
        %3557 = vmatprep.subr.bf16.mxu0 %v2708
        %3558 = vmatpush1.bf16.msra.mxu0 %v2707
        %3559 = vmatprep.subr.bf16.mxu0 %v2716
        %3560 = vmatpush1.bf16.msra.mxu0 %v2715
        %3561 = vmatprep.subr.bf16.mxu0 %v2724
        %3562 = vmatpush1.bf16.msra.mxu0 %v2723
        %3563 = vmatprep.subr.bf16.mxu0 %v2732
        %3564 = vmatpush1.bf16.msra.mxu0 %v2731
        %3565 = vmatprep.subr.bf16.mxu0 %v2740
        %3566 = vmatpush1.bf16.msra.mxu0 %v2739
        %3567 = vmatprep.subr.bf16.mxu0 %v2748
        %3568 = vmatpush1.bf16.msra.mxu0 %v2747
        %3569 = vmatprep.subr.bf16.mxu0 %v2756
        %3570 = vmatpush1.bf16.msra.mxu0 %v2755
        %3571 = vmatprep.subr.bf16.mxu0 %v2764
        %3572 = vmatpush1.bf16.msra.mxu0 %v2763
        %3573 = vmatprep.subr.bf16.mxu0 %v2772
        %3574 = vmatpush1.bf16.msra.mxu0 %v2771
        %3575 = vmatprep.subr.bf16.mxu0 %v2780
        %3576 = vmatpush1.bf16.msra.mxu0 %v2779
        %3577 = vmatprep.subr.bf16.mxu0 %v2788
        %3578 = vmatpush1.bf16.msra.mxu0 %v2787
        %3579 = vmatprep.subr.bf16.mxu0 %v2796
        %3580 = vmatpush1.bf16.msra.mxu0 %v2795
        %3581 = vmatprep.subr.bf16.mxu0 %v2804
        %3582 = vmatpush1.bf16.msra.mxu0 %v2803
        %3583 = vmatprep.subr.bf16.mxu0 %v2812
        %3584 = vmatpush1.bf16.msra.mxu0 %v2811
        %3585 = vmatprep.subr.bf16.mxu0 %v2820
        %3586 = vmatpush1.bf16.msra.mxu0 %v2819
        %3587 = vmatprep.subr.bf16.mxu0 %v2828
        %3588 = vmatpush1.bf16.msra.mxu0 %v2827
        %3589 = vmatprep.mubr.bf16.mxu0 %v904
        %3590 = vmatmul.mubr.bf16.gmra.mrb[0].mxu0 %v903
        %v3591 = vpop.f32.mrb[0].mxu0
        %v3592 = vadd.f32 %v3551, %v3591
        %v3593 = vpop.f32.mrb[0].mxu0
        %v3594 = vadd.f32 %v3553, %v3593
        %v3595 = vpop.f32.mrb[0].mxu0
        %v3596 = vpop.f32.mrb[0].mxu0
        %3597 = vdwg.mxu0
        %3598 = vmatprep.subr.bf16.mxu0 %v2836
        %3599 = vmatpush1.bf16.msra.mxu0 %v2835
        %3600 = vmatprep.subr.bf16.mxu0 %v2844
        %3601 = vmatpush1.bf16.msra.mxu0 %v2843
        %3602 = vmatprep.subr.bf16.mxu0 %v2852
        %3603 = vmatpush1.bf16.msra.mxu0 %v2851
        %3604 = vmatprep.subr.bf16.mxu0 %v2860
        %3605 = vmatpush1.bf16.msra.mxu0 %v2859
        %3606 = vmatprep.subr.bf16.mxu0 %v2868
        %3607 = vmatpush1.bf16.msra.mxu0 %v2867
        %3608 = vmatprep.subr.bf16.mxu0 %v2876
        %3609 = vmatpush1.bf16.msra.mxu0 %v2875
        %3610 = vmatprep.subr.bf16.mxu0 %v2884
        %3611 = vmatpush1.bf16.msra.mxu0 %v2883
        %3612 = vmatprep.subr.bf16.mxu0 %v2892
        %3613 = vmatpush1.bf16.msra.mxu0 %v2891
        %3614 = vmatprep.subr.bf16.mxu0 %v2900
        %3615 = vmatpush1.bf16.msra.mxu0 %v2899
        %3616 = vmatprep.subr.bf16.mxu0 %v2908
        %3617 = vmatpush1.bf16.msra.mxu0 %v2907
        %3618 = vmatprep.subr.bf16.mxu0 %v2916
        %3619 = vmatpush1.bf16.msra.mxu0 %v2915
        %3620 = vmatprep.subr.bf16.mxu0 %v2924
        %3621 = vmatpush1.bf16.msra.mxu0 %v2923
        %3622 = vmatprep.subr.bf16.mxu0 %v2932
        %3623 = vmatpush1.bf16.msra.mxu0 %v2931
        %3624 = vmatprep.subr.bf16.mxu0 %v2940
        %3625 = vmatpush1.bf16.msra.mxu0 %v2939
        %3626 = vmatprep.subr.bf16.mxu0 %v2948
        %3627 = vmatpush1.bf16.msra.mxu0 %v2947
        %3628 = vmatprep.subr.bf16.mxu0 %v2956
        %3629 = vmatpush1.bf16.msra.mxu0 %v2955
        %3630 = vmatprep.mubr.bf16.mxu0 %v906
        %3631 = vmatmul.mubr.bf16.gmra.mrb[0].mxu0 %v905
        %v3632 = vpop.f32.mrb[0].mxu0
        %v3633 = vadd.f32 %v3592, %v3632
        %v3634 = vpop.f32.mrb[0].mxu0
        %v3635 = vadd.f32 %v3594, %v3634
        %v3636 = vpop.f32.mrb[0].mxu0
        %v3637 = vpop.f32.mrb[0].mxu0
        %3638 = vdwg.mxu0
        %3639 = vmatprep.subr.bf16.mxu0 %v2454
        %3640 = vmatpush1.bf16.msra.mxu0 %v2453
        %3641 = vmatprep.subr.bf16.mxu0 %v2462
        %3642 = vmatpush1.bf16.msra.mxu0 %v2461
        %3643 = vmatprep.subr.bf16.mxu0 %v2470
        %3644 = vmatpush1.bf16.msra.mxu0 %v2469
        %3645 = vmatprep.subr.bf16.mxu0 %v2478
        %3646 = vmatpush1.bf16.msra.mxu0 %v2477
        %3647 = vmatprep.subr.bf16.mxu0 %v2486
        %3648 = vmatpush1.bf16.msra.mxu0 %v2485
        %3649 = vmatprep.subr.bf16.mxu0 %v2494
        %3650 = vmatpush1.bf16.msra.mxu0 %v2493
        %3651 = vmatprep.subr.bf16.mxu0 %v2502
        %3652 = vmatpush1.bf16.msra.mxu0 %v2501
        %3653 = vmatprep.subr.bf16.mxu0 %v2510
        %3654 = vmatpush1.bf16.msra.mxu0 %v2509
        %3655 = vmatprep.subr.bf16.mxu0 %v2518
        %3656 = vmatpush1.bf16.msra.mxu0 %v2517
        %3657 = vmatprep.subr.bf16.mxu0 %v2526
        %3658 = vmatpush1.bf16.msra.mxu0 %v2525
        %3659 = vmatprep.subr.bf16.mxu0 %v2534
        %3660 = vmatpush1.bf16.msra.mxu0 %v2533
        %3661 = vmatprep.subr.bf16.mxu0 %v2542
        %3662 = vmatpush1.bf16.msra.mxu0 %v2541
        %3663 = vmatprep.subr.bf16.mxu0 %v2550
        %3664 = vmatpush1.bf16.msra.mxu0 %v2549
        %3665 = vmatprep.subr.bf16.mxu0 %v2558
        %3666 = vmatpush1.bf16.msra.mxu0 %v2557
        %3667 = vmatprep.subr.bf16.mxu0 %v2566
        %3668 = vmatpush1.bf16.msra.mxu0 %v2565
        %3669 = vmatprep.subr.bf16.mxu0 %v2574
        %3670 = vmatpush1.bf16.msra.mxu0 %v2573
        %3671 = vmatprep.mubr.bf16.mxu0 %v900
        %3672 = vmatmul.mubr.bf16.gmra.mrb[0].mxu0 %v899
        %v3673 = vpop.f32.mrb[0].mxu0
        %v3674 = vadd.f32 0.0, %v3673
        %v3675 = vpop.f32.mrb[0].mxu0
        %v3676 = vadd.f32 0.0, %v3675
        %v3677 = vpop.f32.mrb[0].mxu0
        %v3678 = vpop.f32.mrb[0].mxu0
        %3679 = vdwg.mxu0
        %3680 = vmatprep.subr.bf16.mxu0 %v2582
        %3681 = vmatpush1.bf16.msra.mxu0 %v2581
        %3682 = vmatprep.subr.bf16.mxu0 %v2590
        %3683 = vmatpush1.bf16.msra.mxu0 %v2589
        %3684 = vmatprep.subr.bf16.mxu0 %v2598
        %3685 = vmatpush1.bf16.msra.mxu0 %v2597
        %3686 = vmatprep.subr.bf16.mxu0 %v2606
        %3687 = vmatpush1.bf16.msra.mxu0 %v2605
        %3688 = vmatprep.subr.bf16.mxu0 %v2614
        %3689 = vmatpush1.bf16.msra.mxu0 %v2613
        %3690 = vmatprep.subr.bf16.mxu0 %v2622
        %3691 = vmatpush1.bf16.msra.mxu0 %v2621
        %3692 = vmatprep.subr.bf16.mxu0 %v2630
        %3693 = vmatpush1.bf16.msra.mxu0 %v2629
        %3694 = vmatprep.subr.bf16.mxu0 %v2638
        %3695 = vmatpush1.bf16.msra.mxu0 %v2637
        %3696 = vmatprep.subr.bf16.mxu0 %v2646
        %3697 = vmatpush1.bf16.msra.mxu0 %v2645
        %3698 = vmatprep.subr.bf16.mxu0 %v2654
        %3699 = vmatpush1.bf16.msra.mxu0 %v2653
        %3700 = vmatprep.subr.bf16.mxu0 %v2662
        %3701 = vmatpush1.bf16.msra.mxu0 %v2661
        %3702 = vmatprep.subr.bf16.mxu0 %v2670
        %3703 = vmatpush1.bf16.msra.mxu0 %v2669
        %3704 = vmatprep.subr.bf16.mxu0 %v2678
        %3705 = vmatpush1.bf16.msra.mxu0 %v2677
        %3706 = vmatprep.subr.bf16.mxu0 %v2686
        %3707 = vmatpush1.bf16.msra.mxu0 %v2685
        %3708 = vmatprep.subr.bf16.mxu0 %v2694
        %3709 = vmatpush1.bf16.msra.mxu0 %v2693
        %3710 = vmatprep.subr.bf16.mxu0 %v2702
        %3711 = vmatpush1.bf16.msra.mxu0 %v2701
        %3712 = vmatprep.mubr.bf16.mxu0 %v902
        %3713 = vmatmul.mubr.bf16.gmra.mrb[0].mxu0 %v901
        %v3714 = vpop.f32.mrb[0].mxu0
        %v3715 = vadd.f32 %v3674, %v3714
        %v3716 = vpop.f32.mrb[0].mxu0
        %v3717 = vadd.f32 %v3676, %v3716
        %v3718 = vpop.f32.mrb[0].mxu0
        %v3719 = vpop.f32.mrb[0].mxu0
        %3720 = vdwg.mxu0
        %3721 = vmatprep.subr.bf16.mxu0 %v2710
        %3722 = vmatpush1.bf16.msra.mxu0 %v2709
        %3723 = vmatprep.subr.bf16.mxu0 %v2718
        %3724 = vmatpush1.bf16.msra.mxu0 %v2717
        %3725 = vmatprep.subr.bf16.mxu0 %v2726
        %3726 = vmatpush1.bf16.msra.mxu0 %v2725
        %3727 = vmatprep.subr.bf16.mxu0 %v2734
        %3728 = vmatpush1.bf16.msra.mxu0 %v2733
        %3729 = vmatprep.subr.bf16.mxu0 %v2742
        %3730 = vmatpush1.bf16.msra.mxu0 %v2741
        %3731 = vmatprep.subr.bf16.mxu0 %v2750
        %3732 = vmatpush1.bf16.msra.mxu0 %v2749
        %3733 = vmatprep.subr.bf16.mxu0 %v2758
        %3734 = vmatpush1.bf16.msra.mxu0 %v2757
        %3735 = vmatprep.subr.bf16.mxu0 %v2766
        %3736 = vmatpush1.bf16.msra.mxu0 %v2765
        %3737 = vmatprep.subr.bf16.mxu0 %v2774
        %3738 = vmatpush1.bf16.msra.mxu0 %v2773
        %3739 = vmatprep.subr.bf16.mxu0 %v2782
        %3740 = vmatpush1.bf16.msra.mxu0 %v2781
        %3741 = vmatprep.subr.bf16.mxu0 %v2790
        %3742 = vmatpush1.bf16.msra.mxu0 %v2789
        %3743 = vmatprep.subr.bf16.mxu0 %v2798
        %3744 = vmatpush1.bf16.msra.mxu0 %v2797
        %3745 = vmatprep.subr.bf16.mxu0 %v2806
        %3746 = vmatpush1.bf16.msra.mxu0 %v2805
        %3747 = vmatprep.subr.bf16.mxu0 %v2814
        %3748 = vmatpush1.bf16.msra.mxu0 %v2813
        %3749 = vmatprep.subr.bf16.mxu0 %v2822
        %3750 = vmatpush1.bf16.msra.mxu0 %v2821
        %3751 = vmatprep.subr.bf16.mxu0 %v2830
        %3752 = vmatpush1.bf16.msra.mxu0 %v2829
        %3753 = vmatprep.mubr.bf16.mxu0 %v904
        %3754 = vmatmul.mubr.bf16.gmra.mrb[0].mxu0 %v903
        %v3755 = vpop.f32.mrb[0].mxu0
        %v3756 = vadd.f32 %v3715, %v3755
        %v3757 = vpop.f32.mrb[0].mxu0
        %v3758 = vadd.f32 %v3717, %v3757
        %v3759 = vpop.f32.mrb[0].mxu0
        %v3760 = vpop.f32.mrb[0].mxu0
        %3761 = vdwg.mxu0
        %3762 = vmatprep.subr.bf16.mxu0 %v2838
        %3763 = vmatpush1.bf16.msra.mxu0 %v2837
        %3764 = vmatprep.subr.bf16.mxu0 %v2846
        %3765 = vmatpush1.bf16.msra.mxu0 %v2845
        %3766 = vmatprep.subr.bf16.mxu0 %v2854
        %3767 = vmatpush1.bf16.msra.mxu0 %v2853
        %3768 = vmatprep.subr.bf16.mxu0 %v2862
        %3769 = vmatpush1.bf16.msra.mxu0 %v2861
        %3770 = vmatprep.subr.bf16.mxu0 %v2870
        %3771 = vmatpush1.bf16.msra.mxu0 %v2869
        %3772 = vmatprep.subr.bf16.mxu0 %v2878
        %3773 = vmatpush1.bf16.msra.mxu0 %v2877
        %3774 = vmatprep.subr.bf16.mxu0 %v2886
        %3775 = vmatpush1.bf16.msra.mxu0 %v2885
        %3776 = vmatprep.subr.bf16.mxu0 %v2894
        %3777 = vmatpush1.bf16.msra.mxu0 %v2893
        %3778 = vmatprep.subr.bf16.mxu0 %v2902
        %3779 = vmatpush1.bf16.msra.mxu0 %v2901
        %3780 = vmatprep.subr.bf16.mxu0 %v2910
        %3781 = vmatpush1.bf16.msra.mxu0 %v2909
        %3782 = vmatprep.subr.bf16.mxu0 %v2918
        %3783 = vmatpush1.bf16.msra.mxu0 %v2917
        %3784 = vmatprep.subr.bf16.mxu0 %v2926
        %3785 = vmatpush1.bf16.msra.mxu0 %v2925
        %3786 = vmatprep.subr.bf16.mxu0 %v2934
        %3787 = vmatpush1.bf16.msra.mxu0 %v2933
        %3788 = vmatprep.subr.bf16.mxu0 %v2942
        %3789 = vmatpush1.bf16.msra.mxu0 %v2941
        %3790 = vmatprep.subr.bf16.mxu0 %v2950
        %3791 = vmatpush1.bf16.msra.mxu0 %v2949
        %3792 = vmatprep.subr.bf16.mxu0 %v2958
        %3793 = vmatpush1.bf16.msra.mxu0 %v2957
        %3794 = vmatprep.mubr.bf16.mxu0 %v906
        %3795 = vmatmul.mubr.bf16.gmra.mrb[0].mxu0 %v905
        %v3796 = vpop.f32.mrb[0].mxu0
        %v3797 = vadd.f32 %v3756, %v3796
        %v3798 = vpop.f32.mrb[0].mxu0
        %v3799 = vadd.f32 %v3758, %v3798
        %v3800 = vpop.f32.mrb[0].mxu0
        %v3801 = vpop.f32.mrb[0].mxu0
        %3802 = vdwg.mxu0
        %3803 = vmatprep.subr.bf16.mxu0 %v2456
        %3804 = vmatpush1.bf16.msra.mxu0 %v2455
        %3805 = vmatprep.subr.bf16.mxu0 %v2464
        %3806 = vmatpush1.bf16.msra.mxu0 %v2463
        %3807 = vmatprep.subr.bf16.mxu0 %v2472
        %3808 = vmatpush1.bf16.msra.mxu0 %v2471
        %3809 = vmatprep.subr.bf16.mxu0 %v2480
        %3810 = vmatpush1.bf16.msra.mxu0 %v2479
        %3811 = vmatprep.subr.bf16.mxu0 %v2488
        %3812 = vmatpush1.bf16.msra.mxu0 %v2487
        %3813 = vmatprep.subr.bf16.mxu0 %v2496
        %3814 = vmatpush1.bf16.msra.mxu0 %v2495
        %3815 = vmatprep.subr.bf16.mxu0 %v2504
        %3816 = vmatpush1.bf16.msra.mxu0 %v2503
        %3817 = vmatprep.subr.bf16.mxu0 %v2512
        %3818 = vmatpush1.bf16.msra.mxu0 %v2511
        %3819 = vmatprep.subr.bf16.mxu0 %v2520
        %3820 = vmatpush1.bf16.msra.mxu0 %v2519
        %3821 = vmatprep.subr.bf16.mxu0 %v2528
        %3822 = vmatpush1.bf16.msra.mxu0 %v2527
        %3823 = vmatprep.subr.bf16.mxu0 %v2536
        %3824 = vmatpush1.bf16.msra.mxu0 %v2535
        %3825 = vmatprep.subr.bf16.mxu0 %v2544
        %3826 = vmatpush1.bf16.msra.mxu0 %v2543
        %3827 = vmatprep.subr.bf16.mxu0 %v2552
        %3828 = vmatpush1.bf16.msra.mxu0 %v2551
        %3829 = vmatprep.subr.bf16.mxu0 %v2560
        %3830 = vmatpush1.bf16.msra.mxu0 %v2559
        %3831 = vmatprep.subr.bf16.mxu0 %v2568
        %3832 = vmatpush1.bf16.msra.mxu0 %v2567
        %3833 = vmatprep.subr.bf16.mxu0 %v2576
        %3834 = vmatpush1.bf16.msra.mxu0 %v2575
        %3835 = vmatprep.mubr.bf16.mxu0 %v900
        %3836 = vmatmul.mubr.bf16.gmra.mrb[0].mxu0 %v899
        %v3837 = vpop.f32.mrb[0].mxu0
        %v3838 = vadd.f32 0.0, %v3837
        %v3839 = vpop.f32.mrb[0].mxu0
        %v3840 = vadd.f32 0.0, %v3839
        %v3841 = vpop.f32.mrb[0].mxu0
        %v3842 = vpop.f32.mrb[0].mxu0
        %3843 = vdwg.mxu0
        %3844 = vmatprep.subr.bf16.mxu0 %v2584
        %3845 = vmatpush1.bf16.msra.mxu0 %v2583
        %3846 = vmatprep.subr.bf16.mxu0 %v2592
        %3847 = vmatpush1.bf16.msra.mxu0 %v2591
        %3848 = vmatprep.subr.bf16.mxu0 %v2600
        %3849 = vmatpush1.bf16.msra.mxu0 %v2599
        %3850 = vmatprep.subr.bf16.mxu0 %v2608
        %3851 = vmatpush1.bf16.msra.mxu0 %v2607
        %3852 = vmatprep.subr.bf16.mxu0 %v2616
        %3853 = vmatpush1.bf16.msra.mxu0 %v2615
        %3854 = vmatprep.subr.bf16.mxu0 %v2624
        %3855 = vmatpush1.bf16.msra.mxu0 %v2623
        %3856 = vmatprep.subr.bf16.mxu0 %v2632
        %3857 = vmatpush1.bf16.msra.mxu0 %v2631
        %3858 = vmatprep.subr.bf16.mxu0 %v2640
        %3859 = vmatpush1.bf16.msra.mxu0 %v2639
        %3860 = vmatprep.subr.bf16.mxu0 %v2648
        %3861 = vmatpush1.bf16.msra.mxu0 %v2647
        %3862 = vmatprep.subr.bf16.mxu0 %v2656
        %3863 = vmatpush1.bf16.msra.mxu0 %v2655
        %3864 = vmatprep.subr.bf16.mxu0 %v2664
        %3865 = vmatpush1.bf16.msra.mxu0 %v2663
        %3866 = vmatprep.subr.bf16.mxu0 %v2672
        %3867 = vmatpush1.bf16.msra.mxu0 %v2671
        %3868 = vmatprep.subr.bf16.mxu0 %v2680
        %3869 = vmatpush1.bf16.msra.mxu0 %v2679
        %3870 = vmatprep.subr.bf16.mxu0 %v2688
        %3871 = vmatpush1.bf16.msra.mxu0 %v2687
        %3872 = vmatprep.subr.bf16.mxu0 %v2696
        %3873 = vmatpush1.bf16.msra.mxu0 %v2695
        %3874 = vmatprep.subr.bf16.mxu0 %v2704
        %3875 = vmatpush1.bf16.msra.mxu0 %v2703
        %3876 = vmatprep.mubr.bf16.mxu0 %v902
        %3877 = vmatmul.mubr.bf16.gmra.mrb[0].mxu0 %v901
        %v3878 = vpop.f32.mrb[0].mxu0
        %v3879 = vadd.f32 %v3838, %v3878
        %v3880 = vpop.f32.mrb[0].mxu0
        %v3881 = vadd.f32 %v3840, %v3880
        %v3882 = vpop.f32.mrb[0].mxu0
        %v3883 = vpop.f32.mrb[0].mxu0
        %3884 = vdwg.mxu0
        %3885 = vmatprep.subr.bf16.mxu0 %v2712
        %3886 = vmatpush1.bf16.msra.mxu0 %v2711
        %3887 = vmatprep.subr.bf16.mxu0 %v2720
        %3888 = vmatpush1.bf16.msra.mxu0 %v2719
        %3889 = vmatprep.subr.bf16.mxu0 %v2728
        %3890 = vmatpush1.bf16.msra.mxu0 %v2727
        %3891 = vmatprep.subr.bf16.mxu0 %v2736
        %3892 = vmatpush1.bf16.msra.mxu0 %v2735
        %3893 = vmatprep.subr.bf16.mxu0 %v2744
        %3894 = vmatpush1.bf16.msra.mxu0 %v2743
        %3895 = vmatprep.subr.bf16.mxu0 %v2752
        %3896 = vmatpush1.bf16.msra.mxu0 %v2751
        %3897 = vmatprep.subr.bf16.mxu0 %v2760
        %3898 = vmatpush1.bf16.msra.mxu0 %v2759
        %3899 = vmatprep.subr.bf16.mxu0 %v2768
        %3900 = vmatpush1.bf16.msra.mxu0 %v2767
        %3901 = vmatprep.subr.bf16.mxu0 %v2776
        %3902 = vmatpush1.bf16.msra.mxu0 %v2775
        %3903 = vmatprep.subr.bf16.mxu0 %v2784
        %3904 = vmatpush1.bf16.msra.mxu0 %v2783
        %3905 = vmatprep.subr.bf16.mxu0 %v2792
        %3906 = vmatpush1.bf16.msra.mxu0 %v2791
        %3907 = vmatprep.subr.bf16.mxu0 %v2800
        %3908 = vmatpush1.bf16.msra.mxu0 %v2799
        %3909 = vmatprep.subr.bf16.mxu0 %v2808
        %3910 = vmatpush1.bf16.msra.mxu0 %v2807
        %3911 = vmatprep.subr.bf16.mxu0 %v2816
        %3912 = vmatpush1.bf16.msra.mxu0 %v2815
        %3913 = vmatprep.subr.bf16.mxu0 %v2824
        %3914 = vmatpush1.bf16.msra.mxu0 %v2823
        %3915 = vmatprep.subr.bf16.mxu0 %v2832
        %3916 = vmatpush1.bf16.msra.mxu0 %v2831
        %3917 = vmatprep.mubr.bf16.mxu0 %v904
        %3918 = vmatmul.mubr.bf16.gmra.mrb[0].mxu0 %v903
        %v3919 = vpop.f32.mrb[0].mxu0
        %v3920 = vadd.f32 %v3879, %v3919
        %v3921 = vpop.f32.mrb[0].mxu0
        %v3922 = vadd.f32 %v3881, %v3921
        %v3923 = vpop.f32.mrb[0].mxu0
        %v3924 = vpop.f32.mrb[0].mxu0
        %3925 = vdwg.mxu0
        %3926 = vmatprep.subr.bf16.mxu0 %v2840
        %3927 = vmatpush1.bf16.msra.mxu0 %v2839
        %3928 = vmatprep.subr.bf16.mxu0 %v2848
        %3929 = vmatpush1.bf16.msra.mxu0 %v2847
        %3930 = vmatprep.subr.bf16.mxu0 %v2856
        %3931 = vmatpush1.bf16.msra.mxu0 %v2855
        %3932 = vmatprep.subr.bf16.mxu0 %v2864
        %3933 = vmatpush1.bf16.msra.mxu0 %v2863
        %3934 = vmatprep.subr.bf16.mxu0 %v2872
        %3935 = vmatpush1.bf16.msra.mxu0 %v2871
        %3936 = vmatprep.subr.bf16.mxu0 %v2880
        %3937 = vmatpush1.bf16.msra.mxu0 %v2879
        %3938 = vmatprep.subr.bf16.mxu0 %v2888
        %3939 = vmatpush1.bf16.msra.mxu0 %v2887
        %3940 = vmatprep.subr.bf16.mxu0 %v2896
        %3941 = vmatpush1.bf16.msra.mxu0 %v2895
        %3942 = vmatprep.subr.bf16.mxu0 %v2904
        %3943 = vmatpush1.bf16.msra.mxu0 %v2903
        %3944 = vmatprep.subr.bf16.mxu0 %v2912
        %3945 = vmatpush1.bf16.msra.mxu0 %v2911
        %3946 = vmatprep.subr.bf16.mxu0 %v2920
        %3947 = vmatpush1.bf16.msra.mxu0 %v2919
        %3948 = vmatprep.subr.bf16.mxu0 %v2928
        %3949 = vmatpush1.bf16.msra.mxu0 %v2927
        %3950 = vmatprep.subr.bf16.mxu0 %v2936
        %3951 = vmatpush1.bf16.msra.mxu0 %v2935
        %3952 = vmatprep.subr.bf16.mxu0 %v2944
        %3953 = vmatpush1.bf16.msra.mxu0 %v2943
        %3954 = vmatprep.subr.bf16.mxu0 %v2952
        %3955 = vmatpush1.bf16.msra.mxu0 %v2951
        %3956 = vmatprep.subr.bf16.mxu0 %v2960
        %3957 = vmatpush1.bf16.msra.mxu0 %v2959
        %3958 = vmatprep.mubr.bf16.mxu0 %v906
        %3959 = vmatmul.mubr.bf16.gmra.mrb[0].mxu0 %v905
        %v3960 = vpop.f32.mrb[0].mxu0
        %v3961 = vadd.f32 %v3920, %v3960
        %v3962 = vpop.f32.mrb[0].mxu0
        %v3963 = vadd.f32 %v3922, %v3962
        %v3964 = vpop.f32.mrb[0].mxu0
        %v3965 = vpop.f32.mrb[0].mxu0
        %3966 = vdwg.mxu0
        %3967 = vmatprep.subr.bf16.mxu0 %v2458
        %3968 = vmatpush1.bf16.msra.mxu0 %v2457
        %3969 = vmatprep.subr.bf16.mxu0 %v2466
        %3970 = vmatpush1.bf16.msra.mxu0 %v2465
        %3971 = vmatprep.subr.bf16.mxu0 %v2474
        %3972 = vmatpush1.bf16.msra.mxu0 %v2473
        %3973 = vmatprep.subr.bf16.mxu0 %v2482
        %3974 = vmatpush1.bf16.msra.mxu0 %v2481
        %3975 = vmatprep.subr.bf16.mxu0 %v2490
        %3976 = vmatpush1.bf16.msra.mxu0 %v2489
        %3977 = vmatprep.subr.bf16.mxu0 %v2498
        %3978 = vmatpush1.bf16.msra.mxu0 %v2497
        %3979 = vmatprep.subr.bf16.mxu0 %v2506
        %3980 = vmatpush1.bf16.msra.mxu0 %v2505
        %3981 = vmatprep.subr.bf16.mxu0 %v2514
        %3982 = vmatpush1.bf16.msra.mxu0 %v2513
        %3983 = vmatprep.subr.bf16.mxu0 %v2522
        %3984 = vmatpush1.bf16.msra.mxu0 %v2521
        %3985 = vmatprep.subr.bf16.mxu0 %v2530
        %3986 = vmatpush1.bf16.msra.mxu0 %v2529
        %3987 = vmatprep.subr.bf16.mxu0 %v2538
        %3988 = vmatpush1.bf16.msra.mxu0 %v2537
        %3989 = vmatprep.subr.bf16.mxu0 %v2546
        %3990 = vmatpush1.bf16.msra.mxu0 %v2545
        %3991 = vmatprep.subr.bf16.mxu0 %v2554
        %3992 = vmatpush1.bf16.msra.mxu0 %v2553
        %3993 = vmatprep.subr.bf16.mxu0 %v2562
        %3994 = vmatpush1.bf16.msra.mxu0 %v2561
        %3995 = vmatprep.subr.bf16.mxu0 %v2570
        %3996 = vmatpush1.bf16.msra.mxu0 %v2569
        %3997 = vmatprep.subr.bf16.mxu0 %v2578
        %3998 = vmatpush1.bf16.msra.mxu0 %v2577
        %3999 = vmatprep.mubr.bf16.mxu0 %v900
        %4000 = vmatmul.mubr.bf16.gmra.mrb[0].mxu0 %v899
        %v4001 = vpop.f32.mrb[0].mxu0
        %v4002 = vadd.f32 0.0, %v4001
        %v4003 = vpop.f32.mrb[0].mxu0
        %v4004 = vadd.f32 0.0, %v4003
        %v4005 = vpop.f32.mrb[0].mxu0
        %v4006 = vpop.f32.mrb[0].mxu0
        %4007 = vdwg.mxu0
        %4008 = vmatprep.subr.bf16.mxu0 %v2586
        %4009 = vmatpush1.bf16.msra.mxu0 %v2585
        %4010 = vmatprep.subr.bf16.mxu0 %v2594
        %4011 = vmatpush1.bf16.msra.mxu0 %v2593
        %4012 = vmatprep.subr.bf16.mxu0 %v2602
        %4013 = vmatpush1.bf16.msra.mxu0 %v2601
        %4014 = vmatprep.subr.bf16.mxu0 %v2610
        %4015 = vmatpush1.bf16.msra.mxu0 %v2609
        %4016 = vmatprep.subr.bf16.mxu0 %v2618
        %4017 = vmatpush1.bf16.msra.mxu0 %v2617
        %4018 = vmatprep.subr.bf16.mxu0 %v2626
        %4019 = vmatpush1.bf16.msra.mxu0 %v2625
        %4020 = vmatprep.subr.bf16.mxu0 %v2634
        %4021 = vmatpush1.bf16.msra.mxu0 %v2633
        %4022 = vmatprep.subr.bf16.mxu0 %v2642
        %4023 = vmatpush1.bf16.msra.mxu0 %v2641
        %4024 = vmatprep.subr.bf16.mxu0 %v2650
        %4025 = vmatpush1.bf16.msra.mxu0 %v2649
        %4026 = vmatprep.subr.bf16.mxu0 %v2658
        %4027 = vmatpush1.bf16.msra.mxu0 %v2657
        %4028 = vmatprep.subr.bf16.mxu0 %v2666
        %4029 = vmatpush1.bf16.msra.mxu0 %v2665
        %4030 = vmatprep.subr.bf16.mxu0 %v2674
        %4031 = vmatpush1.bf16.msra.mxu0 %v2673
        %4032 = vmatprep.subr.bf16.mxu0 %v2682
        %4033 = vmatpush1.bf16.msra.mxu0 %v2681
        %4034 = vmatprep.subr.bf16.mxu0 %v2690
        %4035 = vmatpush1.bf16.msra.mxu0 %v2689
        %4036 = vmatprep.subr.bf16.mxu0 %v2698
        %4037 = vmatpush1.bf16.msra.mxu0 %v2697
        %4038 = vmatprep.subr.bf16.mxu0 %v2706
        %4039 = vmatpush1.bf16.msra.mxu0 %v2705
        %4040 = vmatprep.mubr.bf16.mxu0 %v902
        %4041 = vmatmul.mubr.bf16.gmra.mrb[0].mxu0 %v901
        %v4042 = vpop.f32.mrb[0].mxu0
        %v4043 = vadd.f32 %v4002, %v4042
        %v4044 = vpop.f32.mrb[0].mxu0
        %v4045 = vadd.f32 %v4004, %v4044
        %v4046 = vpop.f32.mrb[0].mxu0
        %v4047 = vpop.f32.mrb[0].mxu0
        %4048 = vdwg.mxu0
        %4049 = vmatprep.subr.bf16.mxu0 %v2714
        %4050 = vmatpush1.bf16.msra.mxu0 %v2713
        %4051 = vmatprep.subr.bf16.mxu0 %v2722
        %4052 = vmatpush1.bf16.msra.mxu0 %v2721
        %4053 = vmatprep.subr.bf16.mxu0 %v2730
        %4054 = vmatpush1.bf16.msra.mxu0 %v2729
        %4055 = vmatprep.subr.bf16.mxu0 %v2738
        %4056 = vmatpush1.bf16.msra.mxu0 %v2737
        %4057 = vmatprep.subr.bf16.mxu0 %v2746
        %4058 = vmatpush1.bf16.msra.mxu0 %v2745
        %4059 = vmatprep.subr.bf16.mxu0 %v2754
        %4060 = vmatpush1.bf16.msra.mxu0 %v2753
        %4061 = vmatprep.subr.bf16.mxu0 %v2762
        %4062 = vmatpush1.bf16.msra.mxu0 %v2761
        %4063 = vmatprep.subr.bf16.mxu0 %v2770
        %4064 = vmatpush1.bf16.msra.mxu0 %v2769
        %4065 = vmatprep.subr.bf16.mxu0 %v2778
        %4066 = vmatpush1.bf16.msra.mxu0 %v2777
        %4067 = vmatprep.subr.bf16.mxu0 %v2786
        %4068 = vmatpush1.bf16.msra.mxu0 %v2785
        %4069 = vmatprep.subr.bf16.mxu0 %v2794
        %4070 = vmatpush1.bf16.msra.mxu0 %v2793
        %4071 = vmatprep.subr.bf16.mxu0 %v2802
        %4072 = vmatpush1.bf16.msra.mxu0 %v2801
        %4073 = vmatprep.subr.bf16.mxu0 %v2810
        %4074 = vmatpush1.bf16.msra.mxu0 %v2809
        %4075 = vmatprep.subr.bf16.mxu0 %v2818
        %4076 = vmatpush1.bf16.msra.mxu0 %v2817
        %4077 = vmatprep.subr.bf16.mxu0 %v2826
        %4078 = vmatpush1.bf16.msra.mxu0 %v2825
        %4079 = vmatprep.subr.bf16.mxu0 %v2834
        %4080 = vmatpush1.bf16.msra.mxu0 %v2833
        %4081 = vmatprep.mubr.bf16.mxu0 %v904
        %4082 = vmatmul.mubr.bf16.gmra.mrb[0].mxu0 %v903
        %v4083 = vpop.f32.mrb[0].mxu0
        %v4084 = vadd.f32 %v4043, %v4083
        %v4085 = vpop.f32.mrb[0].mxu0
        %v4086 = vadd.f32 %v4045, %v4085
        %v4087 = vpop.f32.mrb[0].mxu0
        %v4088 = vpop.f32.mrb[0].mxu0
        %4089 = vdwg.mxu0
        %4090 = vmatprep.subr.bf16.mxu0 %v2842
        %4091 = vmatpush1.bf16.msra.mxu0 %v2841
        %4092 = vmatprep.subr.bf16.mxu0 %v2850
        %4093 = vmatpush1.bf16.msra.mxu0 %v2849
        %4094 = vmatprep.subr.bf16.mxu0 %v2858
        %4095 = vmatpush1.bf16.msra.mxu0 %v2857
        %4096 = vmatprep.subr.bf16.mxu0 %v2866
        %4097 = vmatpush1.bf16.msra.mxu0 %v2865
        %4098 = vmatprep.subr.bf16.mxu0 %v2874
        %4099 = vmatpush1.bf16.msra.mxu0 %v2873
        %4100 = vmatprep.subr.bf16.mxu0 %v2882
        %4101 = vmatpush1.bf16.msra.mxu0 %v2881
        %4102 = vmatprep.subr.bf16.mxu0 %v2890
        %4103 = vmatpush1.bf16.msra.mxu0 %v2889
        %4104 = vmatprep.subr.bf16.mxu0 %v2898
        %4105 = vmatpush1.bf16.msra.mxu0 %v2897
        %4106 = vmatprep.subr.bf16.mxu0 %v2906
        %4107 = vmatpush1.bf16.msra.mxu0 %v2905
        %4108 = vmatprep.subr.bf16.mxu0 %v2914
        %4109 = vmatpush1.bf16.msra.mxu0 %v2913
        %4110 = vmatprep.subr.bf16.mxu0 %v2922
        %4111 = vmatpush1.bf16.msra.mxu0 %v2921
        %4112 = vmatprep.subr.bf16.mxu0 %v2930
        %4113 = vmatpush1.bf16.msra.mxu0 %v2929
        %4114 = vmatprep.subr.bf16.mxu0 %v2938
        %4115 = vmatpush1.bf16.msra.mxu0 %v2937
        %4116 = vmatprep.subr.bf16.mxu0 %v2946
        %4117 = vmatpush1.bf16.msra.mxu0 %v2945
        %4118 = vmatprep.subr.bf16.mxu0 %v2954
        %4119 = vmatpush1.bf16.msra.mxu0 %v2953
        %4120 = vmatprep.subr.bf16.mxu0 %v2962
        %4121 = vmatpush1.bf16.msra.mxu0 %v2961
        %4122 = vmatprep.mubr.bf16.mxu0 %v906
        %4123 = vmatmul.mubr.bf16.gmra.mrb[0].mxu0 %v905
        %v4124 = vpop.f32.mrb[0].mxu0
        %v4125 = vadd.f32 %v4084, %v4124
        %v4126 = vpop.f32.mrb[0].mxu0
        %v4127 = vadd.f32 %v4086, %v4126
        %v4128 = vpop.f32.mrb[0].mxu0
        %v4129 = vpop.f32.mrb[0].mxu0
        %4130 = vdwg.mxu0
        %v4131 = vadd.f32 %v363, %v3633
        %v4132 = vadd.f32 %v364, %v3635
        %v4133 = vadd.f32 %v365, %v3797
        %v4134 = vadd.f32 %v366, %v3799
        %v4135 = vadd.f32 %v367, %v3961
        %v4136 = vadd.f32 %v368, %v3963
        %v4137 = vadd.f32 %v369, %v4125
        %v4138 = vadd.f32 %v370, %v4127
        %4139 = vst [vmem:[#allocation2] sm:$0xff] %v4131
        %4140 = vst [vmem:[#allocation2 + $0x8] sm:$0xff] %v4132
        %4141 = vst [vmem:[#allocation2 + $0x10] sm:$0xff] %v4133
        %4142 = vst [vmem:[#allocation2 + $0x18] sm:$0xff] %v4134
        %4143 = vst [vmem:[#allocation2 + $0x20] sm:$0xff] %v4135
        %4144 = vst [vmem:[#allocation2 + $0x28] sm:$0xff] %v4136
        %4145 = vst [vmem:[#allocation2 + $0x30] sm:$0xff] %v4137
        %4146 = vst [vmem:[#allocation2 + $0x38] sm:$0xff] %v4138
        %p4147 = scmp.eq.s32.totalorder %s26, 1
        // Predicated region
        $region65: #{precompute_image_encoder.1} parent=43 // pred_check
          %p4148 = pneg %p4147
        $region66: #{precompute_image_encoder.1} parent=43 // pred_check_branch
          %4150 = sbr.rel (%p4148) target = $region68
        $region67: #{precompute_image_encoder.1} parent=43 // pred_region
          %v4151 = vld [vmem:[#allocation2] sm:$0xff]
          %v4152 = vld [vmem:[#allocation2 + $0x8] sm:$0xff]
          %v4153 = vld [vmem:[#allocation2 + $0x10] sm:$0xff]
          %v4154 = vld [vmem:[#allocation2 + $0x18] sm:$0xff]
          %v4155 = vld [vmem:[#allocation2 + $0x20] sm:$0xff]
          %v4156 = vld [vmem:[#allocation2 + $0x28] sm:$0xff]
          %v4157 = vld [vmem:[#allocation2 + $0x30] sm:$0xff]
          %v4158 = vld [vmem:[#allocation2 + $0x38] sm:$0xff]
          %v4159 = vld [vmem:[#allocation6] sm:$0xff]
          %v4161 = vlaneseq
          %v4162 = vshrl.u32 %v4161, 7
          %v4163 = vsub.s32 0, %v4162
          %v4164 = vrot.slane %v4159, %v4163
          %v4165 = vlaneseq
          %v4166 = vshrl.u32 %v4165, 7
          %v4167 = vsub.s32 1, %v4166
          %v4168 = vrot.slane %v4159, %v4167
          %v4169 = vlaneseq
          %v4170 = vshrl.u32 %v4169, 7
          %v4171 = vsub.s32 2, %v4170
          %v4172 = vrot.slane %v4159, %v4171
          %v4173 = vlaneseq
          %v4174 = vshrl.u32 %v4173, 7
          %v4175 = vsub.s32 3, %v4174
          %v4176 = vrot.slane %v4159, %v4175
          %v4177 = vlaneseq
          %v4178 = vshrl.u32 %v4177, 7
          %v4179 = vsub.s32 4, %v4178
          %v4180 = vrot.slane %v4159, %v4179
          %v4181 = vlaneseq
          %v4182 = vshrl.u32 %v4181, 7
          %v4183 = vsub.s32 5, %v4182
          %v4184 = vrot.slane %v4159, %v4183
          %v4185 = vlaneseq
          %v4186 = vshrl.u32 %v4185, 7
          %v4187 = vsub.s32 6, %v4186
          %v4188 = vrot.slane %v4159, %v4187
          %v4189 = vlaneseq
          %v4190 = vshrl.u32 %v4189, 7
          %v4191 = vsub.s32 7, %v4190
          %v4192 = vrot.slane %v4159, %v4191
          %v4201 = vadd.f32 %v4151, %v4164
          %v4202 = vadd.f32 %v4152, %v4168
          %v4203 = vadd.f32 %v4153, %v4172
          %v4204 = vadd.f32 %v4154, %v4176
          %v4205 = vadd.f32 %v4155, %v4180
          %v4206 = vadd.f32 %v4156, %v4184
          %v4207 = vadd.f32 %v4157, %v4188
          %v4208 = vadd.f32 %v4158, %v4192
          %v4209 = vmax.f32 %v4201, 0.0
          %v4210 = vmax.f32 %v4202, 0.0
          %v4211 = vmax.f32 %v4203, 0.0
          %v4212 = vmax.f32 %v4204, 0.0
          %v4213 = vmax.f32 %v4205, 0.0
          %v4214 = vmax.f32 %v4206, 0.0
          %v4215 = vmax.f32 %v4207, 0.0
          %v4216 = vmax.f32 %v4208, 0.0
          %v4217 = vpack.c.bf16 %v4209, %v4209
          %v4218 = vpack.c.bf16 %v4210, %v4210
          %v4219 = vpack.c.bf16 %v4211, %v4211
          %v4220 = vpack.c.bf16 %v4212, %v4212
          %v4221 = vpack.c.bf16 %v4213, %v4213
          %v4222 = vpack.c.bf16 %v4214, %v4214
          %v4223 = vpack.c.bf16 %v4215, %v4215
          %v4224 = vpack.c.bf16 %v4216, %v4216
          %v4225 = vld [vmem:[#allocation8] sm:$0xf]
          %v4226 = vld [vmem:[#allocation8 + $0x4] sm:$0xf]
          %v4227 = vld [vmem:[#allocation8 + $0x8] sm:$0xf]
          %v4228 = vld [vmem:[#allocation8 + $0xc] sm:$0xf]
          %v4229 = vld [vmem:[#allocation8 + $0x10] sm:$0xf]
          %v4230 = vld [vmem:[#allocation8 + $0x14] sm:$0xf]
          %v4231 = vld [vmem:[#allocation8 + $0x18] sm:$0xf]
          %v4232 = vld [vmem:[#allocation8 + $0x1c] sm:$0xf]
          %v4233 = vld [vmem:[#allocation8 + $0x20] sm:$0xf]
          %v4234 = vld [vmem:[#allocation8 + $0x24] sm:$0xf]
          %v4235 = vld [vmem:[#allocation8 + $0x28] sm:$0xf]
          %v4236 = vld [vmem:[#allocation8 + $0x2c] sm:$0xf]
          %v4237 = vld [vmem:[#allocation8 + $0x30] sm:$0xf]
          %v4238 = vld [vmem:[#allocation8 + $0x34] sm:$0xf]
          %v4239 = vld [vmem:[#allocation8 + $0x38] sm:$0xf]
          %v4240 = vld [vmem:[#allocation8 + $0x3c] sm:$0xf]
          %v4241 = vld [vmem:[#allocation8 + $0x40] sm:$0xf]
          %v4242 = vld [vmem:[#allocation8 + $0x44] sm:$0xf]
          %v4243 = vld [vmem:[#allocation8 + $0x48] sm:$0xf]
          %v4244 = vld [vmem:[#allocation8 + $0x4c] sm:$0xf]
          %v4245 = vld [vmem:[#allocation8 + $0x50] sm:$0xf]
          %v4246 = vld [vmem:[#allocation8 + $0x54] sm:$0xf]
          %v4247 = vld [vmem:[#allocation8 + $0x58] sm:$0xf]
          %v4248 = vld [vmem:[#allocation8 + $0x5c] sm:$0xf]
          %v4249 = vld [vmem:[#allocation8 + $0x60] sm:$0xf]
          %v4250 = vld [vmem:[#allocation8 + $0x64] sm:$0xf]
          %v4251 = vld [vmem:[#allocation8 + $0x68] sm:$0xf]
          %v4252 = vld [vmem:[#allocation8 + $0x6c] sm:$0xf]
          %v4253 = vld [vmem:[#allocation8 + $0x70] sm:$0xf]
          %v4254 = vld [vmem:[#allocation8 + $0x74] sm:$0xf]
          %v4255 = vld [vmem:[#allocation8 + $0x78] sm:$0xf]
          %v4256 = vld [vmem:[#allocation8 + $0x7c] sm:$0xf]
          %v4257 = vld [vmem:[#allocation8 + $0x80] sm:$0xf]
          %v4258 = vld [vmem:[#allocation8 + $0x84] sm:$0xf]
          %v4259 = vld [vmem:[#allocation8 + $0x88] sm:$0xf]
          %v4260 = vld [vmem:[#allocation8 + $0x8c] sm:$0xf]
          %v4261 = vld [vmem:[#allocation8 + $0x90] sm:$0xf]
          %v4262 = vld [vmem:[#allocation8 + $0x94] sm:$0xf]
          %v4263 = vld [vmem:[#allocation8 + $0x98] sm:$0xf]
          %v4264 = vld [vmem:[#allocation8 + $0x9c] sm:$0xf]
          %v4265 = vld [vmem:[#allocation8 + $0xa0] sm:$0xf]
          %v4266 = vld [vmem:[#allocation8 + $0xa4] sm:$0xf]
          %v4267 = vld [vmem:[#allocation8 + $0xa8] sm:$0xf]
          %v4268 = vld [vmem:[#allocation8 + $0xac] sm:$0xf]
          %v4269 = vld [vmem:[#allocation8 + $0xb0] sm:$0xf]
          %v4270 = vld [vmem:[#allocation8 + $0xb4] sm:$0xf]
          %v4271 = vld [vmem:[#allocation8 + $0xb8] sm:$0xf]
          %v4272 = vld [vmem:[#allocation8 + $0xbc] sm:$0xf]
          %v4273 = vld [vmem:[#allocation8 + $0xc0] sm:$0xf]
          %v4274 = vld [vmem:[#allocation8 + $0xc4] sm:$0xf]
          %v4275 = vld [vmem:[#allocation8 + $0xc8] sm:$0xf]
          %v4276 = vld [vmem:[#allocation8 + $0xcc] sm:$0xf]
          %v4277 = vld [vmem:[#allocation8 + $0xd0] sm:$0xf]
          %v4278 = vld [vmem:[#allocation8 + $0xd4] sm:$0xf]
          %v4279 = vld [vmem:[#allocation8 + $0xd8] sm:$0xf]
          %v4280 = vld [vmem:[#allocation8 + $0xdc] sm:$0xf]
          %v4281 = vld [vmem:[#allocation8 + $0xe0] sm:$0xf]
          %v4282 = vld [vmem:[#allocation8 + $0xe4] sm:$0xf]
          %v4283 = vld [vmem:[#allocation8 + $0xe8] sm:$0xf]
          %v4284 = vld [vmem:[#allocation8 + $0xec] sm:$0xf]
          %v4285 = vld [vmem:[#allocation8 + $0xf0] sm:$0xf]
          %v4286 = vld [vmem:[#allocation8 + $0xf4] sm:$0xf]
          %v4287 = vld [vmem:[#allocation8 + $0xf8] sm:$0xf]
          %v4288 = vld [vmem:[#allocation8 + $0xfc] sm:$0xf]
          %v4289 = vld [vmem:[#allocation8 + $0x100] sm:$0xf]
          %v4290 = vld [vmem:[#allocation8 + $0x104] sm:$0xf]
          %v4291 = vld [vmem:[#allocation8 + $0x108] sm:$0xf]
          %v4292 = vld [vmem:[#allocation8 + $0x10c] sm:$0xf]
          %v4293 = vld [vmem:[#allocation8 + $0x110] sm:$0xf]
          %v4294 = vld [vmem:[#allocation8 + $0x114] sm:$0xf]
          %v4295 = vld [vmem:[#allocation8 + $0x118] sm:$0xf]
          %v4296 = vld [vmem:[#allocation8 + $0x11c] sm:$0xf]
          %v4297 = vld [vmem:[#allocation8 + $0x120] sm:$0xf]
          %v4298 = vld [vmem:[#allocation8 + $0x124] sm:$0xf]
          %v4299 = vld [vmem:[#allocation8 + $0x128] sm:$0xf]
          %v4300 = vld [vmem:[#allocation8 + $0x12c] sm:$0xf]
          %v4301 = vld [vmem:[#allocation8 + $0x130] sm:$0xf]
          %v4302 = vld [vmem:[#allocation8 + $0x134] sm:$0xf]
          %v4303 = vld [vmem:[#allocation8 + $0x138] sm:$0xf]
          %v4304 = vld [vmem:[#allocation8 + $0x13c] sm:$0xf]
          %v4305 = vld [vmem:[#allocation8 + $0x140] sm:$0xf]
          %v4306 = vld [vmem:[#allocation8 + $0x144] sm:$0xf]
          %v4307 = vld [vmem:[#allocation8 + $0x148] sm:$0xf]
          %v4308 = vld [vmem:[#allocation8 + $0x14c] sm:$0xf]
          %v4309 = vld [vmem:[#allocation8 + $0x150] sm:$0xf]
          %v4310 = vld [vmem:[#allocation8 + $0x154] sm:$0xf]
          %v4311 = vld [vmem:[#allocation8 + $0x158] sm:$0xf]
          %v4312 = vld [vmem:[#allocation8 + $0x15c] sm:$0xf]
          %v4313 = vld [vmem:[#allocation8 + $0x160] sm:$0xf]
          %v4314 = vld [vmem:[#allocation8 + $0x164] sm:$0xf]
          %v4315 = vld [vmem:[#allocation8 + $0x168] sm:$0xf]
          %v4316 = vld [vmem:[#allocation8 + $0x16c] sm:$0xf]
          %v4317 = vld [vmem:[#allocation8 + $0x170] sm:$0xf]
          %v4318 = vld [vmem:[#allocation8 + $0x174] sm:$0xf]
          %v4319 = vld [vmem:[#allocation8 + $0x178] sm:$0xf]
          %v4320 = vld [vmem:[#allocation8 + $0x17c] sm:$0xf]
          %v4321 = vld [vmem:[#allocation8 + $0x180] sm:$0xf]
          %v4322 = vld [vmem:[#allocation8 + $0x184] sm:$0xf]
          %v4323 = vld [vmem:[#allocation8 + $0x188] sm:$0xf]
          %v4324 = vld [vmem:[#allocation8 + $0x18c] sm:$0xf]
          %v4325 = vld [vmem:[#allocation8 + $0x190] sm:$0xf]
          %v4326 = vld [vmem:[#allocation8 + $0x194] sm:$0xf]
          %v4327 = vld [vmem:[#allocation8 + $0x198] sm:$0xf]
          %v4328 = vld [vmem:[#allocation8 + $0x19c] sm:$0xf]
          %v4329 = vld [vmem:[#allocation8 + $0x1a0] sm:$0xf]
          %v4330 = vld [vmem:[#allocation8 + $0x1a4] sm:$0xf]
          %v4331 = vld [vmem:[#allocation8 + $0x1a8] sm:$0xf]
          %v4332 = vld [vmem:[#allocation8 + $0x1ac] sm:$0xf]
          %v4333 = vld [vmem:[#allocation8 + $0x1b0] sm:$0xf]
          %v4334 = vld [vmem:[#allocation8 + $0x1b4] sm:$0xf]
          %v4335 = vld [vmem:[#allocation8 + $0x1b8] sm:$0xf]
          %v4336 = vld [vmem:[#allocation8 + $0x1bc] sm:$0xf]
          %v4337 = vld [vmem:[#allocation8 + $0x1c0] sm:$0xf]
          %v4338 = vld [vmem:[#allocation8 + $0x1c4] sm:$0xf]
          %v4339 = vld [vmem:[#allocation8 + $0x1c8] sm:$0xf]
          %v4340 = vld [vmem:[#allocation8 + $0x1cc] sm:$0xf]
          %v4341 = vld [vmem:[#allocation8 + $0x1d0] sm:$0xf]
          %v4342 = vld [vmem:[#allocation8 + $0x1d4] sm:$0xf]
          %v4343 = vld [vmem:[#allocation8 + $0x1d8] sm:$0xf]
          %v4344 = vld [vmem:[#allocation8 + $0x1dc] sm:$0xf]
          %v4345 = vld [vmem:[#allocation8 + $0x1e0] sm:$0xf]
          %v4346 = vld [vmem:[#allocation8 + $0x1e4] sm:$0xf]
          %v4347 = vld [vmem:[#allocation8 + $0x1e8] sm:$0xf]
          %v4348 = vld [vmem:[#allocation8 + $0x1ec] sm:$0xf]
          %v4349 = vld [vmem:[#allocation8 + $0x1f0] sm:$0xf]
          %v4350 = vld [vmem:[#allocation8 + $0x1f4] sm:$0xf]
          %v4351 = vld [vmem:[#allocation8 + $0x1f8] sm:$0xf]
          %v4352 = vld [vmem:[#allocation8 + $0x1fc] sm:$0xf]
          %v4481 = vunpack.c.l.b16 %v4225
          %v4482 = vunpack.c.l.b16 %v4226
          %v4483 = vunpack.c.l.b16 %v4227
          %v4484 = vunpack.c.l.b16 %v4228
          %v4485 = vunpack.c.l.b16 %v4229
          %v4486 = vunpack.c.l.b16 %v4230
          %v4487 = vunpack.c.l.b16 %v4231
          %v4488 = vunpack.c.l.b16 %v4232
          %v4489 = vunpack.c.l.b16 %v4233
          %v4490 = vunpack.c.l.b16 %v4234
          %v4491 = vunpack.c.l.b16 %v4235
          %v4492 = vunpack.c.l.b16 %v4236
          %v4493 = vunpack.c.l.b16 %v4237
          %v4494 = vunpack.c.l.b16 %v4238
          %v4495 = vunpack.c.l.b16 %v4239
          %v4496 = vunpack.c.l.b16 %v4240
          %v4497 = vunpack.c.l.b16 %v4241
          %v4498 = vunpack.c.l.b16 %v4242
          %v4499 = vunpack.c.l.b16 %v4243
          %v4500 = vunpack.c.l.b16 %v4244
          %v4501 = vunpack.c.l.b16 %v4245
          %v4502 = vunpack.c.l.b16 %v4246
          %v4503 = vunpack.c.l.b16 %v4247
          %v4504 = vunpack.c.l.b16 %v4248
          %v4505 = vunpack.c.l.b16 %v4249
          %v4506 = vunpack.c.l.b16 %v4250
          %v4507 = vunpack.c.l.b16 %v4251
          %v4508 = vunpack.c.l.b16 %v4252
          %v4509 = vunpack.c.l.b16 %v4253
          %v4510 = vunpack.c.l.b16 %v4254
          %v4511 = vunpack.c.l.b16 %v4255
          %v4512 = vunpack.c.l.b16 %v4256
          %v4513 = vunpack.c.l.b16 %v4257
          %v4514 = vunpack.c.l.b16 %v4258
          %v4515 = vunpack.c.l.b16 %v4259
          %v4516 = vunpack.c.l.b16 %v4260
          %v4517 = vunpack.c.l.b16 %v4261
          %v4518 = vunpack.c.l.b16 %v4262
          %v4519 = vunpack.c.l.b16 %v4263
          %v4520 = vunpack.c.l.b16 %v4264
          %v4521 = vunpack.c.l.b16 %v4265
          %v4522 = vunpack.c.l.b16 %v4266
          %v4523 = vunpack.c.l.b16 %v4267
          %v4524 = vunpack.c.l.b16 %v4268
          %v4525 = vunpack.c.l.b16 %v4269
          %v4526 = vunpack.c.l.b16 %v4270
          %v4527 = vunpack.c.l.b16 %v4271
          %v4528 = vunpack.c.l.b16 %v4272
          %v4529 = vunpack.c.l.b16 %v4273
          %v4530 = vunpack.c.l.b16 %v4274
          %v4531 = vunpack.c.l.b16 %v4275
          %v4532 = vunpack.c.l.b16 %v4276
          %v4533 = vunpack.c.l.b16 %v4277
          %v4534 = vunpack.c.l.b16 %v4278
          %v4535 = vunpack.c.l.b16 %v4279
          %v4536 = vunpack.c.l.b16 %v4280
          %v4537 = vunpack.c.l.b16 %v4281
          %v4538 = vunpack.c.l.b16 %v4282
          %v4539 = vunpack.c.l.b16 %v4283
          %v4540 = vunpack.c.l.b16 %v4284
          %v4541 = vunpack.c.l.b16 %v4285
          %v4542 = vunpack.c.l.b16 %v4286
          %v4543 = vunpack.c.l.b16 %v4287
          %v4544 = vunpack.c.l.b16 %v4288
          %v4545 = vunpack.c.l.b16 %v4289
          %v4546 = vunpack.c.l.b16 %v4290
          %v4547 = vunpack.c.l.b16 %v4291
          %v4548 = vunpack.c.l.b16 %v4292
          %v4549 = vunpack.c.l.b16 %v4293
          %v4550 = vunpack.c.l.b16 %v4294
          %v4551 = vunpack.c.l.b16 %v4295
          %v4552 = vunpack.c.l.b16 %v4296
          %v4553 = vunpack.c.l.b16 %v4297
          %v4554 = vunpack.c.l.b16 %v4298
          %v4555 = vunpack.c.l.b16 %v4299
          %v4556 = vunpack.c.l.b16 %v4300
          %v4557 = vunpack.c.l.b16 %v4301
          %v4558 = vunpack.c.l.b16 %v4302
          %v4559 = vunpack.c.l.b16 %v4303
          %v4560 = vunpack.c.l.b16 %v4304
          %v4561 = vunpack.c.l.b16 %v4305
          %v4562 = vunpack.c.l.b16 %v4306
          %v4563 = vunpack.c.l.b16 %v4307
          %v4564 = vunpack.c.l.b16 %v4308
          %v4565 = vunpack.c.l.b16 %v4309
          %v4566 = vunpack.c.l.b16 %v4310
          %v4567 = vunpack.c.l.b16 %v4311
          %v4568 = vunpack.c.l.b16 %v4312
          %v4569 = vunpack.c.l.b16 %v4313
          %v4570 = vunpack.c.l.b16 %v4314
          %v4571 = vunpack.c.l.b16 %v4315
          %v4572 = vunpack.c.l.b16 %v4316
          %v4573 = vunpack.c.l.b16 %v4317
          %v4574 = vunpack.c.l.b16 %v4318
          %v4575 = vunpack.c.l.b16 %v4319
          %v4576 = vunpack.c.l.b16 %v4320
          %v4577 = vunpack.c.l.b16 %v4321
          %v4578 = vunpack.c.l.b16 %v4322
          %v4579 = vunpack.c.l.b16 %v4323
          %v4580 = vunpack.c.l.b16 %v4324
          %v4581 = vunpack.c.l.b16 %v4325
          %v4582 = vunpack.c.l.b16 %v4326
          %v4583 = vunpack.c.l.b16 %v4327
          %v4584 = vunpack.c.l.b16 %v4328
          %v4585 = vunpack.c.l.b16 %v4329
          %v4586 = vunpack.c.l.b16 %v4330
          %v4587 = vunpack.c.l.b16 %v4331
          %v4588 = vunpack.c.l.b16 %v4332
          %v4589 = vunpack.c.l.b16 %v4333
          %v4590 = vunpack.c.l.b16 %v4334
          %v4591 = vunpack.c.l.b16 %v4335
          %v4592 = vunpack.c.l.b16 %v4336
          %v4593 = vunpack.c.l.b16 %v4337
          %v4594 = vunpack.c.l.b16 %v4338
          %v4595 = vunpack.c.l.b16 %v4339
          %v4596 = vunpack.c.l.b16 %v4340
          %v4597 = vunpack.c.l.b16 %v4341
          %v4598 = vunpack.c.l.b16 %v4342
          %v4599 = vunpack.c.l.b16 %v4343
          %v4600 = vunpack.c.l.b16 %v4344
          %v4601 = vunpack.c.l.b16 %v4345
          %v4602 = vunpack.c.l.b16 %v4346
          %v4603 = vunpack.c.l.b16 %v4347
          %v4604 = vunpack.c.l.b16 %v4348
          %v4605 = vunpack.c.l.b16 %v4349
          %v4606 = vunpack.c.l.b16 %v4350
          %v4607 = vunpack.c.l.b16 %v4351
          %v4608 = vunpack.c.l.b16 %v4352
          %v4609 = vpack.c.b16 %v4482, %v4481
          %v4610 = vpack.c.b16 %v4484, %v4483
          %v4611 = vpack.c.b16 %v4486, %v4485
          %v4612 = vpack.c.b16 %v4488, %v4487
          %v4613 = vpack.c.b16 %v4490, %v4489
          %v4614 = vpack.c.b16 %v4492, %v4491
          %v4615 = vpack.c.b16 %v4494, %v4493
          %v4616 = vpack.c.b16 %v4496, %v4495
          %v4617 = vpack.c.b16 %v4498, %v4497
          %v4618 = vpack.c.b16 %v4500, %v4499
          %v4619 = vpack.c.b16 %v4502, %v4501
          %v4620 = vpack.c.b16 %v4504, %v4503
          %v4621 = vpack.c.b16 %v4506, %v4505
          %v4622 = vpack.c.b16 %v4508, %v4507
          %v4623 = vpack.c.b16 %v4510, %v4509
          %v4624 = vpack.c.b16 %v4512, %v4511
          %v4625 = vpack.c.b16 %v4514, %v4513
          %v4626 = vpack.c.b16 %v4516, %v4515
          %v4627 = vpack.c.b16 %v4518, %v4517
          %v4628 = vpack.c.b16 %v4520, %v4519
          %v4629 = vpack.c.b16 %v4522, %v4521
          %v4630 = vpack.c.b16 %v4524, %v4523
          %v4631 = vpack.c.b16 %v4526, %v4525
          %v4632 = vpack.c.b16 %v4528, %v4527
          %v4633 = vpack.c.b16 %v4530, %v4529
          %v4634 = vpack.c.b16 %v4532, %v4531
          %v4635 = vpack.c.b16 %v4534, %v4533
          %v4636 = vpack.c.b16 %v4536, %v4535
          %v4637 = vpack.c.b16 %v4538, %v4537
          %v4638 = vpack.c.b16 %v4540, %v4539
          %v4639 = vpack.c.b16 %v4542, %v4541
          %v4640 = vpack.c.b16 %v4544, %v4543
          %v4641 = vpack.c.b16 %v4546, %v4545
          %v4642 = vpack.c.b16 %v4548, %v4547
          %v4643 = vpack.c.b16 %v4550, %v4549
          %v4644 = vpack.c.b16 %v4552, %v4551
          %v4645 = vpack.c.b16 %v4554, %v4553
          %v4646 = vpack.c.b16 %v4556, %v4555
          %v4647 = vpack.c.b16 %v4558, %v4557
          %v4648 = vpack.c.b16 %v4560, %v4559
          %v4649 = vpack.c.b16 %v4562, %v4561
          %v4650 = vpack.c.b16 %v4564, %v4563
          %v4651 = vpack.c.b16 %v4566, %v4565
          %v4652 = vpack.c.b16 %v4568, %v4567
          %v4653 = vpack.c.b16 %v4570, %v4569
          %v4654 = vpack.c.b16 %v4572, %v4571
          %v4655 = vpack.c.b16 %v4574, %v4573
          %v4656 = vpack.c.b16 %v4576, %v4575
          %v4657 = vpack.c.b16 %v4578, %v4577
          %v4658 = vpack.c.b16 %v4580, %v4579
          %v4659 = vpack.c.b16 %v4582, %v4581
          %v4660 = vpack.c.b16 %v4584, %v4583
          %v4661 = vpack.c.b16 %v4586, %v4585
          %v4662 = vpack.c.b16 %v4588, %v4587
          %v4663 = vpack.c.b16 %v4590, %v4589
          %v4664 = vpack.c.b16 %v4592, %v4591
          %v4665 = vpack.c.b16 %v4594, %v4593
          %v4666 = vpack.c.b16 %v4596, %v4595
          %v4667 = vpack.c.b16 %v4598, %v4597
          %v4668 = vpack.c.b16 %v4600, %v4599
          %v4669 = vpack.c.b16 %v4602, %v4601
          %v4670 = vpack.c.b16 %v4604, %v4603
          %v4671 = vpack.c.b16 %v4606, %v4605
          %v4672 = vpack.c.b16 %v4608, %v4607
          %4737 = vmatprep.subr.bf16.mxu0 0
          %4738 = vmatpush1.bf16.msra.mxu0 %v4609
          %4739 = vmatprep.subr.bf16.mxu0 0
          %4740 = vmatpush1.bf16.msra.mxu0 %v4610
          %4741 = vmatprep.subr.bf16.mxu0 0
          %4742 = vmatpush1.bf16.msra.mxu0 %v4611
          %4743 = vmatprep.subr.bf16.mxu0 0
          %4744 = vmatpush1.bf16.msra.mxu0 %v4612
          %4745 = vmatprep.subr.bf16.mxu0 0
          %4746 = vmatpush1.bf16.msra.mxu0 %v4613
          %4747 = vmatprep.subr.bf16.mxu0 0
          %4748 = vmatpush1.bf16.msra.mxu0 %v4614
          %4749 = vmatprep.subr.bf16.mxu0 0
          %4750 = vmatpush1.bf16.msra.mxu0 %v4615
          %4751 = vmatprep.subr.bf16.mxu0 0
          %4752 = vmatpush1.bf16.msra.mxu0 %v4616
          %4753 = vmatprep.subr.bf16.mxu0 0
          %4754 = vmatpush1.bf16.msra.mxu0 %v4617
          %4755 = vmatprep.subr.bf16.mxu0 0
          %4756 = vmatpush1.bf16.msra.mxu0 %v4618
          %4757 = vmatprep.subr.bf16.mxu0 0
          %4758 = vmatpush1.bf16.msra.mxu0 %v4619
          %4759 = vmatprep.subr.bf16.mxu0 0
          %4760 = vmatpush1.bf16.msra.mxu0 %v4620
          %4761 = vmatprep.subr.bf16.mxu0 0
          %4762 = vmatpush1.bf16.msra.mxu0 %v4621
          %4763 = vmatprep.subr.bf16.mxu0 0
          %4764 = vmatpush1.bf16.msra.mxu0 %v4622
          %4765 = vmatprep.subr.bf16.mxu0 0
          %4766 = vmatpush1.bf16.msra.mxu0 %v4623
          %4767 = vmatprep.subr.bf16.mxu0 0
          %4768 = vmatpush1.bf16.msra.mxu0 %v4624
          %4769 = vmatprep.mubr.bf16.mxu0 %v4218
          %4770 = vmatmul.mubr.bf16.gmra.mrb[0].mxu0 %v4217
          %v4771 = vpop.f32.mrb[0].mxu0
          %v4772 = vadd.f32 0.0, %v4771
          %v4773 = vpop.f32.mrb[0].mxu0
          %v4774 = vpop.f32.mrb[0].mxu0
          %v4775 = vpop.f32.mrb[0].mxu0
          %4776 = vdwg.mxu0
          %4777 = vmatprep.subr.bf16.mxu0 0
          %4778 = vmatpush1.bf16.msra.mxu0 %v4625
          %4779 = vmatprep.subr.bf16.mxu0 0
          %4780 = vmatpush1.bf16.msra.mxu0 %v4626
          %4781 = vmatprep.subr.bf16.mxu0 0
          %4782 = vmatpush1.bf16.msra.mxu0 %v4627
          %4783 = vmatprep.subr.bf16.mxu0 0
          %4784 = vmatpush1.bf16.msra.mxu0 %v4628
          %4785 = vmatprep.subr.bf16.mxu0 0
          %4786 = vmatpush1.bf16.msra.mxu0 %v4629
          %4787 = vmatprep.subr.bf16.mxu0 0
          %4788 = vmatpush1.bf16.msra.mxu0 %v4630
          %4789 = vmatprep.subr.bf16.mxu0 0
          %4790 = vmatpush1.bf16.msra.mxu0 %v4631
          %4791 = vmatprep.subr.bf16.mxu0 0
          %4792 = vmatpush1.bf16.msra.mxu0 %v4632
          %4793 = vmatprep.subr.bf16.mxu0 0
          %4794 = vmatpush1.bf16.msra.mxu0 %v4633
          %4795 = vmatprep.subr.bf16.mxu0 0
          %4796 = vmatpush1.bf16.msra.mxu0 %v4634
          %4797 = vmatprep.subr.bf16.mxu0 0
          %4798 = vmatpush1.bf16.msra.mxu0 %v4635
          %4799 = vmatprep.subr.bf16.mxu0 0
          %4800 = vmatpush1.bf16.msra.mxu0 %v4636
          %4801 = vmatprep.subr.bf16.mxu0 0
          %4802 = vmatpush1.bf16.msra.mxu0 %v4637
          %4803 = vmatprep.subr.bf16.mxu0 0
          %4804 = vmatpush1.bf16.msra.mxu0 %v4638
          %4805 = vmatprep.subr.bf16.mxu0 0
          %4806 = vmatpush1.bf16.msra.mxu0 %v4639
          %4807 = vmatprep.subr.bf16.mxu0 0
          %4808 = vmatpush1.bf16.msra.mxu0 %v4640
          %4809 = vmatprep.mubr.bf16.mxu0 %v4220
          %4810 = vmatmul.mubr.bf16.gmra.mrb[0].mxu0 %v4219
          %v4811 = vpop.f32.mrb[0].mxu0
          %v4812 = vadd.f32 %v4772, %v4811
          %v4813 = vpop.f32.mrb[0].mxu0
          %v4814 = vpop.f32.mrb[0].mxu0
          %v4815 = vpop.f32.mrb[0].mxu0
          %4816 = vdwg.mxu0
          %4817 = vmatprep.subr.bf16.mxu0 0
          %4818 = vmatpush1.bf16.msra.mxu0 %v4641
          %4819 = vmatprep.subr.bf16.mxu0 0
          %4820 = vmatpush1.bf16.msra.mxu0 %v4642
          %4821 = vmatprep.subr.bf16.mxu0 0
          %4822 = vmatpush1.bf16.msra.mxu0 %v4643
          %4823 = vmatprep.subr.bf16.mxu0 0
          %4824 = vmatpush1.bf16.msra.mxu0 %v4644
          %4825 = vmatprep.subr.bf16.mxu0 0
          %4826 = vmatpush1.bf16.msra.mxu0 %v4645
          %4827 = vmatprep.subr.bf16.mxu0 0
          %4828 = vmatpush1.bf16.msra.mxu0 %v4646
          %4829 = vmatprep.subr.bf16.mxu0 0
          %4830 = vmatpush1.bf16.msra.mxu0 %v4647
          %4831 = vmatprep.subr.bf16.mxu0 0
          %4832 = vmatpush1.bf16.msra.mxu0 %v4648
          %4833 = vmatprep.subr.bf16.mxu0 0
          %4834 = vmatpush1.bf16.msra.mxu0 %v4649
          %4835 = vmatprep.subr.bf16.mxu0 0
          %4836 = vmatpush1.bf16.msra.mxu0 %v4650
          %4837 = vmatprep.subr.bf16.mxu0 0
          %4838 = vmatpush1.bf16.msra.mxu0 %v4651
          %4839 = vmatprep.subr.bf16.mxu0 0
          %4840 = vmatpush1.bf16.msra.mxu0 %v4652
          %4841 = vmatprep.subr.bf16.mxu0 0
          %4842 = vmatpush1.bf16.msra.mxu0 %v4653
          %4843 = vmatprep.subr.bf16.mxu0 0
          %4844 = vmatpush1.bf16.msra.mxu0 %v4654
          %4845 = vmatprep.subr.bf16.mxu0 0
          %4846 = vmatpush1.bf16.msra.mxu0 %v4655
          %4847 = vmatprep.subr.bf16.mxu0 0
          %4848 = vmatpush1.bf16.msra.mxu0 %v4656
          %4849 = vmatprep.mubr.bf16.mxu0 %v4222
          %4850 = vmatmul.mubr.bf16.gmra.mrb[0].mxu0 %v4221
          %v4851 = vpop.f32.mrb[0].mxu0
          %v4852 = vadd.f32 %v4812, %v4851
          %v4853 = vpop.f32.mrb[0].mxu0
          %v4854 = vpop.f32.mrb[0].mxu0
          %v4855 = vpop.f32.mrb[0].mxu0
          %4856 = vdwg.mxu0
          %4857 = vmatprep.subr.bf16.mxu0 0
          %4858 = vmatpush1.bf16.msra.mxu0 %v4657
          %4859 = vmatprep.subr.bf16.mxu0 0
          %4860 = vmatpush1.bf16.msra.mxu0 %v4658
          %4861 = vmatprep.subr.bf16.mxu0 0
          %4862 = vmatpush1.bf16.msra.mxu0 %v4659
          %4863 = vmatprep.subr.bf16.mxu0 0
          %4864 = vmatpush1.bf16.msra.mxu0 %v4660
          %4865 = vmatprep.subr.bf16.mxu0 0
          %4866 = vmatpush1.bf16.msra.mxu0 %v4661
          %4867 = vmatprep.subr.bf16.mxu0 0
          %4868 = vmatpush1.bf16.msra.mxu0 %v4662
          %4869 = vmatprep.subr.bf16.mxu0 0
          %4870 = vmatpush1.bf16.msra.mxu0 %v4663
          %4871 = vmatprep.subr.bf16.mxu0 0
          %4872 = vmatpush1.bf16.msra.mxu0 %v4664
          %4873 = vmatprep.subr.bf16.mxu0 0
          %4874 = vmatpush1.bf16.msra.mxu0 %v4665
          %4875 = vmatprep.subr.bf16.mxu0 0
          %4876 = vmatpush1.bf16.msra.mxu0 %v4666
          %4877 = vmatprep.subr.bf16.mxu0 0
          %4878 = vmatpush1.bf16.msra.mxu0 %v4667
          %4879 = vmatprep.subr.bf16.mxu0 0
          %4880 = vmatpush1.bf16.msra.mxu0 %v4668
          %4881 = vmatprep.subr.bf16.mxu0 0
          %4882 = vmatpush1.bf16.msra.mxu0 %v4669
          %4883 = vmatprep.subr.bf16.mxu0 0
          %4884 = vmatpush1.bf16.msra.mxu0 %v4670
          %4885 = vmatprep.subr.bf16.mxu0 0
          %4886 = vmatpush1.bf16.msra.mxu0 %v4671
          %4887 = vmatprep.subr.bf16.mxu0 0
          %4888 = vmatpush1.bf16.msra.mxu0 %v4672
          %4889 = vmatprep.mubr.bf16.mxu0 %v4224
          %4890 = vmatmul.mubr.bf16.gmra.mrb[0].mxu0 %v4223
          %v4891 = vpop.f32.mrb[0].mxu0
          %v4892 = vadd.f32 %v4852, %v4891
          %v4893 = vpop.f32.mrb[0].mxu0
          %v4894 = vpop.f32.mrb[0].mxu0
          %v4895 = vpop.f32.mrb[0].mxu0
          %4896 = vdwg.mxu0
          %4897 = vst [vmem:[#allocation11] sm:$0xff] %v4892
          %v4898 = vld [vmem:[%s4] sm:$0xff]
          %v4899 = vld [vmem:[%s4 + $0x8] sm:$0xff]
          %v4900 = vld [vmem:[%s4 + $0x10] sm:$0xff]
          %v4901 = vld [vmem:[%s4 + $0x18] sm:$0xff]
          %v4902 = vld [vmem:[%s4 + $0x20] sm:$0xff]
          %v4903 = vld [vmem:[%s4 + $0x28] sm:$0xff]
          %v4904 = vld [vmem:[%s4 + $0x30] sm:$0xff]
          %v4905 = vld [vmem:[%s4 + $0x38] sm:$0xff]
          %v4906 = vld [vmem:[#allocation9] sm:$0xf]
          %v4907 = vld [vmem:[#allocation9 + $0x4] sm:$0xf]
          %v4908 = vld [vmem:[#allocation9 + $0x8] sm:$0xf]
          %v4909 = vld [vmem:[#allocation9 + $0xc] sm:$0xf]
          %v4910 = vld [vmem:[#allocation9 + $0x10] sm:$0xf]
          %v4911 = vld [vmem:[#allocation9 + $0x14] sm:$0xf]
          %v4912 = vld [vmem:[#allocation9 + $0x18] sm:$0xf]
          %v4913 = vld [vmem:[#allocation9 + $0x1c] sm:$0xf]
          %v4914 = vld [vmem:[#allocation9 + $0x20] sm:$0xf]
          %v4915 = vld [vmem:[#allocation9 + $0x24] sm:$0xf]
          %v4916 = vld [vmem:[#allocation9 + $0x28] sm:$0xf]
          %v4917 = vld [vmem:[#allocation9 + $0x2c] sm:$0xf]
          %v4918 = vld [vmem:[#allocation9 + $0x30] sm:$0xf]
          %v4919 = vld [vmem:[#allocation9 + $0x34] sm:$0xf]
          %v4920 = vld [vmem:[#allocation9 + $0x38] sm:$0xf]
          %v4921 = vld [vmem:[#allocation9 + $0x3c] sm:$0xf]
          %v4922 = vld [vmem:[#allocation9 + $0x40] sm:$0xf]
          %v4923 = vld [vmem:[#allocation9 + $0x44] sm:$0xf]
          %v4924 = vld [vmem:[#allocation9 + $0x48] sm:$0xf]
          %v4925 = vld [vmem:[#allocation9 + $0x4c] sm:$0xf]
          %v4926 = vld [vmem:[#allocation9 + $0x50] sm:$0xf]
          %v4927 = vld [vmem:[#allocation9 + $0x54] sm:$0xf]
          %v4928 = vld [vmem:[#allocation9 + $0x58] sm:$0xf]
          %v4929 = vld [vmem:[#allocation9 + $0x5c] sm:$0xf]
          %v4930 = vld [vmem:[#allocation9 + $0x60] sm:$0xf]
          %v4931 = vld [vmem:[#allocation9 + $0x64] sm:$0xf]
          %v4932 = vld [vmem:[#allocation9 + $0x68] sm:$0xf]
          %v4933 = vld [vmem:[#allocation9 + $0x6c] sm:$0xf]
          %v4934 = vld [vmem:[#allocation9 + $0x70] sm:$0xf]
          %v4935 = vld [vmem:[#allocation9 + $0x74] sm:$0xf]
          %v4936 = vld [vmem:[#allocation9 + $0x78] sm:$0xf]
          %v4937 = vld [vmem:[#allocation9 + $0x7c] sm:$0xf]
          %v4946 = vunpack.c.l.b16 %v4898
          %v4947 = vunpack.c.h.b16 %v4898
          %v4948 = vunpack.c.l.b16 %v4899
          %v4949 = vunpack.c.h.b16 %v4899
          %v4950 = vunpack.c.l.b16 %v4900
          %v4951 = vunpack.c.h.b16 %v4900
          %v4952 = vunpack.c.l.b16 %v4901
          %v4953 = vunpack.c.h.b16 %v4901
          %v4954 = vunpack.c.l.b16 %v4902
          %v4955 = vunpack.c.h.b16 %v4902
          %v4956 = vunpack.c.l.b16 %v4903
          %v4957 = vunpack.c.h.b16 %v4903
          %v4958 = vunpack.c.l.b16 %v4904
          %v4959 = vunpack.c.h.b16 %v4904
          %v4960 = vunpack.c.l.b16 %v4905
          %v4961 = vunpack.c.h.b16 %v4905
          %v4962 = vpack.c.b16 %v4948, %v4946
          %v4963 = vpack.c.b16 %v4949, %v4947
          %v4964 = vpack.c.b16 %v4952, %v4950
          %v4965 = vpack.c.b16 %v4953, %v4951
          %v4966 = vpack.c.b16 %v4956, %v4954
          %v4967 = vpack.c.b16 %v4957, %v4955
          %v4968 = vpack.c.b16 %v4960, %v4958
          %v4969 = vpack.c.b16 %v4961, %v4959
          %v5010 = vunpack.c.l.b16 %v4906
          %v5011 = vunpack.c.l.b16 %v4907
          %v5012 = vunpack.c.l.b16 %v4908
          %v5013 = vunpack.c.l.b16 %v4909
          %v5014 = vunpack.c.l.b16 %v4910
          %v5015 = vunpack.c.l.b16 %v4911
          %v5016 = vunpack.c.l.b16 %v4912
          %v5017 = vunpack.c.l.b16 %v4913
          %v5018 = vunpack.c.l.b16 %v4914
          %v5019 = vunpack.c.l.b16 %v4915
          %v5020 = vunpack.c.l.b16 %v4916
          %v5021 = vunpack.c.l.b16 %v4917
          %v5022 = vunpack.c.l.b16 %v4918
          %v5023 = vunpack.c.l.b16 %v4919
          %v5024 = vunpack.c.l.b16 %v4920
          %v5025 = vunpack.c.l.b16 %v4921
          %v5026 = vunpack.c.l.b16 %v4922
          %v5027 = vunpack.c.l.b16 %v4923
          %v5028 = vunpack.c.l.b16 %v4924
          %v5029 = vunpack.c.l.b16 %v4925
          %v5030 = vunpack.c.l.b16 %v4926
          %v5031 = vunpack.c.l.b16 %v4927
          %v5032 = vunpack.c.l.b16 %v4928
          %v5033 = vunpack.c.l.b16 %v4929
          %v5034 = vunpack.c.l.b16 %v4930
          %v5035 = vunpack.c.l.b16 %v4931
          %v5036 = vunpack.c.l.b16 %v4932
          %v5037 = vunpack.c.l.b16 %v4933
          %v5038 = vunpack.c.l.b16 %v4934
          %v5039 = vunpack.c.l.b16 %v4935
          %v5040 = vunpack.c.l.b16 %v4936
          %v5041 = vunpack.c.l.b16 %v4937
          %v5042 = vpack.c.b16 %v5011, %v5010
          %v5043 = vpack.c.b16 %v5013, %v5012
          %v5044 = vpack.c.b16 %v5015, %v5014
          %v5045 = vpack.c.b16 %v5017, %v5016
          %v5046 = vpack.c.b16 %v5019, %v5018
          %v5047 = vpack.c.b16 %v5021, %v5020
          %v5048 = vpack.c.b16 %v5023, %v5022
          %v5049 = vpack.c.b16 %v5025, %v5024
          %v5050 = vpack.c.b16 %v5027, %v5026
          %v5051 = vpack.c.b16 %v5029, %v5028
          %v5052 = vpack.c.b16 %v5031, %v5030
          %v5053 = vpack.c.b16 %v5033, %v5032
          %v5054 = vpack.c.b16 %v5035, %v5034
          %v5055 = vpack.c.b16 %v5037, %v5036
          %v5056 = vpack.c.b16 %v5039, %v5038
          %v5057 = vpack.c.b16 %v5041, %v5040
          %5074 = vmatprep.subr.bf16.mxu0 0
          %5075 = vmatpush1.bf16.msra.mxu0 %v5042
          %5076 = vmatprep.subr.bf16.mxu0 0
          %5077 = vmatpush1.bf16.msra.mxu0 %v5043
          %5078 = vmatprep.subr.bf16.mxu0 0
          %5079 = vmatpush1.bf16.msra.mxu0 %v5044
          %5080 = vmatprep.subr.bf16.mxu0 0
          %5081 = vmatpush1.bf16.msra.mxu0 %v5045
          %5082 = vmatprep.subr.bf16.mxu0 0
          %5083 = vmatpush1.bf16.msra.mxu0 %v5046
          %5084 = vmatprep.subr.bf16.mxu0 0
          %5085 = vmatpush1.bf16.msra.mxu0 %v5047
          %5086 = vmatprep.subr.bf16.mxu0 0
          %5087 = vmatpush1.bf16.msra.mxu0 %v5048
          %5088 = vmatprep.subr.bf16.mxu0 0
          %5089 = vmatpush1.bf16.msra.mxu0 %v5049
          %5090 = vmatprep.subr.bf16.mxu0 0
          %5091 = vmatpush1.bf16.msra.mxu0 %v5050
          %5092 = vmatprep.subr.bf16.mxu0 0
          %5093 = vmatpush1.bf16.msra.mxu0 %v5051
          %5094 = vmatprep.subr.bf16.mxu0 0
          %5095 = vmatpush1.bf16.msra.mxu0 %v5052
          %5096 = vmatprep.subr.bf16.mxu0 0
          %5097 = vmatpush1.bf16.msra.mxu0 %v5053
          %5098 = vmatprep.subr.bf16.mxu0 0
          %5099 = vmatpush1.bf16.msra.mxu0 %v5054
          %5100 = vmatprep.subr.bf16.mxu0 0
          %5101 = vmatpush1.bf16.msra.mxu0 %v5055
          %5102 = vmatprep.subr.bf16.mxu0 0
          %5103 = vmatpush1.bf16.msra.mxu0 %v5056
          %5104 = vmatprep.subr.bf16.mxu0 0
          %5105 = vmatpush1.bf16.msra.mxu0 %v5057
          %5106 = vmatprep.mubr.bf16.mxu0 %v4963
          %5107 = vmatmul.mubr.bf16.gmra.mrb[0].mxu0 %v4962
          %v5108 = vpop.f32.mrb[0].mxu0
          %v5109 = vadd.f32 0.0, %v5108
          %v5110 = vpop.f32.mrb[0].mxu0
          %v5111 = vpop.f32.mrb[0].mxu0
          %v5112 = vadd.f32 0.0, %v5111
          %v5113 = vpop.f32.mrb[0].mxu0
          %5114 = vmatprep.mubr.bf16.mxu0 %v4965
          %5115 = vmatmul.mubr.bf16.gmra.mrb[0].mxu0 %v4964
          %v5116 = vpop.f32.mrb[0].mxu0
          %v5117 = vadd.f32 0.0, %v5116
          %v5118 = vpop.f32.mrb[0].mxu0
          %v5119 = vpop.f32.mrb[0].mxu0
          %v5120 = vadd.f32 0.0, %v5119
          %v5121 = vpop.f32.mrb[0].mxu0
          %5122 = vmatprep.mubr.bf16.mxu0 %v4967
          %5123 = vmatmul.mubr.bf16.gmra.mrb[0].mxu0 %v4966
          %v5124 = vpop.f32.mrb[0].mxu0
          %v5125 = vadd.f32 0.0, %v5124
          %v5126 = vpop.f32.mrb[0].mxu0
          %v5127 = vpop.f32.mrb[0].mxu0
          %v5128 = vadd.f32 0.0, %v5127
          %v5129 = vpop.f32.mrb[0].mxu0
          %5130 = vmatprep.mubr.bf16.mxu0 %v4969
          %5131 = vmatmul.mubr.bf16.gmra.mrb[0].mxu0 %v4968
          %v5132 = vpop.f32.mrb[0].mxu0
          %v5133 = vadd.f32 0.0, %v5132
          %v5134 = vpop.f32.mrb[0].mxu0
          %v5135 = vpop.f32.mrb[0].mxu0
          %v5136 = vadd.f32 0.0, %v5135
          %v5137 = vpop.f32.mrb[0].mxu0
          %5138 = vdwg.mxu0
          %5139 = vst [vmem:[#allocation12] sm:$0xff] %v5109
          %5140 = vst [vmem:[#allocation12 + $0x8] sm:$0xff] %v5112
          %5141 = vst [vmem:[#allocation12 + $0x10] sm:$0xff] %v5117
          %5142 = vst [vmem:[#allocation12 + $0x18] sm:$0xff] %v5120
          %5143 = vst [vmem:[#allocation12 + $0x20] sm:$0xff] %v5125
          %5144 = vst [vmem:[#allocation12 + $0x28] sm:$0xff] %v5128
          %5145 = vst [vmem:[#allocation12 + $0x30] sm:$0xff] %v5133
          %5146 = vst [vmem:[#allocation12 + $0x38] sm:$0xff] %v5136
        $region68: #{precompute_image_encoder.1} parent=43 // pred_fallthru
          _
        // Predicated region
        $region69: #{precompute_image_encoder.1} parent=43 // pred_check
          %p5147 = pneg %p175
        $region70: #{precompute_image_encoder.1} parent=43 // pred_check_branch
          %5149 = sbr.rel (%p5147) target = $region72
        $region71: #{precompute_image_encoder.1} parent=43 // pred_region
          %s5151 = ssub.s32 128, 128
          %5152 = vsyncadd [#allocation5], %s5151
          %s5154 = sshll.u32 [#allocation11], 4
          %s5155 = int_to_ptr.vmem [resolvable:$true] %s5154
          %5157 = dma.vmem_to_hbm [thread:$0]  %s5155, 128, %s6, [#allocation5]
        $region72: #{precompute_image_encoder.1} parent=43 // pred_fallthru
          _
        // Predicated region
        $region73: #{precompute_image_encoder.1} parent=43 // pred_check
          %p5158 = pneg %p196
        $region74: #{precompute_image_encoder.1} parent=43 // pred_check_branch
          %5160 = sbr.rel (%p5158) target = $region76
        $region75: #{precompute_image_encoder.1} parent=43 // pred_region
          %s5162 = ssub.s32 1024, 1024
          %5163 = vsyncadd [#allocation13], %s5162
          %s5164 = sshll.u32 [#allocation12], 4
          %s5165 = int_to_ptr.vmem [resolvable:$true] %s5164
          %5170 = dma.vmem_to_hbm [thread:$0]  %s5165, 1024, %s7, [#allocation13], 128, 128, 8
        $region76: #{precompute_image_encoder.1} parent=43 // pred_fallthru
          _
        // Predicated region
        $region77: #{precompute_image_encoder.1} parent=43 // pred_check
          %p5171 = pneg %p175
        $region78: #{precompute_image_encoder.1} parent=43 // pred_check_branch
          %5173 = sbr.rel (%p5171) target = $region80
        $region79: #{precompute_image_encoder.1} parent=43 // pred_region
          %5174 = dma.done [#allocation5], 128
        $region80: #{precompute_image_encoder.1} parent=43 // pred_fallthru
          _
        // Predicated region
        $region81: #{precompute_image_encoder.1} parent=43 // pred_check
          %p5175 = pneg %p196
        $region82: #{precompute_image_encoder.1} parent=43 // pred_check_branch
          %5177 = sbr.rel (%p5175) target = $region84
        $region83: #{precompute_image_encoder.1} parent=43 // pred_region
          %5178 = dma.done [#allocation13], 1024
        $region84: #{precompute_image_encoder.1} parent=43 // pred_fallthru
          _
      $region44: #{precompute_image_encoder.1} parent=5 // pred_fallthru
        _
      %p5179 = scmp.le.s32.totalorder 2, %s21
      // Predicated region
      $region85: #{precompute_image_encoder.1} parent=5 // pred_check
        %p5180 = pneg %p5179
      $region86: #{precompute_image_encoder.1} parent=5 // pred_check_branch
        %5182 = sbr.rel (%p5180) target = $region88
      $region87: #{precompute_image_encoder.1} parent=5 // pred_region
        %s5183 = ssub.s32 %s21, 2
      $region88: #{precompute_image_encoder.1} parent=5 // pred_fallthru
        _
    $region6: #{precompute_image_encoder.1} parent=1 // loop_footer
      %s25 = sadd.s32 1, %s21
    $region7: #{precompute_image_encoder.1} parent=1 // loop_footer_branch
      %20 = sbr.rel target = $region3
    $region8: #{precompute_image_encoder.1} parent=1 // loop_exit
      _
    %5184 = vsyncpa [#allocation4], 1
    %s5185 = scalar_lea.sflag [#allocation4], 1
    %5186 = vsyncpa %s5185, 1
    %5187 = vsyncpa [#allocation7], 1
    %5188 = vsyncpa [#allocation10], 1
    %5189 = vsyncpa [#allocation5], 1
    %s5190 = scalar_lea.sflag [#allocation5], 1
    %5191 = vsyncpa %s5190, 1
    %5192 = vsyncpa [#allocation13], 1

</llo_original>
